<compile_context>
chip_gen: v7x
topology: tpu7x:2x2x1
jax: 0.10.0
libtpu: 0.0.40
codegen_flags: <defaults>
</compile_context>

<pallas_src>
import math

import jax
import jax.numpy as jnp
from jax import lax
from jax.experimental import pallas as pl
from jax.experimental.pallas import tpu as pltpu


# ---------------------------------------------------------------- small utilities
def _round_up(n, m):
    return ((n + m - 1) // m) * m


def _vmem_capacity_bytes():
    """Per-TensorCore VMEM capacity; v7x-safe fallback if the query is unavailable."""
    try:
        if jax.devices()[0].platform == "tpu":
            info = pltpu.get_tpu_info()
            cap = getattr(info, "vmem_capacity_bytes", None)
            if cap:
                return int(cap)
    except Exception:
        pass
    return 64 * 1024 * 1024  # v7x has the smallest VMEM (64 MiB / TC)


# ---------------------------------------------------------------- in-kernel helpers
def _matmul_nt(x, w):
    """x: (N, K), w: (M, K) -> (N, M) == x @ w.T with f32 accumulation on the MXU."""
    return lax.dot_general(x, w, (((1,), (1,)), ((), ())),
                           preferred_element_type=jnp.float32)


def _erf(x):
    # Abramowitz & Stegun 7.1.26, |err| < 1.5e-7; VPU/EUP ops only (exact division).
    a1, a2, a3, a4, a5 = 0.254829592, -0.284496736, 1.421413741, -1.453152027, 1.061405429
    p = 0.3275911
    sgn = jnp.where(x < 0.0, -1.0, 1.0)
    ax = jnp.abs(x)
    t = 1.0 / (1.0 + p * ax)
    poly = ((((a5 * t + a4) * t + a3) * t + a2) * t + a1) * t
    return sgn * (1.0 - poly * jnp.exp(-ax * ax))


def _gelu_exact(x):
    # matches torch nn.GELU(approximate='none')
    return 0.5 * x * (1.0 + _erf(x * 0.7071067811865476))


def _sigmoid(x):
    # numerically stable (exp of a non-positive argument only), exact division
    z = jnp.exp(-jnp.abs(x))
    return jnp.where(x >= 0.0, 1.0 / (1.0 + z), z / (1.0 + z))


# ---------------------------------------------------------------- fused kernel builder
def _make_fused_kernel(num_blocks, L, Bt, H, S, *, flip_unroll=8, rec_unroll=16):
    S2 = 2 * S

    def kernel(*refs):
        n_in = 1 + 7 * num_blocks + 2
        h_ref = refs[0]
        blk_refs = refs[1:1 + 7 * num_blocks]
        w_out_ref, b_out_ref = refs[n_in - 2:n_in]
        o_ref = refs[n_in]
        ub_re_s, ub_im_s, x_re_s, x_im_s = refs[n_in + 1:]

        # lanes [0:S] carry the forward direction, lanes [S:2S] the backward one
        lane = lax.broadcasted_iota(jnp.int32, (Bt, S2), 1)
        is_fwd = lane < S

        h2d = h_ref[...].reshape(L * Bt, H)                          # (L*Bt, H)

        for b in range(num_blocks):
            (bn_cat, lam_re, lam_im, c_cat,
             d_ref, wg_ref, bg_ref) = blk_refs[7 * b:7 * (b + 1)]
            u = h2d                                                  # residual input

            # ---- fused complex input projection: u @ [B_re; B_im]^T -> [Re | Im]
            ub_cat = _matmul_nt(u, bn_cat[...])                      # (L*Bt, 2*S2)
            # stage the natural-time-order halves (x scratches reused as temps)
            x_re_s[...] = ub_cat[:, :S2].reshape(L, Bt, S2)
            x_im_s[...] = ub_cat[:, S2:].reshape(L, Bt, S2)

            # select row t for forward lanes and row L-1-t for backward lanes
            def flip_pass(t, c):
                tb = L - 1 - t
                ub_re_s[t] = jnp.where(is_fwd, x_re_s[t], x_re_s[tb])
                ub_im_s[t] = jnp.where(is_fwd, x_im_s[t], x_im_s[tb])
                return c

            # pre-reverse the backward half ONCE (independent iterations, pipelineable)
            lax.fori_loop(0, L, flip_pass, 0, unroll=max(1, min(L, flip_unroll)))

            # hoist lambda broadcasts out of the serial loop
            lr = jnp.broadcast_to(lam_re[...], (Bt, S2))
            li = jnp.broadcast_to(lam_im[...], (Bt, S2))

            # ---- serial recurrence x_t = lambda * x_{t-1} + ub_t, both directions at
            # once; each step: 2 unmasked loads, 8 VPU ops, 2 unmasked full-width stores.
            def rec_step(t, carry):
                xr, xi = carry
                ur = ub_re_s[t]
                ui = ub_im_s[t]
                nr = lr * xr - li * xi + ur
                ni = lr * xi + li * xr + ui
                x_re_s[t] = nr
                x_im_s[t] = ni
                return nr, ni

            z = jnp.zeros((Bt, S2), jnp.float32)
            lax.fori_loop(0, L, rec_step, (z, z),
                          unroll=max(1, min(L, rec_unroll)))

            # un-reverse the backward half ONCE (back to natural time order)
            lax.fori_loop(0, L, flip_pass, 0, unroll=max(1, min(L, flip_unroll)))

            xr = ub_re_s[...].reshape(L * Bt, S2)
            xi = ub_im_s[...].reshape(L * Bt, S2)
            xcat = jnp.concatenate([xr, xi], axis=-1)                # (L*Bt, 2*S2)

            # ---- fused complex output projection: Re(x C^T) == [xr|xi] @ [C_re|-C_im]^T
            y = _matmul_nt(xcat, c_cat[...]) + u * d_ref[...]
            g = _gelu_exact(y)
            gate = _sigmoid(_matmul_nt(g, wg_ref[...]) + bg_ref[...])
            h2d = g * gate + u

        # ---- mean over the sequence (1/L pre-folded into w_out) + output Linear
        m = jnp.sum(h2d.reshape(L, Bt, H), axis=0)                   # (Bt, H)
        o_ref[...] = _matmul_nt(m, w_out_ref[...]) + b_out_ref[...]

    return kernel


# ---------------------------------------------------------------- VMEM-aware tile picker
def _tile_vmem_bytes(bt, L, H, S2, Dout, num_blocks):
    """Per-tile VMEM footprint with (8,128) padding and pipeline double-buffering."""
    lane = lambda n: _round_up(max(int(n), 1), 128)
    sub = lambda n: _round_up(max(int(n), 1), 8)
    f32 = 4
    inp = 2 * L * sub(bt) * lane(H) * f32                       # double-buffered input block
    outp = 2 * sub(bt) * lane(Dout) * f32                       # double-buffered output block
    per_block_w = (sub(2 * S2) * lane(H)                        # bn_cat
                   + 2 * sub(1) * lane(S2)                      # lam_re, lam_im
                   + sub(H) * lane(2 * S2)                      # c_cat
                   + sub(1) * lane(H)                           # d
                   + sub(H) * lane(H)                           # wg (H*H per block!)
                   + sub(1) * lane(H))                          # bg
    wts = 2 * (num_blocks * per_block_w
               + sub(Dout) * lane(H) + sub(1) * lane(Dout)) * f32
    scratch = 4 * L * sub(bt) * lane(S2) * f32                  # recurrence scratch
    live = 4 * L * sub(bt) * max(lane(H), lane(2 * S2)) * f32   # h2d/u, ub/x, y/g, gate
    return inp + outp + wts + scratch + live


def _pick_batch_tile(B, L, H, S2, Dout, num_blocks, budget_bytes):
    b8 = _round_up(B, 8)
    cands = list(range(8, b8 + 1, 8))
    fits = [bt for bt in cands
            if _tile_vmem_bytes(bt, L, H, S2, Dout, num_blocks) <= budget_bytes]
    if not fits:
        # TODO(synk): if even Bt=8 does not fit the budget, the sequence dim itself
        # would have to be tiled; not needed for the shapes exercised here.
        return 8
    # prefer grid >= 2 so the parallel batch axis shards across two TensorCores (v7x)
    pref = [bt for bt in fits if -(-b8 // bt) >= 2] or fits
    return max(pref)


# ---------------------------------------------------------------- full forward pass
def lru_embedding_forward(x_blf, params, *, batch_tile=None):
    """x: (batch, seq, input_dim) -> features (batch, output_dim)."""
    B, L, Din = x_blf.shape
    H = params["w_in"].shape[0]
    Dout = params["w_out"].shape[0]
    S2 = params["blocks"][0]["lam_re"].shape[1]
    S = S2 // 2
    nb = len(params["blocks"])

    # ---- per-generation VMEM budget (v5e/v6e: 128 MiB, v7x: 64 MiB)
    cap = _vmem_capacity_bytes()
    vmem_limit = max(32 << 20, min(cap - (16 << 20), 100 << 20))
    tile_budget = int(0.75 * vmem_limit)

    Bt = batch_tile if batch_tile is not None else _pick_batch_tile(
        B, L, H, S2, Dout, nb, tile_budget)
    assert Bt % 8 == 0, f"batch tile {Bt} must be a multiple of 8"
    Bpad = _round_up(B, Bt)
    grid = (Bpad // Bt,)

    # ---- input Linear hoisted out of the kernel (avoids a lane-sparse Din block);
    #      the kernel consumes a time-major (L, B, H) activation.
    h_lbh = (jnp.einsum("bli,hi->lbh", x_blf.astype(jnp.float32),
                        params["w_in"].astype(jnp.float32))
             + params["b_in"].astype(jnp.float32))
    if Bpad != B:
        h_lbh = jnp.pad(h_lbh, ((0, 0), (0, Bpad - B), (0, 0)))

    def const_spec(shape):
        n = len(shape)
        return pl.BlockSpec(shape, lambda i, _n=n: (0,) * _n)

    args = [h_lbh]
    in_specs = [pl.BlockSpec((L, Bt, H), lambda i: (0, i, 0))]

    # ---- fold the complex weights into single real matmuls (done once, host side)
    for blk in params["blocks"]:
        bn_cat = jnp.concatenate([blk["bn_re"], blk["bn_im"]], axis=0)   # (2*S2, H)
        c_cat = jnp.concatenate([blk["c_re"], -blk["c_im"]], axis=1)     # (H, 2*S2)
        for w in (bn_cat, blk["lam_re"], blk["lam_im"], c_cat,
                  blk["d"], blk["wg"], blk["bg"]):
            args.append(w)
            in_specs.append(const_spec(w.shape))

    w_out_scaled = params["w_out"] / float(L)        # fold the 1/L mean into the weight
    args += [w_out_scaled, params["b_out"]]
    in_specs += [const_spec(w_out_scaled.shape), const_spec(params["b_out"].shape)]

    kernel = _make_fused_kernel(nb, L, Bt, H, S)
    scratch = [pltpu.VMEM((L, Bt, S2), jnp.float32) for _ in range(4)]

    out = pl.pallas_call(
        kernel,
        out_shape=jax.ShapeDtypeStruct((Bpad, Dout), jnp.float32),
        grid_spec=pltpu.PrefetchScalarGridSpec(
            num_scalar_prefetch=0,
            grid=grid,
            in_specs=in_specs,
            out_specs=pl.BlockSpec((Bt, Dout), lambda i: (i, 0)),
            scratch_shapes=scratch),
        compiler_params=pltpu.CompilerParams(
            dimension_semantics=("parallel",),
            vmem_limit_bytes=vmem_limit),
    )(*args)
    return out[:B]


# ---------------------------------------------------------------- parameter init (deterministic)
def init_params(key, input_dim, output_dim, state_dim, hidden_dim, num_blocks,
                r_min=0.0, r_max=1.0, phase_max=2.0 * math.pi):
    keys = jax.random.split(key, 4 + num_blocks)
    k_in_w, k_in_b, k_out_w, k_out_b = keys[:4]
    lim_in = 1.0 / math.sqrt(input_dim)
    lim_h = 1.0 / math.sqrt(hidden_dim)

    params = {
        "w_in": jax.random.uniform(k_in_w, (hidden_dim, input_dim), jnp.float32, -lim_in, lim_in),
        "b_in": jax.random.uniform(k_in_b, (1, hidden_dim), jnp.float32, -lim_in, lim_in),
        "w_out": jax.random.uniform(k_out_w, (output_dim, hidden_dim), jnp.float32, -lim_h, lim_h),
        "b_out": jax.random.uniform(k_out_b, (1, output_dim), jnp.float32, -lim_h, lim_h),
        "blocks": [],
    }

    sd = 2 * state_dim  # bidirectional doubles the internal state dim
    for bkey in keys[4:]:
        ks = jax.random.split(bkey, 9)
        r_init = jax.random.uniform(ks[0], (sd,), jnp.float32) * (r_max ** 2 - r_min ** 2) + r_min ** 2
        theta = phase_max * jax.random.uniform(ks[1], (sd,), jnp.float32)
        lam_abs = jnp.sqrt(r_init)                         # exp(-exp(log_nu))
        lam_re = (lam_abs * jnp.cos(theta)).reshape(1, sd)
        lam_im = (lam_abs * jnp.sin(theta)).reshape(1, sd)
        gamma = jnp.sqrt(1.0 - r_init)                     # exp(log_gamma)

        scale = 1.0 / math.sqrt(2 * hidden_dim)
        B_re = jax.random.normal(ks[2], (sd, hidden_dim), jnp.float32) * scale
        B_im = jax.random.normal(ks[3], (sd, hidden_dim), jnp.float32) * scale
        C_re = jax.random.normal(ks[4], (hidden_dim, sd), jnp.float32) * scale
        C_im = jax.random.normal(ks[5], (hidden_dim, sd), jnp.float32) * scale
        D = jax.random.normal(ks[6], (1, hidden_dim), jnp.float32)

        params["blocks"].append({
            "bn_re": B_re * gamma[:, None],                # B_norm = B * gamma
            "bn_im": B_im * gamma[:, None],
            "lam_re": lam_re,
            "lam_im": lam_im,
            "c_re": C_re,
            "c_im": C_im,
            "d": D,
            "wg": jax.random.uniform(ks[7], (hidden_dim, hidden_dim), jnp.float32, -lim_h, lim_h),
            "bg": jax.random.uniform(ks[8], (1, hidden_dim), jnp.float32, -lim_h, lim_h),
        })
    return params


# ---------------------------------------------------------------- pure-JAX reference
def _reference_forward(x_blf, params):
    h = x_blf @ params["w_in"].T + params["b_in"]                      # (B, L, H)
    for blk in params["blocks"]:
        u = h
        S = blk["lam_re"].shape[1] // 2
        ubr = u @ blk["bn_re"].T
        ubi = u @ blk["bn_im"].T
        ubr = jnp.concatenate([ubr[:, :, :S], ubr[:, ::-1, S:]], axis=-1)
        ubi = jnp.concatenate([ubi[:, :, :S], ubi[:, ::-1, S:]], axis=-1)
        lr, li = blk["lam_re"], blk["lam_im"]
        Bsz, Lseq, _ = u.shape
        xr = jnp.zeros((Bsz, 2 * S), jnp.float32)
        xi = jnp.zeros((Bsz, 2 * S), jnp.float32)
        xs_r, xs_i = [], []
        for t in range(Lseq):
            xr, xi = (lr * xr - li * xi + ubr[:, t],
                      lr * xi + li * xr + ubi[:, t])
            xs_r.append(xr)
            xs_i.append(xi)
        xr = jnp.stack(xs_r, axis=1)
        xi = jnp.stack(xs_i, axis=1)
        xr = jnp.concatenate([xr[:, :, :S], xr[:, ::-1, S:]], axis=-1)
        xi = jnp.concatenate([xi[:, :, :S], xi[:, ::-1, S:]], axis=-1)
        y = xr @ blk["c_re"].T - xi @ blk["c_im"].T + u * blk["d"]
        g = jax.nn.gelu(y, approximate=False)
        gate = jax.nn.sigmoid(g @ blk["wg"].T + blk["bg"])
        h = g * gate + u
    return h.mean(axis=1) @ params["w_out"].T + params["b_out"]


if __name__ == "__main__":
    key = jax.random.PRNGKey(0)
    kx, kp = jax.random.split(key)

    batch, seq, input_dim = 16, 8, 4
    hidden_dim, state_dim, output_dim, num_blocks = 32, 16, 8, 2

    x = jax.random.normal(kx, (batch, seq, input_dim), dtype=jnp.float32)
    params = init_params(kp, input_dim, output_dim, state_dim, hidden_dim, num_blocks)

    out = lru_embedding_forward(x, params)          # picker -> Bt=8, grid=(2,)
    out = jax.block_until_ready(out)
    assert out.shape == (batch, output_dim)
    assert bool(jnp.all(jnp.isfinite(out)))

    ref = jax.block_until_ready(_reference_forward(x, params))
    assert float(jnp.max(jnp.abs(out - ref))) < 1e-2, "mismatch vs pure-JAX reference"

    print("KERNEL_OK")
</pallas_src>

<mosaic_0001>
module attributes {stable_mosaic.version = 11 : i64} {
  func.func @kernel(%arg0: i32, %arg1: memref<8x8x32xf32, #tpu.memory_space<vmem>>, %arg2: memref<64x32xf32, #tpu.memory_space<vmem>>, %arg3: memref<1x32xf32, #tpu.memory_space<vmem>>, %arg4: memref<1x32xf32, #tpu.memory_space<vmem>>, %arg5: memref<32x64xf32, #tpu.memory_space<vmem>>, %arg6: memref<1x32xf32, #tpu.memory_space<vmem>>, %arg7: memref<32x32xf32, #tpu.memory_space<vmem>>, %arg8: memref<1x32xf32, #tpu.memory_space<vmem>>, %arg9: memref<64x32xf32, #tpu.memory_space<vmem>>, %arg10: memref<1x32xf32, #tpu.memory_space<vmem>>, %arg11: memref<1x32xf32, #tpu.memory_space<vmem>>, %arg12: memref<32x64xf32, #tpu.memory_space<vmem>>, %arg13: memref<1x32xf32, #tpu.memory_space<vmem>>, %arg14: memref<32x32xf32, #tpu.memory_space<vmem>>, %arg15: memref<1x32xf32, #tpu.memory_space<vmem>>, %arg16: memref<8x32xf32, #tpu.memory_space<vmem>>, %arg17: memref<1x8xf32, #tpu.memory_space<vmem>>, %arg18: memref<8x8xf32, #tpu.memory_space<vmem>>, %arg19: memref<8x8x32xf32, #tpu.memory_space<vmem>>, %arg20: memref<8x8x32xf32, #tpu.memory_space<vmem>>, %arg21: memref<8x8x32xf32, #tpu.memory_space<vmem>>, %arg22: memref<8x8x32xf32, #tpu.memory_space<vmem>>) attributes {dimension_semantics = [#tpu.dimension_semantics<parallel>], iteration_bounds = array<i64: 2>, scalar_prefetch = 0 : i64, scratch_operands = 4 : i64, tpu.core_type = #tpu.core_type<tc>, window_params = [{transform_indices = @transform_0, window_bounds = array<i64: 8, 8, 32>}, {pipeline_mode = #tpu.pipeline_mode<synchronous>, transform_indices = @transform_1, window_bounds = array<i64: 64, 32>}, {pipeline_mode = #tpu.pipeline_mode<synchronous>, transform_indices = @transform_2, window_bounds = array<i64: 1, 32>}, {pipeline_mode = #tpu.pipeline_mode<synchronous>, transform_indices = @transform_3, window_bounds = array<i64: 1, 32>}, {pipeline_mode = #tpu.pipeline_mode<synchronous>, transform_indices = @transform_4, window_bounds = array<i64: 32, 64>}, {pipeline_mode = #tpu.pipeline_mode<synchronous>, transform_indices = @transform_5, window_bounds = array<i64: 1, 32>}, {pipeline_mode = #tpu.pipeline_mode<synchronous>, transform_indices = @transform_6, window_bounds = array<i64: 32, 32>}, {pipeline_mode = #tpu.pipeline_mode<synchronous>, transform_indices = @transform_7, window_bounds = array<i64: 1, 32>}, {pipeline_mode = #tpu.pipeline_mode<synchronous>, transform_indices = @transform_8, window_bounds = array<i64: 64, 32>}, {pipeline_mode = #tpu.pipeline_mode<synchronous>, transform_indices = @transform_9, window_bounds = array<i64: 1, 32>}, {pipeline_mode = #tpu.pipeline_mode<synchronous>, transform_indices = @transform_10, window_bounds = array<i64: 1, 32>}, {pipeline_mode = #tpu.pipeline_mode<synchronous>, transform_indices = @transform_11, window_bounds = array<i64: 32, 64>}, {pipeline_mode = #tpu.pipeline_mode<synchronous>, transform_indices = @transform_12, window_bounds = array<i64: 1, 32>}, {pipeline_mode = #tpu.pipeline_mode<synchronous>, transform_indices = @transform_13, window_bounds = array<i64: 32, 32>}, {pipeline_mode = #tpu.pipeline_mode<synchronous>, transform_indices = @transform_14, window_bounds = array<i64: 1, 32>}, {pipeline_mode = #tpu.pipeline_mode<synchronous>, transform_indices = @transform_15, window_bounds = array<i64: 8, 32>}, {pipeline_mode = #tpu.pipeline_mode<synchronous>, transform_indices = @transform_16, window_bounds = array<i64: 1, 8>}, {transform_indices = @transform_17, window_bounds = array<i64: 8, 8>}]} {
    %0 = tpu.iota {dimensions = array<i32: 1>} : vector<8x32xi32>
    %c16_i32 = arith.constant 16 : i32
    %1 = vector.broadcast %c16_i32 : i32 to vector<8x32xi32>
    %2 = arith.cmpi slt, %0, %1 : vector<8x32xi32>
    %c0 = arith.constant 0 : index
    %c0_0 = arith.constant 0 : index
    %c0_1 = arith.constant 0 : index
    %3 = vector.load %arg1[%c0, %c0_0, %c0_1] : memref<8x8x32xf32, #tpu.memory_space<vmem>>, vector<8x8x32xf32>
    %4 = vector.shape_cast %3 : vector<8x8x32xf32> to vector<64x32xf32>
    %c0_2 = arith.constant 0 : index
    %c0_3 = arith.constant 0 : index
    %5 = vector.load %arg2[%c0_2, %c0_3] : memref<64x32xf32, #tpu.memory_space<vmem>>, vector<64x32xf32>
    %cst = arith.constant dense<0.000000e+00> : vector<64x64xf32>
    %6 = tpu.matmul %4, %5, %cst {dimension_numbers = #tpu.dot_dimension_numbers<[1], [1], [0], [0], [0, 0, 1, 0], [], []>} : vector<64x32xf32>, vector<64x32xf32>, vector<64x64xf32> -> vector<64x64xf32>
    %7 = vector.extract_strided_slice %6 {offsets = [0, 0], sizes = [64, 32], strides = [1, 1]} : vector<64x64xf32> to vector<64x32xf32>
    %8 = vector.shape_cast %7 : vector<64x32xf32> to vector<8x8x32xf32>
    %c0_4 = arith.constant 0 : index
    %c0_5 = arith.constant 0 : index
    %c0_6 = arith.constant 0 : index
    %9 = vector.load %arg21[%c0_4, %c0_5, %c0_6] : memref<8x8x32xf32, #tpu.memory_space<vmem>>, vector<8x8x32xf32>
    tpu.vector_store %arg21[%c0_4, %c0_5, %c0_6], %8 {strides = array<i32>} : memref<8x8x32xf32, #tpu.memory_space<vmem>>, vector<8x8x32xf32>,
    %10 = vector.extract_strided_slice %6 {offsets = [0, 32], sizes = [64, 32], strides = [1, 1]} : vector<64x64xf32> to vector<64x32xf32>
    %11 = vector.shape_cast %10 : vector<64x32xf32> to vector<8x8x32xf32>
    %c0_7 = arith.constant 0 : index
    %c0_8 = arith.constant 0 : index
    %c0_9 = arith.constant 0 : index
    %12 = vector.load %arg22[%c0_7, %c0_8, %c0_9] : memref<8x8x32xf32, #tpu.memory_space<vmem>>, vector<8x8x32xf32>
    tpu.vector_store %arg22[%c0_7, %c0_8, %c0_9], %11 {strides = array<i32>} : memref<8x8x32xf32, #tpu.memory_space<vmem>>, vector<8x8x32xf32>,
    %c0_i32 = arith.constant 0 : i32
    %c7_i32 = arith.constant 7 : i32
    %13 = arith.subi %c7_i32, %c0_i32 : i32
    %14 = arith.index_cast %c0_i32 : i32 to index
    %c0_10 = arith.constant 0 : index
    %c0_11 = arith.constant 0 : index
    %15 = vector.load %arg21[%14, %c0_10, %c0_11] : memref<8x8x32xf32, #tpu.memory_space<vmem>>, vector<1x8x32xf32>
    %16 = vector.shape_cast %15 : vector<1x8x32xf32> to vector<8x32xf32>
    %17 = arith.index_cast %13 : i32 to index
    %c0_12 = arith.constant 0 : index
    %c0_13 = arith.constant 0 : index
    %18 = vector.load %arg21[%17, %c0_12, %c0_13] : memref<8x8x32xf32, #tpu.memory_space<vmem>>, vector<1x8x32xf32>
    %19 = vector.shape_cast %18 : vector<1x8x32xf32> to vector<8x32xf32>
    %20 = arith.select %2, %16, %19 : vector<8x32xi1>, vector<8x32xf32>
    %21 = arith.index_cast %c0_i32 : i32 to index
    %c0_14 = arith.constant 0 : index
    %c0_15 = arith.constant 0 : index
    %22 = vector.load %arg19[%21, %c0_14, %c0_15] : memref<8x8x32xf32, #tpu.memory_space<vmem>>, vector<1x8x32xf32>
    %23 = vector.shape_cast %22 : vector<1x8x32xf32> to vector<8x32xf32>
    %24 = vector.shape_cast %20 : vector<8x32xf32> to vector<1x8x32xf32>
    tpu.vector_store %arg19[%21, %c0_14, %c0_15], %24 {strides = array<i32>} : memref<8x8x32xf32, #tpu.memory_space<vmem>>, vector<1x8x32xf32>,
    %25 = arith.index_cast %c0_i32 : i32 to index
    %c0_16 = arith.constant 0 : index
    %c0_17 = arith.constant 0 : index
    %26 = vector.load %arg22[%25, %c0_16, %c0_17] : memref<8x8x32xf32, #tpu.memory_space<vmem>>, vector<1x8x32xf32>
    %27 = vector.shape_cast %26 : vector<1x8x32xf32> to vector<8x32xf32>
    %28 = arith.index_cast %13 : i32 to index
    %c0_18 = arith.constant 0 : index
    %c0_19 = arith.constant 0 : index
    %29 = vector.load %arg22[%28, %c0_18, %c0_19] : memref<8x8x32xf32, #tpu.memory_space<vmem>>, vector<1x8x32xf32>
    %30 = vector.shape_cast %29 : vector<1x8x32xf32> to vector<8x32xf32>
    %31 = arith.select %2, %27, %30 : vector<8x32xi1>, vector<8x32xf32>
    %32 = arith.index_cast %c0_i32 : i32 to index
    %c0_20 = arith.constant 0 : index
    %c0_21 = arith.constant 0 : index
    %33 = vector.load %arg20[%32, %c0_20, %c0_21] : memref<8x8x32xf32, #tpu.memory_space<vmem>>, vector<1x8x32xf32>
    %34 = vector.shape_cast %33 : vector<1x8x32xf32> to vector<8x32xf32>
    %35 = vector.shape_cast %31 : vector<8x32xf32> to vector<1x8x32xf32>
    tpu.vector_store %arg20[%32, %c0_20, %c0_21], %35 {strides = array<i32>} : memref<8x8x32xf32, #tpu.memory_space<vmem>>, vector<1x8x32xf32>,
    %c1_i32 = arith.constant 1 : i32
    %c7_i32_22 = arith.constant 7 : i32
    %36 = arith.subi %c7_i32_22, %c1_i32 : i32
    %37 = arith.index_cast %c1_i32 : i32 to index
    %c0_23 = arith.constant 0 : index
    %c0_24 = arith.constant 0 : index
    %38 = vector.load %arg21[%37, %c0_23, %c0_24] : memref<8x8x32xf32, #tpu.memory_space<vmem>>, vector<1x8x32xf32>
    %39 = vector.shape_cast %38 : vector<1x8x32xf32> to vector<8x32xf32>
    %40 = arith.index_cast %36 : i32 to index
    %c0_25 = arith.constant 0 : index
    %c0_26 = arith.constant 0 : index
    %41 = vector.load %arg21[%40, %c0_25, %c0_26] : memref<8x8x32xf32, #tpu.memory_space<vmem>>, vector<1x8x32xf32>
    %42 = vector.shape_cast %41 : vector<1x8x32xf32> to vector<8x32xf32>
    %43 = arith.select %2, %39, %42 : vector<8x32xi1>, vector<8x32xf32>
    %44 = arith.index_cast %c1_i32 : i32 to index
    %c0_27 = arith.constant 0 : index
    %c0_28 = arith.constant 0 : index
    %45 = vector.load %arg19[%44, %c0_27, %c0_28] : memref<8x8x32xf32, #tpu.memory_space<vmem>>, vector<1x8x32xf32>
    %46 = vector.shape_cast %45 : vector<1x8x32xf32> to vector<8x32xf32>
    %47 = vector.shape_cast %43 : vector<8x32xf32> to vector<1x8x32xf32>
    tpu.vector_store %arg19[%44, %c0_27, %c0_28], %47 {strides = array<i32>} : memref<8x8x32xf32, #tpu.memory_space<vmem>>, vector<1x8x32xf32>,
    %48 = arith.index_cast %c1_i32 : i32 to index
    %c0_29 = arith.constant 0 : index
    %c0_30 = arith.constant 0 : index
    %49 = vector.load %arg22[%48, %c0_29, %c0_30] : memref<8x8x32xf32, #tpu.memory_space<vmem>>, vector<1x8x32xf32>
    %50 = vector.shape_cast %49 : vector<1x8x32xf32> to vector<8x32xf32>
    %51 = arith.index_cast %36 : i32 to index
    %c0_31 = arith.constant 0 : index
    %c0_32 = arith.constant 0 : index
    %52 = vector.load %arg22[%51, %c0_31, %c0_32] : memref<8x8x32xf32, #tpu.memory_space<vmem>>, vector<1x8x32xf32>
    %53 = vector.shape_cast %52 : vector<1x8x32xf32> to vector<8x32xf32>
    %54 = arith.select %2, %50, %53 : vector<8x32xi1>, vector<8x32xf32>
    %55 = arith.index_cast %c1_i32 : i32 to index
    %c0_33 = arith.constant 0 : index
    %c0_34 = arith.constant 0 : index
    %56 = vector.load %arg20[%55, %c0_33, %c0_34] : memref<8x8x32xf32, #tpu.memory_space<vmem>>, vector<1x8x32xf32>
    %57 = vector.shape_cast %56 : vector<1x8x32xf32> to vector<8x32xf32>
    %58 = vector.shape_cast %54 : vector<8x32xf32> to vector<1x8x32xf32>
    tpu.vector_store %arg20[%55, %c0_33, %c0_34], %58 {strides = array<i32>} : memref<8x8x32xf32, #tpu.memory_space<vmem>>, vector<1x8x32xf32>,
    %c2_i32 = arith.constant 2 : i32
    %c7_i32_35 = arith.constant 7 : i32
    %59 = arith.subi %c7_i32_35, %c2_i32 : i32
    %60 = arith.index_cast %c2_i32 : i32 to index
    %c0_36 = arith.constant 0 : index
    %c0_37 = arith.constant 0 : index
    %61 = vector.load %arg21[%60, %c0_36, %c0_37] : memref<8x8x32xf32, #tpu.memory_space<vmem>>, vector<1x8x32xf32>
    %62 = vector.shape_cast %61 : vector<1x8x32xf32> to vector<8x32xf32>
    %63 = arith.index_cast %59 : i32 to index
    %c0_38 = arith.constant 0 : index
    %c0_39 = arith.constant 0 : index
    %64 = vector.load %arg21[%63, %c0_38, %c0_39] : memref<8x8x32xf32, #tpu.memory_space<vmem>>, vector<1x8x32xf32>
    %65 = vector.shape_cast %64 : vector<1x8x32xf32> to vector<8x32xf32>
    %66 = arith.select %2, %62, %65 : vector<8x32xi1>, vector<8x32xf32>
    %67 = arith.index_cast %c2_i32 : i32 to index
    %c0_40 = arith.constant 0 : index
    %c0_41 = arith.constant 0 : index
    %68 = vector.load %arg19[%67, %c0_40, %c0_41] : memref<8x8x32xf32, #tpu.memory_space<vmem>>, vector<1x8x32xf32>
    %69 = vector.shape_cast %68 : vector<1x8x32xf32> to vector<8x32xf32>
    %70 = vector.shape_cast %66 : vector<8x32xf32> to vector<1x8x32xf32>
    tpu.vector_store %arg19[%67, %c0_40, %c0_41], %70 {strides = array<i32>} : memref<8x8x32xf32, #tpu.memory_space<vmem>>, vector<1x8x32xf32>,
    %71 = arith.index_cast %c2_i32 : i32 to index
    %c0_42 = arith.constant 0 : index
    %c0_43 = arith.constant 0 : index
    %72 = vector.load %arg22[%71, %c0_42, %c0_43] : memref<8x8x32xf32, #tpu.memory_space<vmem>>, vector<1x8x32xf32>
    %73 = vector.shape_cast %72 : vector<1x8x32xf32> to vector<8x32xf32>
    %74 = arith.index_cast %59 : i32 to index
    %c0_44 = arith.constant 0 : index
    %c0_45 = arith.constant 0 : index
    %75 = vector.load %arg22[%74, %c0_44, %c0_45] : memref<8x8x32xf32, #tpu.memory_space<vmem>>, vector<1x8x32xf32>
    %76 = vector.shape_cast %75 : vector<1x8x32xf32> to vector<8x32xf32>
    %77 = arith.select %2, %73, %76 : vector<8x32xi1>, vector<8x32xf32>
    %78 = arith.index_cast %c2_i32 : i32 to index
    %c0_46 = arith.constant 0 : index
    %c0_47 = arith.constant 0 : index
    %79 = vector.load %arg20[%78, %c0_46, %c0_47] : memref<8x8x32xf32, #tpu.memory_space<vmem>>, vector<1x8x32xf32>
    %80 = vector.shape_cast %79 : vector<1x8x32xf32> to vector<8x32xf32>
    %81 = vector.shape_cast %77 : vector<8x32xf32> to vector<1x8x32xf32>
    tpu.vector_store %arg20[%78, %c0_46, %c0_47], %81 {strides = array<i32>} : memref<8x8x32xf32, #tpu.memory_space<vmem>>, vector<1x8x32xf32>,
    %c3_i32 = arith.constant 3 : i32
    %c7_i32_48 = arith.constant 7 : i32
    %82 = arith.subi %c7_i32_48, %c3_i32 : i32
    %83 = arith.index_cast %c3_i32 : i32 to index
    %c0_49 = arith.constant 0 : index
    %c0_50 = arith.constant 0 : index
    %84 = vector.load %arg21[%83, %c0_49, %c0_50] : memref<8x8x32xf32, #tpu.memory_space<vmem>>, vector<1x8x32xf32>
    %85 = vector.shape_cast %84 : vector<1x8x32xf32> to vector<8x32xf32>
    %86 = arith.index_cast %82 : i32 to index
    %c0_51 = arith.constant 0 : index
    %c0_52 = arith.constant 0 : index
    %87 = vector.load %arg21[%86, %c0_51, %c0_52] : memref<8x8x32xf32, #tpu.memory_space<vmem>>, vector<1x8x32xf32>
    %88 = vector.shape_cast %87 : vector<1x8x32xf32> to vector<8x32xf32>
    %89 = arith.select %2, %85, %88 : vector<8x32xi1>, vector<8x32xf32>
    %90 = arith.index_cast %c3_i32 : i32 to index
    %c0_53 = arith.constant 0 : index
    %c0_54 = arith.constant 0 : index
    %91 = vector.load %arg19[%90, %c0_53, %c0_54] : memref<8x8x32xf32, #tpu.memory_space<vmem>>, vector<1x8x32xf32>
    %92 = vector.shape_cast %91 : vector<1x8x32xf32> to vector<8x32xf32>
    %93 = vector.shape_cast %89 : vector<8x32xf32> to vector<1x8x32xf32>
    tpu.vector_store %arg19[%90, %c0_53, %c0_54], %93 {strides = array<i32>} : memref<8x8x32xf32, #tpu.memory_space<vmem>>, vector<1x8x32xf32>,
    %94 = arith.index_cast %c3_i32 : i32 to index
    %c0_55 = arith.constant 0 : index
    %c0_56 = arith.constant 0 : index
    %95 = vector.load %arg22[%94, %c0_55, %c0_56] : memref<8x8x32xf32, #tpu.memory_space<vmem>>, vector<1x8x32xf32>
    %96 = vector.shape_cast %95 : vector<1x8x32xf32> to vector<8x32xf32>
    %97 = arith.index_cast %82 : i32 to index
    %c0_57 = arith.constant 0 : index
    %c0_58 = arith.constant 0 : index
    %98 = vector.load %arg22[%97, %c0_57, %c0_58] : memref<8x8x32xf32, #tpu.memory_space<vmem>>, vector<1x8x32xf32>
    %99 = vector.shape_cast %98 : vector<1x8x32xf32> to vector<8x32xf32>
    %100 = arith.select %2, %96, %99 : vector<8x32xi1>, vector<8x32xf32>
    %101 = arith.index_cast %c3_i32 : i32 to index
    %c0_59 = arith.constant 0 : index
    %c0_60 = arith.constant 0 : index
    %102 = vector.load %arg20[%101, %c0_59, %c0_60] : memref<8x8x32xf32, #tpu.memory_space<vmem>>, vector<1x8x32xf32>
    %103 = vector.shape_cast %102 : vector<1x8x32xf32> to vector<8x32xf32>
    %104 = vector.shape_cast %100 : vector<8x32xf32> to vector<1x8x32xf32>
    tpu.vector_store %arg20[%101, %c0_59, %c0_60], %104 {strides = array<i32>} : memref<8x8x32xf32, #tpu.memory_space<vmem>>, vector<1x8x32xf32>,
    %c4_i32 = arith.constant 4 : i32
    %c7_i32_61 = arith.constant 7 : i32
    %105 = arith.subi %c7_i32_61, %c4_i32 : i32
    %106 = arith.index_cast %c4_i32 : i32 to index
    %c0_62 = arith.constant 0 : index
    %c0_63 = arith.constant 0 : index
    %107 = vector.load %arg21[%106, %c0_62, %c0_63] : memref<8x8x32xf32, #tpu.memory_space<vmem>>, vector<1x8x32xf32>
    %108 = vector.shape_cast %107 : vector<1x8x32xf32> to vector<8x32xf32>
    %109 = arith.index_cast %105 : i32 to index
    %c0_64 = arith.constant 0 : index
    %c0_65 = arith.constant 0 : index
    %110 = vector.load %arg21[%109, %c0_64, %c0_65] : memref<8x8x32xf32, #tpu.memory_space<vmem>>, vector<1x8x32xf32>
    %111 = vector.shape_cast %110 : vector<1x8x32xf32> to vector<8x32xf32>
    %112 = arith.select %2, %108, %111 : vector<8x32xi1>, vector<8x32xf32>
    %113 = arith.index_cast %c4_i32 : i32 to index
    %c0_66 = arith.constant 0 : index
    %c0_67 = arith.constant 0 : index
    %114 = vector.load %arg19[%113, %c0_66, %c0_67] : memref<8x8x32xf32, #tpu.memory_space<vmem>>, vector<1x8x32xf32>
    %115 = vector.shape_cast %114 : vector<1x8x32xf32> to vector<8x32xf32>
    %116 = vector.shape_cast %112 : vector<8x32xf32> to vector<1x8x32xf32>
    tpu.vector_store %arg19[%113, %c0_66, %c0_67], %116 {strides = array<i32>} : memref<8x8x32xf32, #tpu.memory_space<vmem>>, vector<1x8x32xf32>,
    %117 = arith.index_cast %c4_i32 : i32 to index
    %c0_68 = arith.constant 0 : index
    %c0_69 = arith.constant 0 : index
    %118 = vector.load %arg22[%117, %c0_68, %c0_69] : memref<8x8x32xf32, #tpu.memory_space<vmem>>, vector<1x8x32xf32>
    %119 = vector.shape_cast %118 : vector<1x8x32xf32> to vector<8x32xf32>
    %120 = arith.index_cast %105 : i32 to index
    %c0_70 = arith.constant 0 : index
    %c0_71 = arith.constant 0 : index
    %121 = vector.load %arg22[%120, %c0_70, %c0_71] : memref<8x8x32xf32, #tpu.memory_space<vmem>>, vector<1x8x32xf32>
    %122 = vector.shape_cast %121 : vector<1x8x32xf32> to vector<8x32xf32>
    %123 = arith.select %2, %119, %122 : vector<8x32xi1>, vector<8x32xf32>
    %124 = arith.index_cast %c4_i32 : i32 to index
    %c0_72 = arith.constant 0 : index
    %c0_73 = arith.constant 0 : index
    %125 = vector.load %arg20[%124, %c0_72, %c0_73] : memref<8x8x32xf32, #tpu.memory_space<vmem>>, vector<1x8x32xf32>
    %126 = vector.shape_cast %125 : vector<1x8x32xf32> to vector<8x32xf32>
    %127 = vector.shape_cast %123 : vector<8x32xf32> to vector<1x8x32xf32>
    tpu.vector_store %arg20[%124, %c0_72, %c0_73], %127 {strides = array<i32>} : memref<8x8x32xf32, #tpu.memory_space<vmem>>, vector<1x8x32xf32>,
    %c5_i32 = arith.constant 5 : i32
    %c7_i32_74 = arith.constant 7 : i32
    %128 = arith.subi %c7_i32_74, %c5_i32 : i32
    %129 = arith.index_cast %c5_i32 : i32 to index
    %c0_75 = arith.constant 0 : index
    %c0_76 = arith.constant 0 : index
    %130 = vector.load %arg21[%129, %c0_75, %c0_76] : memref<8x8x32xf32, #tpu.memory_space<vmem>>, vector<1x8x32xf32>
    %131 = vector.shape_cast %130 : vector<1x8x32xf32> to vector<8x32xf32>
    %132 = arith.index_cast %128 : i32 to index
    %c0_77 = arith.constant 0 : index
    %c0_78 = arith.constant 0 : index
    %133 = vector.load %arg21[%132, %c0_77, %c0_78] : memref<8x8x32xf32, #tpu.memory_space<vmem>>, vector<1x8x32xf32>
    %134 = vector.shape_cast %133 : vector<1x8x32xf32> to vector<8x32xf32>
    %135 = arith.select %2, %131, %134 : vector<8x32xi1>, vector<8x32xf32>
    %136 = arith.index_cast %c5_i32 : i32 to index
    %c0_79 = arith.constant 0 : index
    %c0_80 = arith.constant 0 : index
    %137 = vector.load %arg19[%136, %c0_79, %c0_80] : memref<8x8x32xf32, #tpu.memory_space<vmem>>, vector<1x8x32xf32>
    %138 = vector.shape_cast %137 : vector<1x8x32xf32> to vector<8x32xf32>
    %139 = vector.shape_cast %135 : vector<8x32xf32> to vector<1x8x32xf32>
    tpu.vector_store %arg19[%136, %c0_79, %c0_80], %139 {strides = array<i32>} : memref<8x8x32xf32, #tpu.memory_space<vmem>>, vector<1x8x32xf32>,
    %140 = arith.index_cast %c5_i32 : i32 to index
    %c0_81 = arith.constant 0 : index
    %c0_82 = arith.constant 0 : index
    %141 = vector.load %arg22[%140, %c0_81, %c0_82] : memref<8x8x32xf32, #tpu.memory_space<vmem>>, vector<1x8x32xf32>
    %142 = vector.shape_cast %141 : vector<1x8x32xf32> to vector<8x32xf32>
    %143 = arith.index_cast %128 : i32 to index
    %c0_83 = arith.constant 0 : index
    %c0_84 = arith.constant 0 : index
    %144 = vector.load %arg22[%143, %c0_83, %c0_84] : memref<8x8x32xf32, #tpu.memory_space<vmem>>, vector<1x8x32xf32>
    %145 = vector.shape_cast %144 : vector<1x8x32xf32> to vector<8x32xf32>
    %146 = arith.select %2, %142, %145 : vector<8x32xi1>, vector<8x32xf32>
    %147 = arith.index_cast %c5_i32 : i32 to index
    %c0_85 = arith.constant 0 : index
    %c0_86 = arith.constant 0 : index
    %148 = vector.load %arg20[%147, %c0_85, %c0_86] : memref<8x8x32xf32, #tpu.memory_space<vmem>>, vector<1x8x32xf32>
    %149 = vector.shape_cast %148 : vector<1x8x32xf32> to vector<8x32xf32>
    %150 = vector.shape_cast %146 : vector<8x32xf32> to vector<1x8x32xf32>
    tpu.vector_store %arg20[%147, %c0_85, %c0_86], %150 {strides = array<i32>} : memref<8x8x32xf32, #tpu.memory_space<vmem>>, vector<1x8x32xf32>,
    %c6_i32 = arith.constant 6 : i32
    %c7_i32_87 = arith.constant 7 : i32
    %151 = arith.subi %c7_i32_87, %c6_i32 : i32
    %152 = arith.index_cast %c6_i32 : i32 to index
    %c0_88 = arith.constant 0 : index
    %c0_89 = arith.constant 0 : index
    %153 = vector.load %arg21[%152, %c0_88, %c0_89] : memref<8x8x32xf32, #tpu.memory_space<vmem>>, vector<1x8x32xf32>
    %154 = vector.shape_cast %153 : vector<1x8x32xf32> to vector<8x32xf32>
    %155 = arith.index_cast %151 : i32 to index
    %c0_90 = arith.constant 0 : index
    %c0_91 = arith.constant 0 : index
    %156 = vector.load %arg21[%155, %c0_90, %c0_91] : memref<8x8x32xf32, #tpu.memory_space<vmem>>, vector<1x8x32xf32>
    %157 = vector.shape_cast %156 : vector<1x8x32xf32> to vector<8x32xf32>
    %158 = arith.select %2, %154, %157 : vector<8x32xi1>, vector<8x32xf32>
    %159 = arith.index_cast %c6_i32 : i32 to index
    %c0_92 = arith.constant 0 : index
    %c0_93 = arith.constant 0 : index
    %160 = vector.load %arg19[%159, %c0_92, %c0_93] : memref<8x8x32xf32, #tpu.memory_space<vmem>>, vector<1x8x32xf32>
    %161 = vector.shape_cast %160 : vector<1x8x32xf32> to vector<8x32xf32>
    %162 = vector.shape_cast %158 : vector<8x32xf32> to vector<1x8x32xf32>
    tpu.vector_store %arg19[%159, %c0_92, %c0_93], %162 {strides = array<i32>} : memref<8x8x32xf32, #tpu.memory_space<vmem>>, vector<1x8x32xf32>,
    %163 = arith.index_cast %c6_i32 : i32 to index
    %c0_94 = arith.constant 0 : index
    %c0_95 = arith.constant 0 : index
    %164 = vector.load %arg22[%163, %c0_94, %c0_95] : memref<8x8x32xf32, #tpu.memory_space<vmem>>, vector<1x8x32xf32>
    %165 = vector.shape_cast %164 : vector<1x8x32xf32> to vector<8x32xf32>
    %166 = arith.index_cast %151 : i32 to index
    %c0_96 = arith.constant 0 : index
    %c0_97 = arith.constant 0 : index
    %167 = vector.load %arg22[%166, %c0_96, %c0_97] : memref<8x8x32xf32, #tpu.memory_space<vmem>>, vector<1x8x32xf32>
    %168 = vector.shape_cast %167 : vector<1x8x32xf32> to vector<8x32xf32>
    %169 = arith.select %2, %165, %168 : vector<8x32xi1>, vector<8x32xf32>
    %170 = arith.index_cast %c6_i32 : i32 to index
    %c0_98 = arith.constant 0 : index
    %c0_99 = arith.constant 0 : index
    %171 = vector.load %arg20[%170, %c0_98, %c0_99] : memref<8x8x32xf32, #tpu.memory_space<vmem>>, vector<1x8x32xf32>
    %172 = vector.shape_cast %171 : vector<1x8x32xf32> to vector<8x32xf32>
    %173 = vector.shape_cast %169 : vector<8x32xf32> to vector<1x8x32xf32>
    tpu.vector_store %arg20[%170, %c0_98, %c0_99], %173 {strides = array<i32>} : memref<8x8x32xf32, #tpu.memory_space<vmem>>, vector<1x8x32xf32>,
    %c7_i32_100 = arith.constant 7 : i32
    %c7_i32_101 = arith.constant 7 : i32
    %174 = arith.subi %c7_i32_101, %c7_i32_100 : i32
    %175 = arith.index_cast %c7_i32_100 : i32 to index
    %c0_102 = arith.constant 0 : index
    %c0_103 = arith.constant 0 : index
    %176 = vector.load %arg21[%175, %c0_102, %c0_103] : memref<8x8x32xf32, #tpu.memory_space<vmem>>, vector<1x8x32xf32>
    %177 = vector.shape_cast %176 : vector<1x8x32xf32> to vector<8x32xf32>
    %178 = arith.index_cast %174 : i32 to index
    %c0_104 = arith.constant 0 : index
    %c0_105 = arith.constant 0 : index
    %179 = vector.load %arg21[%178, %c0_104, %c0_105] : memref<8x8x32xf32, #tpu.memory_space<vmem>>, vector<1x8x32xf32>
    %180 = vector.shape_cast %179 : vector<1x8x32xf32> to vector<8x32xf32>
    %181 = arith.select %2, %177, %180 : vector<8x32xi1>, vector<8x32xf32>
    %182 = arith.index_cast %c7_i32_100 : i32 to index
    %c0_106 = arith.constant 0 : index
    %c0_107 = arith.constant 0 : index
    %183 = vector.load %arg19[%182, %c0_106, %c0_107] : memref<8x8x32xf32, #tpu.memory_space<vmem>>, vector<1x8x32xf32>
    %184 = vector.shape_cast %183 : vector<1x8x32xf32> to vector<8x32xf32>
    %185 = vector.shape_cast %181 : vector<8x32xf32> to vector<1x8x32xf32>
    tpu.vector_store %arg19[%182, %c0_106, %c0_107], %185 {strides = array<i32>} : memref<8x8x32xf32, #tpu.memory_space<vmem>>, vector<1x8x32xf32>,
    %186 = arith.index_cast %c7_i32_100 : i32 to index
    %c0_108 = arith.constant 0 : index
    %c0_109 = arith.constant 0 : index
    %187 = vector.load %arg22[%186, %c0_108, %c0_109] : memref<8x8x32xf32, #tpu.memory_space<vmem>>, vector<1x8x32xf32>
    %188 = vector.shape_cast %187 : vector<1x8x32xf32> to vector<8x32xf32>
    %189 = arith.index_cast %174 : i32 to index
    %c0_110 = arith.constant 0 : index
    %c0_111 = arith.constant 0 : index
    %190 = vector.load %arg22[%189, %c0_110, %c0_111] : memref<8x8x32xf32, #tpu.memory_space<vmem>>, vector<1x8x32xf32>
    %191 = vector.shape_cast %190 : vector<1x8x32xf32> to vector<8x32xf32>
    %192 = arith.select %2, %188, %191 : vector<8x32xi1>, vector<8x32xf32>
    %193 = arith.index_cast %c7_i32_100 : i32 to index
    %c0_112 = arith.constant 0 : index
    %c0_113 = arith.constant 0 : index
    %194 = vector.load %arg20[%193, %c0_112, %c0_113] : memref<8x8x32xf32, #tpu.memory_space<vmem>>, vector<1x8x32xf32>
    %195 = vector.shape_cast %194 : vector<1x8x32xf32> to vector<8x32xf32>
    %196 = vector.shape_cast %192 : vector<8x32xf32> to vector<1x8x32xf32>
    tpu.vector_store %arg20[%193, %c0_112, %c0_113], %196 {strides = array<i32>} : memref<8x8x32xf32, #tpu.memory_space<vmem>>, vector<1x8x32xf32>,
    %c8_i32 = arith.constant 8 : i32
    %c0_114 = arith.constant 0 : index
    %c0_115 = arith.constant 0 : index
    %197 = vector.load %arg3[%c0_114, %c0_115] : memref<1x32xf32, #tpu.memory_space<vmem>>, vector<1x32xf32>
    %198 = vector.shape_cast %197 : vector<1x32xf32> to vector<1x32xf32>
    %199 = vector.broadcast %198 : vector<1x32xf32> to vector<8x32xf32>
    %c0_116 = arith.constant 0 : index
    %c0_117 = arith.constant 0 : index
    %200 = vector.load %arg4[%c0_116, %c0_117] : memref<1x32xf32, #tpu.memory_space<vmem>>, vector<1x32xf32>
    %201 = vector.shape_cast %200 : vector<1x32xf32> to vector<1x32xf32>
    %202 = vector.broadcast %201 : vector<1x32xf32> to vector<8x32xf32>
    %cst_118 = arith.constant 0.000000e+00 : f32
    %203 = vector.broadcast %cst_118 : f32 to vector<8x32xf32>
    %c0_i32_119 = arith.constant 0 : i32
    %204 = arith.index_cast %c0_i32_119 : i32 to index
    %c0_120 = arith.constant 0 : index
    %c0_121 = arith.constant 0 : index
    %205 = vector.load %arg19[%204, %c0_120, %c0_121] : memref<8x8x32xf32, #tpu.memory_space<vmem>>, vector<1x8x32xf32>
    %206 = vector.shape_cast %205 : vector<1x8x32xf32> to vector<8x32xf32>
    %207 = arith.index_cast %c0_i32_119 : i32 to index
    %c0_122 = arith.constant 0 : index
    %c0_123 = arith.constant 0 : index
    %208 = vector.load %arg20[%207, %c0_122, %c0_123] : memref<8x8x32xf32, #tpu.memory_space<vmem>>, vector<1x8x32xf32>
    %209 = vector.shape_cast %208 : vector<1x8x32xf32> to vector<8x32xf32>
    %210 = arith.mulf %199, %203 : vector<8x32xf32>
    %211 = arith.mulf %202, %203 : vector<8x32xf32>
    %212 = arith.subf %210, %211 : vector<8x32xf32>
    %213 = arith.addf %212, %206 : vector<8x32xf32>
    %214 = arith.mulf %199, %203 : vector<8x32xf32>
    %215 = arith.mulf %202, %203 : vector<8x32xf32>
    %216 = arith.addf %214, %215 : vector<8x32xf32>
    %217 = arith.addf %216, %209 : vector<8x32xf32>
    %218 = arith.index_cast %c0_i32_119 : i32 to index
    %c0_124 = arith.constant 0 : index
    %c0_125 = arith.constant 0 : index
    %219 = vector.load %arg21[%218, %c0_124, %c0_125] : memref<8x8x32xf32, #tpu.memory_space<vmem>>, vector<1x8x32xf32>
    %220 = vector.shape_cast %219 : vector<1x8x32xf32> to vector<8x32xf32>
    %221 = vector.shape_cast %213 : vector<8x32xf32> to vector<1x8x32xf32>
    tpu.vector_store %arg21[%218, %c0_124, %c0_125], %221 {strides = array<i32>} : memref<8x8x32xf32, #tpu.memory_space<vmem>>, vector<1x8x32xf32>,
    %222 = arith.index_cast %c0_i32_119 : i32 to index
    %c0_126 = arith.constant 0 : index
    %c0_127 = arith.constant 0 : index
    %223 = vector.load %arg22[%222, %c0_126, %c0_127] : memref<8x8x32xf32, #tpu.memory_space<vmem>>, vector<1x8x32xf32>
    %224 = vector.shape_cast %223 : vector<1x8x32xf32> to vector<8x32xf32>
    %225 = vector.shape_cast %217 : vector<8x32xf32> to vector<1x8x32xf32>
    tpu.vector_store %arg22[%222, %c0_126, %c0_127], %225 {strides = array<i32>} : memref<8x8x32xf32, #tpu.memory_space<vmem>>, vector<1x8x32xf32>,
    %c1_i32_128 = arith.constant 1 : i32
    %226 = arith.index_cast %c1_i32_128 : i32 to index
    %c0_129 = arith.constant 0 : index
    %c0_130 = arith.constant 0 : index
    %227 = vector.load %arg19[%226, %c0_129, %c0_130] : memref<8x8x32xf32, #tpu.memory_space<vmem>>, vector<1x8x32xf32>
    %228 = vector.shape_cast %227 : vector<1x8x32xf32> to vector<8x32xf32>
    %229 = arith.index_cast %c1_i32_128 : i32 to index
    %c0_131 = arith.constant 0 : index
    %c0_132 = arith.constant 0 : index
    %230 = vector.load %arg20[%229, %c0_131, %c0_132] : memref<8x8x32xf32, #tpu.memory_space<vmem>>, vector<1x8x32xf32>
    %231 = vector.shape_cast %230 : vector<1x8x32xf32> to vector<8x32xf32>
    %232 = arith.mulf %199, %213 : vector<8x32xf32>
    %233 = arith.mulf %202, %217 : vector<8x32xf32>
    %234 = arith.subf %232, %233 : vector<8x32xf32>
    %235 = arith.addf %234, %228 : vector<8x32xf32>
    %236 = arith.mulf %199, %217 : vector<8x32xf32>
    %237 = arith.mulf %202, %213 : vector<8x32xf32>
    %238 = arith.addf %236, %237 : vector<8x32xf32>
    %239 = arith.addf %238, %231 : vector<8x32xf32>
    %240 = arith.index_cast %c1_i32_128 : i32 to index
    %c0_133 = arith.constant 0 : index
    %c0_134 = arith.constant 0 : index
    %241 = vector.load %arg21[%240, %c0_133, %c0_134] : memref<8x8x32xf32, #tpu.memory_space<vmem>>, vector<1x8x32xf32>
    %242 = vector.shape_cast %241 : vector<1x8x32xf32> to vector<8x32xf32>
    %243 = vector.shape_cast %235 : vector<8x32xf32> to vector<1x8x32xf32>
    tpu.vector_store %arg21[%240, %c0_133, %c0_134], %243 {strides = array<i32>} : memref<8x8x32xf32, #tpu.memory_space<vmem>>, vector<1x8x32xf32>,
    %244 = arith.index_cast %c1_i32_128 : i32 to index
    %c0_135 = arith.constant 0 : index
    %c0_136 = arith.constant 0 : index
    %245 = vector.load %arg22[%244, %c0_135, %c0_136] : memref<8x8x32xf32, #tpu.memory_space<vmem>>, vector<1x8x32xf32>
    %246 = vector.shape_cast %245 : vector<1x8x32xf32> to vector<8x32xf32>
    %247 = vector.shape_cast %239 : vector<8x32xf32> to vector<1x8x32xf32>
    tpu.vector_store %arg22[%244, %c0_135, %c0_136], %247 {strides = array<i32>} : memref<8x8x32xf32, #tpu.memory_space<vmem>>, vector<1x8x32xf32>,
    %c2_i32_137 = arith.constant 2 : i32
    %248 = arith.index_cast %c2_i32_137 : i32 to index
    %c0_138 = arith.constant 0 : index
    %c0_139 = arith.constant 0 : index
    %249 = vector.load %arg19[%248, %c0_138, %c0_139] : memref<8x8x32xf32, #tpu.memory_space<vmem>>, vector<1x8x32xf32>
    %250 = vector.shape_cast %249 : vector<1x8x32xf32> to vector<8x32xf32>
    %251 = arith.index_cast %c2_i32_137 : i32 to index
    %c0_140 = arith.constant 0 : index
    %c0_141 = arith.constant 0 : index
    %252 = vector.load %arg20[%251, %c0_140, %c0_141] : memref<8x8x32xf32, #tpu.memory_space<vmem>>, vector<1x8x32xf32>
    %253 = vector.shape_cast %252 : vector<1x8x32xf32> to vector<8x32xf32>
    %254 = arith.mulf %199, %235 : vector<8x32xf32>
    %255 = arith.mulf %202, %239 : vector<8x32xf32>
    %256 = arith.subf %254, %255 : vector<8x32xf32>
    %257 = arith.addf %256, %250 : vector<8x32xf32>
    %258 = arith.mulf %199, %239 : vector<8x32xf32>
    %259 = arith.mulf %202, %235 : vector<8x32xf32>
    %260 = arith.addf %258, %259 : vector<8x32xf32>
    %261 = arith.addf %260, %253 : vector<8x32xf32>
    %262 = arith.index_cast %c2_i32_137 : i32 to index
    %c0_142 = arith.constant 0 : index
    %c0_143 = arith.constant 0 : index
    %263 = vector.load %arg21[%262, %c0_142, %c0_143] : memref<8x8x32xf32, #tpu.memory_space<vmem>>, vector<1x8x32xf32>
    %264 = vector.shape_cast %263 : vector<1x8x32xf32> to vector<8x32xf32>
    %265 = vector.shape_cast %257 : vector<8x32xf32> to vector<1x8x32xf32>
    tpu.vector_store %arg21[%262, %c0_142, %c0_143], %265 {strides = array<i32>} : memref<8x8x32xf32, #tpu.memory_space<vmem>>, vector<1x8x32xf32>,
    %266 = arith.index_cast %c2_i32_137 : i32 to index
    %c0_144 = arith.constant 0 : index
    %c0_145 = arith.constant 0 : index
    %267 = vector.load %arg22[%266, %c0_144, %c0_145] : memref<8x8x32xf32, #tpu.memory_space<vmem>>, vector<1x8x32xf32>
    %268 = vector.shape_cast %267 : vector<1x8x32xf32> to vector<8x32xf32>
    %269 = vector.shape_cast %261 : vector<8x32xf32> to vector<1x8x32xf32>
    tpu.vector_store %arg22[%266, %c0_144, %c0_145], %269 {strides = array<i32>} : memref<8x8x32xf32, #tpu.memory_space<vmem>>, vector<1x8x32xf32>,
    %c3_i32_146 = arith.constant 3 : i32
    %270 = arith.index_cast %c3_i32_146 : i32 to index
    %c0_147 = arith.constant 0 : index
    %c0_148 = arith.constant 0 : index
    %271 = vector.load %arg19[%270, %c0_147, %c0_148] : memref<8x8x32xf32, #tpu.memory_space<vmem>>, vector<1x8x32xf32>
    %272 = vector.shape_cast %271 : vector<1x8x32xf32> to vector<8x32xf32>
    %273 = arith.index_cast %c3_i32_146 : i32 to index
    %c0_149 = arith.constant 0 : index
    %c0_150 = arith.constant 0 : index
    %274 = vector.load %arg20[%273, %c0_149, %c0_150] : memref<8x8x32xf32, #tpu.memory_space<vmem>>, vector<1x8x32xf32>
    %275 = vector.shape_cast %274 : vector<1x8x32xf32> to vector<8x32xf32>
    %276 = arith.mulf %199, %257 : vector<8x32xf32>
    %277 = arith.mulf %202, %261 : vector<8x32xf32>
    %278 = arith.subf %276, %277 : vector<8x32xf32>
    %279 = arith.addf %278, %272 : vector<8x32xf32>
    %280 = arith.mulf %199, %261 : vector<8x32xf32>
    %281 = arith.mulf %202, %257 : vector<8x32xf32>
    %282 = arith.addf %280, %281 : vector<8x32xf32>
    %283 = arith.addf %282, %275 : vector<8x32xf32>
    %284 = arith.index_cast %c3_i32_146 : i32 to index
    %c0_151 = arith.constant 0 : index
    %c0_152 = arith.constant 0 : index
    %285 = vector.load %arg21[%284, %c0_151, %c0_152] : memref<8x8x32xf32, #tpu.memory_space<vmem>>, vector<1x8x32xf32>
    %286 = vector.shape_cast %285 : vector<1x8x32xf32> to vector<8x32xf32>
    %287 = vector.shape_cast %279 : vector<8x32xf32> to vector<1x8x32xf32>
    tpu.vector_store %arg21[%284, %c0_151, %c0_152], %287 {strides = array<i32>} : memref<8x8x32xf32, #tpu.memory_space<vmem>>, vector<1x8x32xf32>,
    %288 = arith.index_cast %c3_i32_146 : i32 to index
    %c0_153 = arith.constant 0 : index
    %c0_154 = arith.constant 0 : index
    %289 = vector.load %arg22[%288, %c0_153, %c0_154] : memref<8x8x32xf32, #tpu.memory_space<vmem>>, vector<1x8x32xf32>
    %290 = vector.shape_cast %289 : vector<1x8x32xf32> to vector<8x32xf32>
    %291 = vector.shape_cast %283 : vector<8x32xf32> to vector<1x8x32xf32>
    tpu.vector_store %arg22[%288, %c0_153, %c0_154], %291 {strides = array<i32>} : memref<8x8x32xf32, #tpu.memory_space<vmem>>, vector<1x8x32xf32>,
    %c4_i32_155 = arith.constant 4 : i32
    %292 = arith.index_cast %c4_i32_155 : i32 to index
    %c0_156 = arith.constant 0 : index
    %c0_157 = arith.constant 0 : index
    %293 = vector.load %arg19[%292, %c0_156, %c0_157] : memref<8x8x32xf32, #tpu.memory_space<vmem>>, vector<1x8x32xf32>
    %294 = vector.shape_cast %293 : vector<1x8x32xf32> to vector<8x32xf32>
    %295 = arith.index_cast %c4_i32_155 : i32 to index
    %c0_158 = arith.constant 0 : index
    %c0_159 = arith.constant 0 : index
    %296 = vector.load %arg20[%295, %c0_158, %c0_159] : memref<8x8x32xf32, #tpu.memory_space<vmem>>, vector<1x8x32xf32>
    %297 = vector.shape_cast %296 : vector<1x8x32xf32> to vector<8x32xf32>
    %298 = arith.mulf %199, %279 : vector<8x32xf32>
    %299 = arith.mulf %202, %283 : vector<8x32xf32>
    %300 = arith.subf %298, %299 : vector<8x32xf32>
    %301 = arith.addf %300, %294 : vector<8x32xf32>
    %302 = arith.mulf %199, %283 : vector<8x32xf32>
    %303 = arith.mulf %202, %279 : vector<8x32xf32>
    %304 = arith.addf %302, %303 : vector<8x32xf32>
    %305 = arith.addf %304, %297 : vector<8x32xf32>
    %306 = arith.index_cast %c4_i32_155 : i32 to index
    %c0_160 = arith.constant 0 : index
    %c0_161 = arith.constant 0 : index
    %307 = vector.load %arg21[%306, %c0_160, %c0_161] : memref<8x8x32xf32, #tpu.memory_space<vmem>>, vector<1x8x32xf32>
    %308 = vector.shape_cast %307 : vector<1x8x32xf32> to vector<8x32xf32>
    %309 = vector.shape_cast %301 : vector<8x32xf32> to vector<1x8x32xf32>
    tpu.vector_store %arg21[%306, %c0_160, %c0_161], %309 {strides = array<i32>} : memref<8x8x32xf32, #tpu.memory_space<vmem>>, vector<1x8x32xf32>,
    %310 = arith.index_cast %c4_i32_155 : i32 to index
    %c0_162 = arith.constant 0 : index
    %c0_163 = arith.constant 0 : index
    %311 = vector.load %arg22[%310, %c0_162, %c0_163] : memref<8x8x32xf32, #tpu.memory_space<vmem>>, vector<1x8x32xf32>
    %312 = vector.shape_cast %311 : vector<1x8x32xf32> to vector<8x32xf32>
    %313 = vector.shape_cast %305 : vector<8x32xf32> to vector<1x8x32xf32>
    tpu.vector_store %arg22[%310, %c0_162, %c0_163], %313 {strides = array<i32>} : memref<8x8x32xf32, #tpu.memory_space<vmem>>, vector<1x8x32xf32>,
    %c5_i32_164 = arith.constant 5 : i32
    %314 = arith.index_cast %c5_i32_164 : i32 to index
    %c0_165 = arith.constant 0 : index
    %c0_166 = arith.constant 0 : index
    %315 = vector.load %arg19[%314, %c0_165, %c0_166] : memref<8x8x32xf32, #tpu.memory_space<vmem>>, vector<1x8x32xf32>
    %316 = vector.shape_cast %315 : vector<1x8x32xf32> to vector<8x32xf32>
    %317 = arith.index_cast %c5_i32_164 : i32 to index
    %c0_167 = arith.constant 0 : index
    %c0_168 = arith.constant 0 : index
    %318 = vector.load %arg20[%317, %c0_167, %c0_168] : memref<8x8x32xf32, #tpu.memory_space<vmem>>, vector<1x8x32xf32>
    %319 = vector.shape_cast %318 : vector<1x8x32xf32> to vector<8x32xf32>
    %320 = arith.mulf %199, %301 : vector<8x32xf32>
    %321 = arith.mulf %202, %305 : vector<8x32xf32>
    %322 = arith.subf %320, %321 : vector<8x32xf32>
    %323 = arith.addf %322, %316 : vector<8x32xf32>
    %324 = arith.mulf %199, %305 : vector<8x32xf32>
    %325 = arith.mulf %202, %301 : vector<8x32xf32>
    %326 = arith.addf %324, %325 : vector<8x32xf32>
    %327 = arith.addf %326, %319 : vector<8x32xf32>
    %328 = arith.index_cast %c5_i32_164 : i32 to index
    %c0_169 = arith.constant 0 : index
    %c0_170 = arith.constant 0 : index
    %329 = vector.load %arg21[%328, %c0_169, %c0_170] : memref<8x8x32xf32, #tpu.memory_space<vmem>>, vector<1x8x32xf32>
    %330 = vector.shape_cast %329 : vector<1x8x32xf32> to vector<8x32xf32>
    %331 = vector.shape_cast %323 : vector<8x32xf32> to vector<1x8x32xf32>
    tpu.vector_store %arg21[%328, %c0_169, %c0_170], %331 {strides = array<i32>} : memref<8x8x32xf32, #tpu.memory_space<vmem>>, vector<1x8x32xf32>,
    %332 = arith.index_cast %c5_i32_164 : i32 to index
    %c0_171 = arith.constant 0 : index
    %c0_172 = arith.constant 0 : index
    %333 = vector.load %arg22[%332, %c0_171, %c0_172] : memref<8x8x32xf32, #tpu.memory_space<vmem>>, vector<1x8x32xf32>
    %334 = vector.shape_cast %333 : vector<1x8x32xf32> to vector<8x32xf32>
    %335 = vector.shape_cast %327 : vector<8x32xf32> to vector<1x8x32xf32>
    tpu.vector_store %arg22[%332, %c0_171, %c0_172], %335 {strides = array<i32>} : memref<8x8x32xf32, #tpu.memory_space<vmem>>, vector<1x8x32xf32>,
    %c6_i32_173 = arith.constant 6 : i32
    %336 = arith.index_cast %c6_i32_173 : i32 to index
    %c0_174 = arith.constant 0 : index
    %c0_175 = arith.constant 0 : index
    %337 = vector.load %arg19[%336, %c0_174, %c0_175] : memref<8x8x32xf32, #tpu.memory_space<vmem>>, vector<1x8x32xf32>
    %338 = vector.shape_cast %337 : vector<1x8x32xf32> to vector<8x32xf32>
    %339 = arith.index_cast %c6_i32_173 : i32 to index
    %c0_176 = arith.constant 0 : index
    %c0_177 = arith.constant 0 : index
    %340 = vector.load %arg20[%339, %c0_176, %c0_177] : memref<8x8x32xf32, #tpu.memory_space<vmem>>, vector<1x8x32xf32>
    %341 = vector.shape_cast %340 : vector<1x8x32xf32> to vector<8x32xf32>
    %342 = arith.mulf %199, %323 : vector<8x32xf32>
    %343 = arith.mulf %202, %327 : vector<8x32xf32>
    %344 = arith.subf %342, %343 : vector<8x32xf32>
    %345 = arith.addf %344, %338 : vector<8x32xf32>
    %346 = arith.mulf %199, %327 : vector<8x32xf32>
    %347 = arith.mulf %202, %323 : vector<8x32xf32>
    %348 = arith.addf %346, %347 : vector<8x32xf32>
    %349 = arith.addf %348, %341 : vector<8x32xf32>
    %350 = arith.index_cast %c6_i32_173 : i32 to index
    %c0_178 = arith.constant 0 : index
    %c0_179 = arith.constant 0 : index
    %351 = vector.load %arg21[%350, %c0_178, %c0_179] : memref<8x8x32xf32, #tpu.memory_space<vmem>>, vector<1x8x32xf32>
    %352 = vector.shape_cast %351 : vector<1x8x32xf32> to vector<8x32xf32>
    %353 = vector.shape_cast %345 : vector<8x32xf32> to vector<1x8x32xf32>
    tpu.vector_store %arg21[%350, %c0_178, %c0_179], %353 {strides = array<i32>} : memref<8x8x32xf32, #tpu.memory_space<vmem>>, vector<1x8x32xf32>,
    %354 = arith.index_cast %c6_i32_173 : i32 to index
    %c0_180 = arith.constant 0 : index
    %c0_181 = arith.constant 0 : index
    %355 = vector.load %arg22[%354, %c0_180, %c0_181] : memref<8x8x32xf32, #tpu.memory_space<vmem>>, vector<1x8x32xf32>
    %356 = vector.shape_cast %355 : vector<1x8x32xf32> to vector<8x32xf32>
    %357 = vector.shape_cast %349 : vector<8x32xf32> to vector<1x8x32xf32>
    tpu.vector_store %arg22[%354, %c0_180, %c0_181], %357 {strides = array<i32>} : memref<8x8x32xf32, #tpu.memory_space<vmem>>, vector<1x8x32xf32>,
    %c7_i32_182 = arith.constant 7 : i32
    %358 = arith.index_cast %c7_i32_182 : i32 to index
    %c0_183 = arith.constant 0 : index
    %c0_184 = arith.constant 0 : index
    %359 = vector.load %arg19[%358, %c0_183, %c0_184] : memref<8x8x32xf32, #tpu.memory_space<vmem>>, vector<1x8x32xf32>
    %360 = vector.shape_cast %359 : vector<1x8x32xf32> to vector<8x32xf32>
    %361 = arith.index_cast %c7_i32_182 : i32 to index
    %c0_185 = arith.constant 0 : index
    %c0_186 = arith.constant 0 : index
    %362 = vector.load %arg20[%361, %c0_185, %c0_186] : memref<8x8x32xf32, #tpu.memory_space<vmem>>, vector<1x8x32xf32>
    %363 = vector.shape_cast %362 : vector<1x8x32xf32> to vector<8x32xf32>
    %364 = arith.mulf %199, %345 : vector<8x32xf32>
    %365 = arith.mulf %202, %349 : vector<8x32xf32>
    %366 = arith.subf %364, %365 : vector<8x32xf32>
    %367 = arith.addf %366, %360 : vector<8x32xf32>
    %368 = arith.mulf %199, %349 : vector<8x32xf32>
    %369 = arith.mulf %202, %345 : vector<8x32xf32>
    %370 = arith.addf %368, %369 : vector<8x32xf32>
    %371 = arith.addf %370, %363 : vector<8x32xf32>
    %372 = arith.index_cast %c7_i32_182 : i32 to index
    %c0_187 = arith.constant 0 : index
    %c0_188 = arith.constant 0 : index
    %373 = vector.load %arg21[%372, %c0_187, %c0_188] : memref<8x8x32xf32, #tpu.memory_space<vmem>>, vector<1x8x32xf32>
    %374 = vector.shape_cast %373 : vector<1x8x32xf32> to vector<8x32xf32>
    %375 = vector.shape_cast %367 : vector<8x32xf32> to vector<1x8x32xf32>
    tpu.vector_store %arg21[%372, %c0_187, %c0_188], %375 {strides = array<i32>} : memref<8x8x32xf32, #tpu.memory_space<vmem>>, vector<1x8x32xf32>,
    %376 = arith.index_cast %c7_i32_182 : i32 to index
    %c0_189 = arith.constant 0 : index
    %c0_190 = arith.constant 0 : index
    %377 = vector.load %arg22[%376, %c0_189, %c0_190] : memref<8x8x32xf32, #tpu.memory_space<vmem>>, vector<1x8x32xf32>
    %378 = vector.shape_cast %377 : vector<1x8x32xf32> to vector<8x32xf32>
    %379 = vector.shape_cast %371 : vector<8x32xf32> to vector<1x8x32xf32>
    tpu.vector_store %arg22[%376, %c0_189, %c0_190], %379 {strides = array<i32>} : memref<8x8x32xf32, #tpu.memory_space<vmem>>, vector<1x8x32xf32>,
    %c8_i32_191 = arith.constant 8 : i32
    %c0_i32_192 = arith.constant 0 : i32
    %c7_i32_193 = arith.constant 7 : i32
    %380 = arith.subi %c7_i32_193, %c0_i32_192 : i32
    %381 = arith.index_cast %c0_i32_192 : i32 to index
    %c0_194 = arith.constant 0 : index
    %c0_195 = arith.constant 0 : index
    %382 = vector.load %arg21[%381, %c0_194, %c0_195] : memref<8x8x32xf32, #tpu.memory_space<vmem>>, vector<1x8x32xf32>
    %383 = vector.shape_cast %382 : vector<1x8x32xf32> to vector<8x32xf32>
    %384 = arith.index_cast %380 : i32 to index
    %c0_196 = arith.constant 0 : index
    %c0_197 = arith.constant 0 : index
    %385 = vector.load %arg21[%384, %c0_196, %c0_197] : memref<8x8x32xf32, #tpu.memory_space<vmem>>, vector<1x8x32xf32>
    %386 = vector.shape_cast %385 : vector<1x8x32xf32> to vector<8x32xf32>
    %387 = arith.select %2, %383, %386 : vector<8x32xi1>, vector<8x32xf32>
    %388 = arith.index_cast %c0_i32_192 : i32 to index
    %c0_198 = arith.constant 0 : index
    %c0_199 = arith.constant 0 : index
    %389 = vector.load %arg19[%388, %c0_198, %c0_199] : memref<8x8x32xf32, #tpu.memory_space<vmem>>, vector<1x8x32xf32>
    %390 = vector.shape_cast %389 : vector<1x8x32xf32> to vector<8x32xf32>
    %391 = vector.shape_cast %387 : vector<8x32xf32> to vector<1x8x32xf32>
    tpu.vector_store %arg19[%388, %c0_198, %c0_199], %391 {strides = array<i32>} : memref<8x8x32xf32, #tpu.memory_space<vmem>>, vector<1x8x32xf32>,
    %392 = arith.index_cast %c0_i32_192 : i32 to index
    %c0_200 = arith.constant 0 : index
    %c0_201 = arith.constant 0 : index
    %393 = vector.load %arg22[%392, %c0_200, %c0_201] : memref<8x8x32xf32, #tpu.memory_space<vmem>>, vector<1x8x32xf32>
    %394 = vector.shape_cast %393 : vector<1x8x32xf32> to vector<8x32xf32>
    %395 = arith.index_cast %380 : i32 to index
    %c0_202 = arith.constant 0 : index
    %c0_203 = arith.constant 0 : index
    %396 = vector.load %arg22[%395, %c0_202, %c0_203] : memref<8x8x32xf32, #tpu.memory_space<vmem>>, vector<1x8x32xf32>
    %397 = vector.shape_cast %396 : vector<1x8x32xf32> to vector<8x32xf32>
    %398 = arith.select %2, %394, %397 : vector<8x32xi1>, vector<8x32xf32>
    %399 = arith.index_cast %c0_i32_192 : i32 to index
    %c0_204 = arith.constant 0 : index
    %c0_205 = arith.constant 0 : index
    %400 = vector.load %arg20[%399, %c0_204, %c0_205] : memref<8x8x32xf32, #tpu.memory_space<vmem>>, vector<1x8x32xf32>
    %401 = vector.shape_cast %400 : vector<1x8x32xf32> to vector<8x32xf32>
    %402 = vector.shape_cast %398 : vector<8x32xf32> to vector<1x8x32xf32>
    tpu.vector_store %arg20[%399, %c0_204, %c0_205], %402 {strides = array<i32>} : memref<8x8x32xf32, #tpu.memory_space<vmem>>, vector<1x8x32xf32>,
    %c1_i32_206 = arith.constant 1 : i32
    %c7_i32_207 = arith.constant 7 : i32
    %403 = arith.subi %c7_i32_207, %c1_i32_206 : i32
    %404 = arith.index_cast %c1_i32_206 : i32 to index
    %c0_208 = arith.constant 0 : index
    %c0_209 = arith.constant 0 : index
    %405 = vector.load %arg21[%404, %c0_208, %c0_209] : memref<8x8x32xf32, #tpu.memory_space<vmem>>, vector<1x8x32xf32>
    %406 = vector.shape_cast %405 : vector<1x8x32xf32> to vector<8x32xf32>
    %407 = arith.index_cast %403 : i32 to index
    %c0_210 = arith.constant 0 : index
    %c0_211 = arith.constant 0 : index
    %408 = vector.load %arg21[%407, %c0_210, %c0_211] : memref<8x8x32xf32, #tpu.memory_space<vmem>>, vector<1x8x32xf32>
    %409 = vector.shape_cast %408 : vector<1x8x32xf32> to vector<8x32xf32>
    %410 = arith.select %2, %406, %409 : vector<8x32xi1>, vector<8x32xf32>
    %411 = arith.index_cast %c1_i32_206 : i32 to index
    %c0_212 = arith.constant 0 : index
    %c0_213 = arith.constant 0 : index
    %412 = vector.load %arg19[%411, %c0_212, %c0_213] : memref<8x8x32xf32, #tpu.memory_space<vmem>>, vector<1x8x32xf32>
    %413 = vector.shape_cast %412 : vector<1x8x32xf32> to vector<8x32xf32>
    %414 = vector.shape_cast %410 : vector<8x32xf32> to vector<1x8x32xf32>
    tpu.vector_store %arg19[%411, %c0_212, %c0_213], %414 {strides = array<i32>} : memref<8x8x32xf32, #tpu.memory_space<vmem>>, vector<1x8x32xf32>,
    %415 = arith.index_cast %c1_i32_206 : i32 to index
    %c0_214 = arith.constant 0 : index
    %c0_215 = arith.constant 0 : index
    %416 = vector.load %arg22[%415, %c0_214, %c0_215] : memref<8x8x32xf32, #tpu.memory_space<vmem>>, vector<1x8x32xf32>
    %417 = vector.shape_cast %416 : vector<1x8x32xf32> to vector<8x32xf32>
    %418 = arith.index_cast %403 : i32 to index
    %c0_216 = arith.constant 0 : index
    %c0_217 = arith.constant 0 : index
    %419 = vector.load %arg22[%418, %c0_216, %c0_217] : memref<8x8x32xf32, #tpu.memory_space<vmem>>, vector<1x8x32xf32>
    %420 = vector.shape_cast %419 : vector<1x8x32xf32> to vector<8x32xf32>
    %421 = arith.select %2, %417, %420 : vector<8x32xi1>, vector<8x32xf32>
    %422 = arith.index_cast %c1_i32_206 : i32 to index
    %c0_218 = arith.constant 0 : index
    %c0_219 = arith.constant 0 : index
    %423 = vector.load %arg20[%422, %c0_218, %c0_219] : memref<8x8x32xf32, #tpu.memory_space<vmem>>, vector<1x8x32xf32>
    %424 = vector.shape_cast %423 : vector<1x8x32xf32> to vector<8x32xf32>
    %425 = vector.shape_cast %421 : vector<8x32xf32> to vector<1x8x32xf32>
    tpu.vector_store %arg20[%422, %c0_218, %c0_219], %425 {strides = array<i32>} : memref<8x8x32xf32, #tpu.memory_space<vmem>>, vector<1x8x32xf32>,
    %c2_i32_220 = arith.constant 2 : i32
    %c7_i32_221 = arith.constant 7 : i32
    %426 = arith.subi %c7_i32_221, %c2_i32_220 : i32
    %427 = arith.index_cast %c2_i32_220 : i32 to index
    %c0_222 = arith.constant 0 : index
    %c0_223 = arith.constant 0 : index
    %428 = vector.load %arg21[%427, %c0_222, %c0_223] : memref<8x8x32xf32, #tpu.memory_space<vmem>>, vector<1x8x32xf32>
    %429 = vector.shape_cast %428 : vector<1x8x32xf32> to vector<8x32xf32>
    %430 = arith.index_cast %426 : i32 to index
    %c0_224 = arith.constant 0 : index
    %c0_225 = arith.constant 0 : index
    %431 = vector.load %arg21[%430, %c0_224, %c0_225] : memref<8x8x32xf32, #tpu.memory_space<vmem>>, vector<1x8x32xf32>
    %432 = vector.shape_cast %431 : vector<1x8x32xf32> to vector<8x32xf32>
    %433 = arith.select %2, %429, %432 : vector<8x32xi1>, vector<8x32xf32>
    %434 = arith.index_cast %c2_i32_220 : i32 to index
    %c0_226 = arith.constant 0 : index
    %c0_227 = arith.constant 0 : index
    %435 = vector.load %arg19[%434, %c0_226, %c0_227] : memref<8x8x32xf32, #tpu.memory_space<vmem>>, vector<1x8x32xf32>
    %436 = vector.shape_cast %435 : vector<1x8x32xf32> to vector<8x32xf32>
    %437 = vector.shape_cast %433 : vector<8x32xf32> to vector<1x8x32xf32>
    tpu.vector_store %arg19[%434, %c0_226, %c0_227], %437 {strides = array<i32>} : memref<8x8x32xf32, #tpu.memory_space<vmem>>, vector<1x8x32xf32>,
    %438 = arith.index_cast %c2_i32_220 : i32 to index
    %c0_228 = arith.constant 0 : index
    %c0_229 = arith.constant 0 : index
    %439 = vector.load %arg22[%438, %c0_228, %c0_229] : memref<8x8x32xf32, #tpu.memory_space<vmem>>, vector<1x8x32xf32>
    %440 = vector.shape_cast %439 : vector<1x8x32xf32> to vector<8x32xf32>
    %441 = arith.index_cast %426 : i32 to index
    %c0_230 = arith.constant 0 : index
    %c0_231 = arith.constant 0 : index
    %442 = vector.load %arg22[%441, %c0_230, %c0_231] : memref<8x8x32xf32, #tpu.memory_space<vmem>>, vector<1x8x32xf32>
    %443 = vector.shape_cast %442 : vector<1x8x32xf32> to vector<8x32xf32>
    %444 = arith.select %2, %440, %443 : vector<8x32xi1>, vector<8x32xf32>
    %445 = arith.index_cast %c2_i32_220 : i32 to index
    %c0_232 = arith.constant 0 : index
    %c0_233 = arith.constant 0 : index
    %446 = vector.load %arg20[%445, %c0_232, %c0_233] : memref<8x8x32xf32, #tpu.memory_space<vmem>>, vector<1x8x32xf32>
    %447 = vector.shape_cast %446 : vector<1x8x32xf32> to vector<8x32xf32>
    %448 = vector.shape_cast %444 : vector<8x32xf32> to vector<1x8x32xf32>
    tpu.vector_store %arg20[%445, %c0_232, %c0_233], %448 {strides = array<i32>} : memref<8x8x32xf32, #tpu.memory_space<vmem>>, vector<1x8x32xf32>,
    %c3_i32_234 = arith.constant 3 : i32
    %c7_i32_235 = arith.constant 7 : i32
    %449 = arith.subi %c7_i32_235, %c3_i32_234 : i32
    %450 = arith.index_cast %c3_i32_234 : i32 to index
    %c0_236 = arith.constant 0 : index
    %c0_237 = arith.constant 0 : index
    %451 = vector.load %arg21[%450, %c0_236, %c0_237] : memref<8x8x32xf32, #tpu.memory_space<vmem>>, vector<1x8x32xf32>
    %452 = vector.shape_cast %451 : vector<1x8x32xf32> to vector<8x32xf32>
    %453 = arith.index_cast %449 : i32 to index
    %c0_238 = arith.constant 0 : index
    %c0_239 = arith.constant 0 : index
    %454 = vector.load %arg21[%453, %c0_238, %c0_239] : memref<8x8x32xf32, #tpu.memory_space<vmem>>, vector<1x8x32xf32>
    %455 = vector.shape_cast %454 : vector<1x8x32xf32> to vector<8x32xf32>
    %456 = arith.select %2, %452, %455 : vector<8x32xi1>, vector<8x32xf32>
    %457 = arith.index_cast %c3_i32_234 : i32 to index
    %c0_240 = arith.constant 0 : index
    %c0_241 = arith.constant 0 : index
    %458 = vector.load %arg19[%457, %c0_240, %c0_241] : memref<8x8x32xf32, #tpu.memory_space<vmem>>, vector<1x8x32xf32>
    %459 = vector.shape_cast %458 : vector<1x8x32xf32> to vector<8x32xf32>
    %460 = vector.shape_cast %456 : vector<8x32xf32> to vector<1x8x32xf32>
    tpu.vector_store %arg19[%457, %c0_240, %c0_241], %460 {strides = array<i32>} : memref<8x8x32xf32, #tpu.memory_space<vmem>>, vector<1x8x32xf32>,
    %461 = arith.index_cast %c3_i32_234 : i32 to index
    %c0_242 = arith.constant 0 : index
    %c0_243 = arith.constant 0 : index
    %462 = vector.load %arg22[%461, %c0_242, %c0_243] : memref<8x8x32xf32, #tpu.memory_space<vmem>>, vector<1x8x32xf32>
    %463 = vector.shape_cast %462 : vector<1x8x32xf32> to vector<8x32xf32>
    %464 = arith.index_cast %449 : i32 to index
    %c0_244 = arith.constant 0 : index
    %c0_245 = arith.constant 0 : index
    %465 = vector.load %arg22[%464, %c0_244, %c0_245] : memref<8x8x32xf32, #tpu.memory_space<vmem>>, vector<1x8x32xf32>
    %466 = vector.shape_cast %465 : vector<1x8x32xf32> to vector<8x32xf32>
    %467 = arith.select %2, %463, %466 : vector<8x32xi1>, vector<8x32xf32>
    %468 = arith.index_cast %c3_i32_234 : i32 to index
    %c0_246 = arith.constant 0 : index
    %c0_247 = arith.constant 0 : index
    %469 = vector.load %arg20[%468, %c0_246, %c0_247] : memref<8x8x32xf32, #tpu.memory_space<vmem>>, vector<1x8x32xf32>
    %470 = vector.shape_cast %469 : vector<1x8x32xf32> to vector<8x32xf32>
    %471 = vector.shape_cast %467 : vector<8x32xf32> to vector<1x8x32xf32>
    tpu.vector_store %arg20[%468, %c0_246, %c0_247], %471 {strides = array<i32>} : memref<8x8x32xf32, #tpu.memory_space<vmem>>, vector<1x8x32xf32>,
    %c4_i32_248 = arith.constant 4 : i32
    %c7_i32_249 = arith.constant 7 : i32
    %472 = arith.subi %c7_i32_249, %c4_i32_248 : i32
    %473 = arith.index_cast %c4_i32_248 : i32 to index
    %c0_250 = arith.constant 0 : index
    %c0_251 = arith.constant 0 : index
    %474 = vector.load %arg21[%473, %c0_250, %c0_251] : memref<8x8x32xf32, #tpu.memory_space<vmem>>, vector<1x8x32xf32>
    %475 = vector.shape_cast %474 : vector<1x8x32xf32> to vector<8x32xf32>
    %476 = arith.index_cast %472 : i32 to index
    %c0_252 = arith.constant 0 : index
    %c0_253 = arith.constant 0 : index
    %477 = vector.load %arg21[%476, %c0_252, %c0_253] : memref<8x8x32xf32, #tpu.memory_space<vmem>>, vector<1x8x32xf32>
    %478 = vector.shape_cast %477 : vector<1x8x32xf32> to vector<8x32xf32>
    %479 = arith.select %2, %475, %478 : vector<8x32xi1>, vector<8x32xf32>
    %480 = arith.index_cast %c4_i32_248 : i32 to index
    %c0_254 = arith.constant 0 : index
    %c0_255 = arith.constant 0 : index
    %481 = vector.load %arg19[%480, %c0_254, %c0_255] : memref<8x8x32xf32, #tpu.memory_space<vmem>>, vector<1x8x32xf32>
    %482 = vector.shape_cast %481 : vector<1x8x32xf32> to vector<8x32xf32>
    %483 = vector.shape_cast %479 : vector<8x32xf32> to vector<1x8x32xf32>
    tpu.vector_store %arg19[%480, %c0_254, %c0_255], %483 {strides = array<i32>} : memref<8x8x32xf32, #tpu.memory_space<vmem>>, vector<1x8x32xf32>,
    %484 = arith.index_cast %c4_i32_248 : i32 to index
    %c0_256 = arith.constant 0 : index
    %c0_257 = arith.constant 0 : index
    %485 = vector.load %arg22[%484, %c0_256, %c0_257] : memref<8x8x32xf32, #tpu.memory_space<vmem>>, vector<1x8x32xf32>
    %486 = vector.shape_cast %485 : vector<1x8x32xf32> to vector<8x32xf32>
    %487 = arith.index_cast %472 : i32 to index
    %c0_258 = arith.constant 0 : index
    %c0_259 = arith.constant 0 : index
    %488 = vector.load %arg22[%487, %c0_258, %c0_259] : memref<8x8x32xf32, #tpu.memory_space<vmem>>, vector<1x8x32xf32>
    %489 = vector.shape_cast %488 : vector<1x8x32xf32> to vector<8x32xf32>
    %490 = arith.select %2, %486, %489 : vector<8x32xi1>, vector<8x32xf32>
    %491 = arith.index_cast %c4_i32_248 : i32 to index
    %c0_260 = arith.constant 0 : index
    %c0_261 = arith.constant 0 : index
    %492 = vector.load %arg20[%491, %c0_260, %c0_261] : memref<8x8x32xf32, #tpu.memory_space<vmem>>, vector<1x8x32xf32>
    %493 = vector.shape_cast %492 : vector<1x8x32xf32> to vector<8x32xf32>
    %494 = vector.shape_cast %490 : vector<8x32xf32> to vector<1x8x32xf32>
    tpu.vector_store %arg20[%491, %c0_260, %c0_261], %494 {strides = array<i32>} : memref<8x8x32xf32, #tpu.memory_space<vmem>>, vector<1x8x32xf32>,
    %c5_i32_262 = arith.constant 5 : i32
    %c7_i32_263 = arith.constant 7 : i32
    %495 = arith.subi %c7_i32_263, %c5_i32_262 : i32
    %496 = arith.index_cast %c5_i32_262 : i32 to index
    %c0_264 = arith.constant 0 : index
    %c0_265 = arith.constant 0 : index
    %497 = vector.load %arg21[%496, %c0_264, %c0_265] : memref<8x8x32xf32, #tpu.memory_space<vmem>>, vector<1x8x32xf32>
    %498 = vector.shape_cast %497 : vector<1x8x32xf32> to vector<8x32xf32>
    %499 = arith.index_cast %495 : i32 to index
    %c0_266 = arith.constant 0 : index
    %c0_267 = arith.constant 0 : index
    %500 = vector.load %arg21[%499, %c0_266, %c0_267] : memref<8x8x32xf32, #tpu.memory_space<vmem>>, vector<1x8x32xf32>
    %501 = vector.shape_cast %500 : vector<1x8x32xf32> to vector<8x32xf32>
    %502 = arith.select %2, %498, %501 : vector<8x32xi1>, vector<8x32xf32>
    %503 = arith.index_cast %c5_i32_262 : i32 to index
    %c0_268 = arith.constant 0 : index
    %c0_269 = arith.constant 0 : index
    %504 = vector.load %arg19[%503, %c0_268, %c0_269] : memref<8x8x32xf32, #tpu.memory_space<vmem>>, vector<1x8x32xf32>
    %505 = vector.shape_cast %504 : vector<1x8x32xf32> to vector<8x32xf32>
    %506 = vector.shape_cast %502 : vector<8x32xf32> to vector<1x8x32xf32>
    tpu.vector_store %arg19[%503, %c0_268, %c0_269], %506 {strides = array<i32>} : memref<8x8x32xf32, #tpu.memory_space<vmem>>, vector<1x8x32xf32>,
    %507 = arith.index_cast %c5_i32_262 : i32 to index
    %c0_270 = arith.constant 0 : index
    %c0_271 = arith.constant 0 : index
    %508 = vector.load %arg22[%507, %c0_270, %c0_271] : memref<8x8x32xf32, #tpu.memory_space<vmem>>, vector<1x8x32xf32>
    %509 = vector.shape_cast %508 : vector<1x8x32xf32> to vector<8x32xf32>
    %510 = arith.index_cast %495 : i32 to index
    %c0_272 = arith.constant 0 : index
    %c0_273 = arith.constant 0 : index
    %511 = vector.load %arg22[%510, %c0_272, %c0_273] : memref<8x8x32xf32, #tpu.memory_space<vmem>>, vector<1x8x32xf32>
    %512 = vector.shape_cast %511 : vector<1x8x32xf32> to vector<8x32xf32>
    %513 = arith.select %2, %509, %512 : vector<8x32xi1>, vector<8x32xf32>
    %514 = arith.index_cast %c5_i32_262 : i32 to index
    %c0_274 = arith.constant 0 : index
    %c0_275 = arith.constant 0 : index
    %515 = vector.load %arg20[%514, %c0_274, %c0_275] : memref<8x8x32xf32, #tpu.memory_space<vmem>>, vector<1x8x32xf32>
    %516 = vector.shape_cast %515 : vector<1x8x32xf32> to vector<8x32xf32>
    %517 = vector.shape_cast %513 : vector<8x32xf32> to vector<1x8x32xf32>
    tpu.vector_store %arg20[%514, %c0_274, %c0_275], %517 {strides = array<i32>} : memref<8x8x32xf32, #tpu.memory_space<vmem>>, vector<1x8x32xf32>,
    %c6_i32_276 = arith.constant 6 : i32
    %c7_i32_277 = arith.constant 7 : i32
    %518 = arith.subi %c7_i32_277, %c6_i32_276 : i32
    %519 = arith.index_cast %c6_i32_276 : i32 to index
    %c0_278 = arith.constant 0 : index
    %c0_279 = arith.constant 0 : index
    %520 = vector.load %arg21[%519, %c0_278, %c0_279] : memref<8x8x32xf32, #tpu.memory_space<vmem>>, vector<1x8x32xf32>
    %521 = vector.shape_cast %520 : vector<1x8x32xf32> to vector<8x32xf32>
    %522 = arith.index_cast %518 : i32 to index
    %c0_280 = arith.constant 0 : index
    %c0_281 = arith.constant 0 : index
    %523 = vector.load %arg21[%522, %c0_280, %c0_281] : memref<8x8x32xf32, #tpu.memory_space<vmem>>, vector<1x8x32xf32>
    %524 = vector.shape_cast %523 : vector<1x8x32xf32> to vector<8x32xf32>
    %525 = arith.select %2, %521, %524 : vector<8x32xi1>, vector<8x32xf32>
    %526 = arith.index_cast %c6_i32_276 : i32 to index
    %c0_282 = arith.constant 0 : index
    %c0_283 = arith.constant 0 : index
    %527 = vector.load %arg19[%526, %c0_282, %c0_283] : memref<8x8x32xf32, #tpu.memory_space<vmem>>, vector<1x8x32xf32>
    %528 = vector.shape_cast %527 : vector<1x8x32xf32> to vector<8x32xf32>
    %529 = vector.shape_cast %525 : vector<8x32xf32> to vector<1x8x32xf32>
    tpu.vector_store %arg19[%526, %c0_282, %c0_283], %529 {strides = array<i32>} : memref<8x8x32xf32, #tpu.memory_space<vmem>>, vector<1x8x32xf32>,
    %530 = arith.index_cast %c6_i32_276 : i32 to index
    %c0_284 = arith.constant 0 : index
    %c0_285 = arith.constant 0 : index
    %531 = vector.load %arg22[%530, %c0_284, %c0_285] : memref<8x8x32xf32, #tpu.memory_space<vmem>>, vector<1x8x32xf32>
    %532 = vector.shape_cast %531 : vector<1x8x32xf32> to vector<8x32xf32>
    %533 = arith.index_cast %518 : i32 to index
    %c0_286 = arith.constant 0 : index
    %c0_287 = arith.constant 0 : index
    %534 = vector.load %arg22[%533, %c0_286, %c0_287] : memref<8x8x32xf32, #tpu.memory_space<vmem>>, vector<1x8x32xf32>
    %535 = vector.shape_cast %534 : vector<1x8x32xf32> to vector<8x32xf32>
    %536 = arith.select %2, %532, %535 : vector<8x32xi1>, vector<8x32xf32>
    %537 = arith.index_cast %c6_i32_276 : i32 to index
    %c0_288 = arith.constant 0 : index
    %c0_289 = arith.constant 0 : index
    %538 = vector.load %arg20[%537, %c0_288, %c0_289] : memref<8x8x32xf32, #tpu.memory_space<vmem>>, vector<1x8x32xf32>
    %539 = vector.shape_cast %538 : vector<1x8x32xf32> to vector<8x32xf32>
    %540 = vector.shape_cast %536 : vector<8x32xf32> to vector<1x8x32xf32>
    tpu.vector_store %arg20[%537, %c0_288, %c0_289], %540 {strides = array<i32>} : memref<8x8x32xf32, #tpu.memory_space<vmem>>, vector<1x8x32xf32>,
    %c7_i32_290 = arith.constant 7 : i32
    %c7_i32_291 = arith.constant 7 : i32
    %541 = arith.subi %c7_i32_291, %c7_i32_290 : i32
    %542 = arith.index_cast %c7_i32_290 : i32 to index
    %c0_292 = arith.constant 0 : index
    %c0_293 = arith.constant 0 : index
    %543 = vector.load %arg21[%542, %c0_292, %c0_293] : memref<8x8x32xf32, #tpu.memory_space<vmem>>, vector<1x8x32xf32>
    %544 = vector.shape_cast %543 : vector<1x8x32xf32> to vector<8x32xf32>
    %545 = arith.index_cast %541 : i32 to index
    %c0_294 = arith.constant 0 : index
    %c0_295 = arith.constant 0 : index
    %546 = vector.load %arg21[%545, %c0_294, %c0_295] : memref<8x8x32xf32, #tpu.memory_space<vmem>>, vector<1x8x32xf32>
    %547 = vector.shape_cast %546 : vector<1x8x32xf32> to vector<8x32xf32>
    %548 = arith.select %2, %544, %547 : vector<8x32xi1>, vector<8x32xf32>
    %549 = arith.index_cast %c7_i32_290 : i32 to index
    %c0_296 = arith.constant 0 : index
    %c0_297 = arith.constant 0 : index
    %550 = vector.load %arg19[%549, %c0_296, %c0_297] : memref<8x8x32xf32, #tpu.memory_space<vmem>>, vector<1x8x32xf32>
    %551 = vector.shape_cast %550 : vector<1x8x32xf32> to vector<8x32xf32>
    %552 = vector.shape_cast %548 : vector<8x32xf32> to vector<1x8x32xf32>
    tpu.vector_store %arg19[%549, %c0_296, %c0_297], %552 {strides = array<i32>} : memref<8x8x32xf32, #tpu.memory_space<vmem>>, vector<1x8x32xf32>,
    %553 = arith.index_cast %c7_i32_290 : i32 to index
    %c0_298 = arith.constant 0 : index
    %c0_299 = arith.constant 0 : index
    %554 = vector.load %arg22[%553, %c0_298, %c0_299] : memref<8x8x32xf32, #tpu.memory_space<vmem>>, vector<1x8x32xf32>
    %555 = vector.shape_cast %554 : vector<1x8x32xf32> to vector<8x32xf32>
    %556 = arith.index_cast %541 : i32 to index
    %c0_300 = arith.constant 0 : index
    %c0_301 = arith.constant 0 : index
    %557 = vector.load %arg22[%556, %c0_300, %c0_301] : memref<8x8x32xf32, #tpu.memory_space<vmem>>, vector<1x8x32xf32>
    %558 = vector.shape_cast %557 : vector<1x8x32xf32> to vector<8x32xf32>
    %559 = arith.select %2, %555, %558 : vector<8x32xi1>, vector<8x32xf32>
    %560 = arith.index_cast %c7_i32_290 : i32 to index
    %c0_302 = arith.constant 0 : index
    %c0_303 = arith.constant 0 : index
    %561 = vector.load %arg20[%560, %c0_302, %c0_303] : memref<8x8x32xf32, #tpu.memory_space<vmem>>, vector<1x8x32xf32>
    %562 = vector.shape_cast %561 : vector<1x8x32xf32> to vector<8x32xf32>
    %563 = vector.shape_cast %559 : vector<8x32xf32> to vector<1x8x32xf32>
    tpu.vector_store %arg20[%560, %c0_302, %c0_303], %563 {strides = array<i32>} : memref<8x8x32xf32, #tpu.memory_space<vmem>>, vector<1x8x32xf32>,
    %c8_i32_304 = arith.constant 8 : i32
    %c0_305 = arith.constant 0 : index
    %c0_306 = arith.constant 0 : index
    %c0_307 = arith.constant 0 : index
    %564 = vector.load %arg19[%c0_305, %c0_306, %c0_307] : memref<8x8x32xf32, #tpu.memory_space<vmem>>, vector<8x8x32xf32>
    %565 = vector.shape_cast %564 : vector<8x8x32xf32> to vector<64x32xf32>
    %c0_308 = arith.constant 0 : index
    %c0_309 = arith.constant 0 : index
    %c0_310 = arith.constant 0 : index
    %566 = vector.load %arg20[%c0_308, %c0_309, %c0_310] : memref<8x8x32xf32, #tpu.memory_space<vmem>>, vector<8x8x32xf32>
    %567 = vector.shape_cast %566 : vector<8x8x32xf32> to vector<64x32xf32>
    %568 = tpu.concatenate %565, %567 in 1 : vector<64x32xf32>, vector<64x32xf32> -> vector<64x64xf32>
    %c0_311 = arith.constant 0 : index
    %c0_312 = arith.constant 0 : index
    %569 = vector.load %arg5[%c0_311, %c0_312] : memref<32x64xf32, #tpu.memory_space<vmem>>, vector<32x64xf32>
    %cst_313 = arith.constant dense<0.000000e+00> : vector<64x32xf32>
    %570 = tpu.matmul %568, %569, %cst_313 {dimension_numbers = #tpu.dot_dimension_numbers<[1], [1], [0], [0], [0, 0, 1, 0], [], []>} : vector<64x64xf32>, vector<32x64xf32>, vector<64x32xf32> -> vector<64x32xf32>
    %c0_314 = arith.constant 0 : index
    %c0_315 = arith.constant 0 : index
    %571 = vector.load %arg6[%c0_314, %c0_315] : memref<1x32xf32, #tpu.memory_space<vmem>>, vector<1x32xf32>
    %572 = vector.broadcast %571 : vector<1x32xf32> to vector<64x32xf32>
    %573 = arith.mulf %4, %572 : vector<64x32xf32>
    %574 = arith.addf %570, %573 : vector<64x32xf32>
    %cst_316 = arith.constant 5.000000e-01 : f32
    %575 = vector.broadcast %cst_316 : f32 to vector<64x32xf32>
    %576 = arith.mulf %575, %574 : vector<64x32xf32>
    %cst_317 = arith.constant 0.707106769 : f32
    %577 = vector.broadcast %cst_317 : f32 to vector<64x32xf32>
    %578 = arith.mulf %574, %577 : vector<64x32xf32>
    %cst_318 = arith.constant 0.000000e+00 : f32
    %579 = vector.broadcast %cst_318 : f32 to vector<64x32xf32>
    %580 = arith.cmpf olt, %578, %579 : vector<64x32xf32>
    %cst_319 = arith.constant -1.000000e+00 : f32
    %cst_320 = arith.constant 1.000000e+00 : f32
    %581 = vector.broadcast %cst_319 : f32 to vector<64x32xf32>
    %582 = vector.broadcast %cst_320 : f32 to vector<64x32xf32>
    %583 = arith.select %580, %581, %582 : vector<64x32xi1>, vector<64x32xf32>
    %584 = math.absf %578 : vector<64x32xf32>
    %cst_321 = arith.constant 0.327591091 : f32
    %585 = vector.broadcast %cst_321 : f32 to vector<64x32xf32>
    %586 = arith.mulf %585, %584 : vector<64x32xf32>
    %cst_322 = arith.constant 1.000000e+00 : f32
    %587 = vector.broadcast %cst_322 : f32 to vector<64x32xf32>
    %588 = arith.addf %587, %586 : vector<64x32xf32>
    %cst_323 = arith.constant 1.000000e+00 : f32
    %589 = vector.broadcast %cst_323 : f32 to vector<64x32xf32>
    %590 = arith.divf %589, %588 : vector<64x32xf32>
    %cst_324 = arith.constant 1.06140542 : f32
    %591 = vector.broadcast %cst_324 : f32 to vector<64x32xf32>
    %592 = arith.mulf %591, %590 : vector<64x32xf32>
    %cst_325 = arith.constant -1.45315206 : f32
    %593 = vector.broadcast %cst_325 : f32 to vector<64x32xf32>
    %594 = arith.addf %592, %593 : vector<64x32xf32>
    %595 = arith.mulf %594, %590 : vector<64x32xf32>
    %cst_326 = arith.constant 1.42141378 : f32
    %596 = vector.broadcast %cst_326 : f32 to vector<64x32xf32>
    %597 = arith.addf %595, %596 : vector<64x32xf32>
    %598 = arith.mulf %597, %590 : vector<64x32xf32>
    %cst_327 = arith.constant -0.284496725 : f32
    %599 = vector.broadcast %cst_327 : f32 to vector<64x32xf32>
    %600 = arith.addf %598, %599 : vector<64x32xf32>
    %601 = arith.mulf %600, %590 : vector<64x32xf32>
    %cst_328 = arith.constant 0.254829586 : f32
    %602 = vector.broadcast %cst_328 : f32 to vector<64x32xf32>
    %603 = arith.addf %601, %602 : vector<64x32xf32>
    %604 = arith.mulf %603, %590 : vector<64x32xf32>
    %cst_329 = arith.constant 0.000000e+00 : f32
    %605 = vector.broadcast %cst_329 : f32 to vector<64x32xf32>
    %606 = arith.subf %605, %584 : vector<64x32xf32>
    %607 = arith.mulf %606, %584 : vector<64x32xf32>
    %608 = math.exp %607 : vector<64x32xf32>
    %609 = arith.mulf %604, %608 : vector<64x32xf32>
    %cst_330 = arith.constant 1.000000e+00 : f32
    %610 = vector.broadcast %cst_330 : f32 to vector<64x32xf32>
    %611 = arith.subf %610, %609 : vector<64x32xf32>
    %612 = arith.mulf %583, %611 : vector<64x32xf32>
    %cst_331 = arith.constant 1.000000e+00 : f32
    %613 = vector.broadcast %cst_331 : f32 to vector<64x32xf32>
    %614 = arith.addf %613, %612 : vector<64x32xf32>
    %615 = arith.mulf %576, %614 : vector<64x32xf32>
    %c0_332 = arith.constant 0 : index
    %c0_333 = arith.constant 0 : index
    %616 = vector.load %arg7[%c0_332, %c0_333] : memref<32x32xf32, #tpu.memory_space<vmem>>, vector<32x32xf32>
    %cst_334 = arith.constant dense<0.000000e+00> : vector<64x32xf32>
    %617 = tpu.matmul %615, %616, %cst_334 {dimension_numbers = #tpu.dot_dimension_numbers<[1], [1], [0], [0], [0, 0, 1, 0], [], []>} : vector<64x32xf32>, vector<32x32xf32>, vector<64x32xf32> -> vector<64x32xf32>
    %c0_335 = arith.constant 0 : index
    %c0_336 = arith.constant 0 : index
    %618 = vector.load %arg8[%c0_335, %c0_336] : memref<1x32xf32, #tpu.memory_space<vmem>>, vector<1x32xf32>
    %619 = vector.broadcast %618 : vector<1x32xf32> to vector<64x32xf32>
    %620 = arith.addf %617, %619 : vector<64x32xf32>
    %621 = math.absf %620 : vector<64x32xf32>
    %cst_337 = arith.constant 0.000000e+00 : f32
    %622 = vector.broadcast %cst_337 : f32 to vector<64x32xf32>
    %623 = arith.subf %622, %621 : vector<64x32xf32>
    %624 = math.exp %623 : vector<64x32xf32>
    %cst_338 = arith.constant 0.000000e+00 : f32
    %625 = vector.broadcast %cst_338 : f32 to vector<64x32xf32>
    %626 = arith.cmpf oge, %620, %625 : vector<64x32xf32>
    %cst_339 = arith.constant 1.000000e+00 : f32
    %627 = vector.broadcast %cst_339 : f32 to vector<64x32xf32>
    %628 = arith.addf %627, %624 : vector<64x32xf32>
    %cst_340 = arith.constant 1.000000e+00 : f32
    %629 = vector.broadcast %cst_340 : f32 to vector<64x32xf32>
    %630 = arith.divf %629, %628 : vector<64x32xf32>
    %cst_341 = arith.constant 1.000000e+00 : f32
    %631 = vector.broadcast %cst_341 : f32 to vector<64x32xf32>
    %632 = arith.addf %631, %624 : vector<64x32xf32>
    %633 = arith.divf %624, %632 : vector<64x32xf32>
    %634 = arith.select %626, %630, %633 : vector<64x32xi1>, vector<64x32xf32>
    %635 = arith.mulf %615, %634 : vector<64x32xf32>
    %636 = arith.addf %635, %4 : vector<64x32xf32>
    %c0_342 = arith.constant 0 : index
    %c0_343 = arith.constant 0 : index
    %637 = vector.load %arg9[%c0_342, %c0_343] : memref<64x32xf32, #tpu.memory_space<vmem>>, vector<64x32xf32>
    %cst_344 = arith.constant dense<0.000000e+00> : vector<64x64xf32>
    %638 = tpu.matmul %636, %637, %cst_344 {dimension_numbers = #tpu.dot_dimension_numbers<[1], [1], [0], [0], [0, 0, 1, 0], [], []>} : vector<64x32xf32>, vector<64x32xf32>, vector<64x64xf32> -> vector<64x64xf32>
    %639 = vector.extract_strided_slice %638 {offsets = [0, 0], sizes = [64, 32], strides = [1, 1]} : vector<64x64xf32> to vector<64x32xf32>
    %640 = vector.shape_cast %639 : vector<64x32xf32> to vector<8x8x32xf32>
    %c0_345 = arith.constant 0 : index
    %c0_346 = arith.constant 0 : index
    %c0_347 = arith.constant 0 : index
    %641 = vector.load %arg21[%c0_345, %c0_346, %c0_347] : memref<8x8x32xf32, #tpu.memory_space<vmem>>, vector<8x8x32xf32>
    tpu.vector_store %arg21[%c0_345, %c0_346, %c0_347], %640 {strides = array<i32>} : memref<8x8x32xf32, #tpu.memory_space<vmem>>, vector<8x8x32xf32>,
    %642 = vector.extract_strided_slice %638 {offsets = [0, 32], sizes = [64, 32], strides = [1, 1]} : vector<64x64xf32> to vector<64x32xf32>
    %643 = vector.shape_cast %642 : vector<64x32xf32> to vector<8x8x32xf32>
    %c0_348 = arith.constant 0 : index
    %c0_349 = arith.constant 0 : index
    %c0_350 = arith.constant 0 : index
    %644 = vector.load %arg22[%c0_348, %c0_349, %c0_350] : memref<8x8x32xf32, #tpu.memory_space<vmem>>, vector<8x8x32xf32>
    tpu.vector_store %arg22[%c0_348, %c0_349, %c0_350], %643 {strides = array<i32>} : memref<8x8x32xf32, #tpu.memory_space<vmem>>, vector<8x8x32xf32>,
    %c0_i32_351 = arith.constant 0 : i32
    %c7_i32_352 = arith.constant 7 : i32
    %645 = arith.subi %c7_i32_352, %c0_i32_351 : i32
    %646 = arith.index_cast %c0_i32_351 : i32 to index
    %c0_353 = arith.constant 0 : index
    %c0_354 = arith.constant 0 : index
    %647 = vector.load %arg21[%646, %c0_353, %c0_354] : memref<8x8x32xf32, #tpu.memory_space<vmem>>, vector<1x8x32xf32>
    %648 = vector.shape_cast %647 : vector<1x8x32xf32> to vector<8x32xf32>
    %649 = arith.index_cast %645 : i32 to index
    %c0_355 = arith.constant 0 : index
    %c0_356 = arith.constant 0 : index
    %650 = vector.load %arg21[%649, %c0_355, %c0_356] : memref<8x8x32xf32, #tpu.memory_space<vmem>>, vector<1x8x32xf32>
    %651 = vector.shape_cast %650 : vector<1x8x32xf32> to vector<8x32xf32>
    %652 = arith.select %2, %648, %651 : vector<8x32xi1>, vector<8x32xf32>
    %653 = arith.index_cast %c0_i32_351 : i32 to index
    %c0_357 = arith.constant 0 : index
    %c0_358 = arith.constant 0 : index
    %654 = vector.load %arg19[%653, %c0_357, %c0_358] : memref<8x8x32xf32, #tpu.memory_space<vmem>>, vector<1x8x32xf32>
    %655 = vector.shape_cast %654 : vector<1x8x32xf32> to vector<8x32xf32>
    %656 = vector.shape_cast %652 : vector<8x32xf32> to vector<1x8x32xf32>
    tpu.vector_store %arg19[%653, %c0_357, %c0_358], %656 {strides = array<i32>} : memref<8x8x32xf32, #tpu.memory_space<vmem>>, vector<1x8x32xf32>,
    %657 = arith.index_cast %c0_i32_351 : i32 to index
    %c0_359 = arith.constant 0 : index
    %c0_360 = arith.constant 0 : index
    %658 = vector.load %arg22[%657, %c0_359, %c0_360] : memref<8x8x32xf32, #tpu.memory_space<vmem>>, vector<1x8x32xf32>
    %659 = vector.shape_cast %658 : vector<1x8x32xf32> to vector<8x32xf32>
    %660 = arith.index_cast %645 : i32 to index
    %c0_361 = arith.constant 0 : index
    %c0_362 = arith.constant 0 : index
    %661 = vector.load %arg22[%660, %c0_361, %c0_362] : memref<8x8x32xf32, #tpu.memory_space<vmem>>, vector<1x8x32xf32>
    %662 = vector.shape_cast %661 : vector<1x8x32xf32> to vector<8x32xf32>
    %663 = arith.select %2, %659, %662 : vector<8x32xi1>, vector<8x32xf32>
    %664 = arith.index_cast %c0_i32_351 : i32 to index
    %c0_363 = arith.constant 0 : index
    %c0_364 = arith.constant 0 : index
    %665 = vector.load %arg20[%664, %c0_363, %c0_364] : memref<8x8x32xf32, #tpu.memory_space<vmem>>, vector<1x8x32xf32>
    %666 = vector.shape_cast %665 : vector<1x8x32xf32> to vector<8x32xf32>
    %667 = vector.shape_cast %663 : vector<8x32xf32> to vector<1x8x32xf32>
    tpu.vector_store %arg20[%664, %c0_363, %c0_364], %667 {strides = array<i32>} : memref<8x8x32xf32, #tpu.memory_space<vmem>>, vector<1x8x32xf32>,
    %c1_i32_365 = arith.constant 1 : i32
    %c7_i32_366 = arith.constant 7 : i32
    %668 = arith.subi %c7_i32_366, %c1_i32_365 : i32
    %669 = arith.index_cast %c1_i32_365 : i32 to index
    %c0_367 = arith.constant 0 : index
    %c0_368 = arith.constant 0 : index
    %670 = vector.load %arg21[%669, %c0_367, %c0_368] : memref<8x8x32xf32, #tpu.memory_space<vmem>>, vector<1x8x32xf32>
    %671 = vector.shape_cast %670 : vector<1x8x32xf32> to vector<8x32xf32>
    %672 = arith.index_cast %668 : i32 to index
    %c0_369 = arith.constant 0 : index
    %c0_370 = arith.constant 0 : index
    %673 = vector.load %arg21[%672, %c0_369, %c0_370] : memref<8x8x32xf32, #tpu.memory_space<vmem>>, vector<1x8x32xf32>
    %674 = vector.shape_cast %673 : vector<1x8x32xf32> to vector<8x32xf32>
    %675 = arith.select %2, %671, %674 : vector<8x32xi1>, vector<8x32xf32>
    %676 = arith.index_cast %c1_i32_365 : i32 to index
    %c0_371 = arith.constant 0 : index
    %c0_372 = arith.constant 0 : index
    %677 = vector.load %arg19[%676, %c0_371, %c0_372] : memref<8x8x32xf32, #tpu.memory_space<vmem>>, vector<1x8x32xf32>
    %678 = vector.shape_cast %677 : vector<1x8x32xf32> to vector<8x32xf32>
    %679 = vector.shape_cast %675 : vector<8x32xf32> to vector<1x8x32xf32>
    tpu.vector_store %arg19[%676, %c0_371, %c0_372], %679 {strides = array<i32>} : memref<8x8x32xf32, #tpu.memory_space<vmem>>, vector<1x8x32xf32>,
    %680 = arith.index_cast %c1_i32_365 : i32 to index
    %c0_373 = arith.constant 0 : index
    %c0_374 = arith.constant 0 : index
    %681 = vector.load %arg22[%680, %c0_373, %c0_374] : memref<8x8x32xf32, #tpu.memory_space<vmem>>, vector<1x8x32xf32>
    %682 = vector.shape_cast %681 : vector<1x8x32xf32> to vector<8x32xf32>
    %683 = arith.index_cast %668 : i32 to index
    %c0_375 = arith.constant 0 : index
    %c0_376 = arith.constant 0 : index
    %684 = vector.load %arg22[%683, %c0_375, %c0_376] : memref<8x8x32xf32, #tpu.memory_space<vmem>>, vector<1x8x32xf32>
    %685 = vector.shape_cast %684 : vector<1x8x32xf32> to vector<8x32xf32>
    %686 = arith.select %2, %682, %685 : vector<8x32xi1>, vector<8x32xf32>
    %687 = arith.index_cast %c1_i32_365 : i32 to index
    %c0_377 = arith.constant 0 : index
    %c0_378 = arith.constant 0 : index
    %688 = vector.load %arg20[%687, %c0_377, %c0_378] : memref<8x8x32xf32, #tpu.memory_space<vmem>>, vector<1x8x32xf32>
    %689 = vector.shape_cast %688 : vector<1x8x32xf32> to vector<8x32xf32>
    %690 = vector.shape_cast %686 : vector<8x32xf32> to vector<1x8x32xf32>
    tpu.vector_store %arg20[%687, %c0_377, %c0_378], %690 {strides = array<i32>} : memref<8x8x32xf32, #tpu.memory_space<vmem>>, vector<1x8x32xf32>,
    %c2_i32_379 = arith.constant 2 : i32
    %c7_i32_380 = arith.constant 7 : i32
    %691 = arith.subi %c7_i32_380, %c2_i32_379 : i32
    %692 = arith.index_cast %c2_i32_379 : i32 to index
    %c0_381 = arith.constant 0 : index
    %c0_382 = arith.constant 0 : index
    %693 = vector.load %arg21[%692, %c0_381, %c0_382] : memref<8x8x32xf32, #tpu.memory_space<vmem>>, vector<1x8x32xf32>
    %694 = vector.shape_cast %693 : vector<1x8x32xf32> to vector<8x32xf32>
    %695 = arith.index_cast %691 : i32 to index
    %c0_383 = arith.constant 0 : index
    %c0_384 = arith.constant 0 : index
    %696 = vector.load %arg21[%695, %c0_383, %c0_384] : memref<8x8x32xf32, #tpu.memory_space<vmem>>, vector<1x8x32xf32>
    %697 = vector.shape_cast %696 : vector<1x8x32xf32> to vector<8x32xf32>
    %698 = arith.select %2, %694, %697 : vector<8x32xi1>, vector<8x32xf32>
    %699 = arith.index_cast %c2_i32_379 : i32 to index
    %c0_385 = arith.constant 0 : index
    %c0_386 = arith.constant 0 : index
    %700 = vector.load %arg19[%699, %c0_385, %c0_386] : memref<8x8x32xf32, #tpu.memory_space<vmem>>, vector<1x8x32xf32>
    %701 = vector.shape_cast %700 : vector<1x8x32xf32> to vector<8x32xf32>
    %702 = vector.shape_cast %698 : vector<8x32xf32> to vector<1x8x32xf32>
    tpu.vector_store %arg19[%699, %c0_385, %c0_386], %702 {strides = array<i32>} : memref<8x8x32xf32, #tpu.memory_space<vmem>>, vector<1x8x32xf32>,
    %703 = arith.index_cast %c2_i32_379 : i32 to index
    %c0_387 = arith.constant 0 : index
    %c0_388 = arith.constant 0 : index
    %704 = vector.load %arg22[%703, %c0_387, %c0_388] : memref<8x8x32xf32, #tpu.memory_space<vmem>>, vector<1x8x32xf32>
    %705 = vector.shape_cast %704 : vector<1x8x32xf32> to vector<8x32xf32>
    %706 = arith.index_cast %691 : i32 to index
    %c0_389 = arith.constant 0 : index
    %c0_390 = arith.constant 0 : index
    %707 = vector.load %arg22[%706, %c0_389, %c0_390] : memref<8x8x32xf32, #tpu.memory_space<vmem>>, vector<1x8x32xf32>
    %708 = vector.shape_cast %707 : vector<1x8x32xf32> to vector<8x32xf32>
    %709 = arith.select %2, %705, %708 : vector<8x32xi1>, vector<8x32xf32>
    %710 = arith.index_cast %c2_i32_379 : i32 to index
    %c0_391 = arith.constant 0 : index
    %c0_392 = arith.constant 0 : index
    %711 = vector.load %arg20[%710, %c0_391, %c0_392] : memref<8x8x32xf32, #tpu.memory_space<vmem>>, vector<1x8x32xf32>
    %712 = vector.shape_cast %711 : vector<1x8x32xf32> to vector<8x32xf32>
    %713 = vector.shape_cast %709 : vector<8x32xf32> to vector<1x8x32xf32>
    tpu.vector_store %arg20[%710, %c0_391, %c0_392], %713 {strides = array<i32>} : memref<8x8x32xf32, #tpu.memory_space<vmem>>, vector<1x8x32xf32>,
    %c3_i32_393 = arith.constant 3 : i32
    %c7_i32_394 = arith.constant 7 : i32
    %714 = arith.subi %c7_i32_394, %c3_i32_393 : i32
    %715 = arith.index_cast %c3_i32_393 : i32 to index
    %c0_395 = arith.constant 0 : index
    %c0_396 = arith.constant 0 : index
    %716 = vector.load %arg21[%715, %c0_395, %c0_396] : memref<8x8x32xf32, #tpu.memory_space<vmem>>, vector<1x8x32xf32>
    %717 = vector.shape_cast %716 : vector<1x8x32xf32> to vector<8x32xf32>
    %718 = arith.index_cast %714 : i32 to index
    %c0_397 = arith.constant 0 : index
    %c0_398 = arith.constant 0 : index
    %719 = vector.load %arg21[%718, %c0_397, %c0_398] : memref<8x8x32xf32, #tpu.memory_space<vmem>>, vector<1x8x32xf32>
    %720 = vector.shape_cast %719 : vector<1x8x32xf32> to vector<8x32xf32>
    %721 = arith.select %2, %717, %720 : vector<8x32xi1>, vector<8x32xf32>
    %722 = arith.index_cast %c3_i32_393 : i32 to index
    %c0_399 = arith.constant 0 : index
    %c0_400 = arith.constant 0 : index
    %723 = vector.load %arg19[%722, %c0_399, %c0_400] : memref<8x8x32xf32, #tpu.memory_space<vmem>>, vector<1x8x32xf32>
    %724 = vector.shape_cast %723 : vector<1x8x32xf32> to vector<8x32xf32>
    %725 = vector.shape_cast %721 : vector<8x32xf32> to vector<1x8x32xf32>
    tpu.vector_store %arg19[%722, %c0_399, %c0_400], %725 {strides = array<i32>} : memref<8x8x32xf32, #tpu.memory_space<vmem>>, vector<1x8x32xf32>,
    %726 = arith.index_cast %c3_i32_393 : i32 to index
    %c0_401 = arith.constant 0 : index
    %c0_402 = arith.constant 0 : index
    %727 = vector.load %arg22[%726, %c0_401, %c0_402] : memref<8x8x32xf32, #tpu.memory_space<vmem>>, vector<1x8x32xf32>
    %728 = vector.shape_cast %727 : vector<1x8x32xf32> to vector<8x32xf32>
    %729 = arith.index_cast %714 : i32 to index
    %c0_403 = arith.constant 0 : index
    %c0_404 = arith.constant 0 : index
    %730 = vector.load %arg22[%729, %c0_403, %c0_404] : memref<8x8x32xf32, #tpu.memory_space<vmem>>, vector<1x8x32xf32>
    %731 = vector.shape_cast %730 : vector<1x8x32xf32> to vector<8x32xf32>
    %732 = arith.select %2, %728, %731 : vector<8x32xi1>, vector<8x32xf32>
    %733 = arith.index_cast %c3_i32_393 : i32 to index
    %c0_405 = arith.constant 0 : index
    %c0_406 = arith.constant 0 : index
    %734 = vector.load %arg20[%733, %c0_405, %c0_406] : memref<8x8x32xf32, #tpu.memory_space<vmem>>, vector<1x8x32xf32>
    %735 = vector.shape_cast %734 : vector<1x8x32xf32> to vector<8x32xf32>
    %736 = vector.shape_cast %732 : vector<8x32xf32> to vector<1x8x32xf32>
    tpu.vector_store %arg20[%733, %c0_405, %c0_406], %736 {strides = array<i32>} : memref<8x8x32xf32, #tpu.memory_space<vmem>>, vector<1x8x32xf32>,
    %c4_i32_407 = arith.constant 4 : i32
    %c7_i32_408 = arith.constant 7 : i32
    %737 = arith.subi %c7_i32_408, %c4_i32_407 : i32
    %738 = arith.index_cast %c4_i32_407 : i32 to index
    %c0_409 = arith.constant 0 : index
    %c0_410 = arith.constant 0 : index
    %739 = vector.load %arg21[%738, %c0_409, %c0_410] : memref<8x8x32xf32, #tpu.memory_space<vmem>>, vector<1x8x32xf32>
    %740 = vector.shape_cast %739 : vector<1x8x32xf32> to vector<8x32xf32>
    %741 = arith.index_cast %737 : i32 to index
    %c0_411 = arith.constant 0 : index
    %c0_412 = arith.constant 0 : index
    %742 = vector.load %arg21[%741, %c0_411, %c0_412] : memref<8x8x32xf32, #tpu.memory_space<vmem>>, vector<1x8x32xf32>
    %743 = vector.shape_cast %742 : vector<1x8x32xf32> to vector<8x32xf32>
    %744 = arith.select %2, %740, %743 : vector<8x32xi1>, vector<8x32xf32>
    %745 = arith.index_cast %c4_i32_407 : i32 to index
    %c0_413 = arith.constant 0 : index
    %c0_414 = arith.constant 0 : index
    %746 = vector.load %arg19[%745, %c0_413, %c0_414] : memref<8x8x32xf32, #tpu.memory_space<vmem>>, vector<1x8x32xf32>
    %747 = vector.shape_cast %746 : vector<1x8x32xf32> to vector<8x32xf32>
    %748 = vector.shape_cast %744 : vector<8x32xf32> to vector<1x8x32xf32>
    tpu.vector_store %arg19[%745, %c0_413, %c0_414], %748 {strides = array<i32>} : memref<8x8x32xf32, #tpu.memory_space<vmem>>, vector<1x8x32xf32>,
    %749 = arith.index_cast %c4_i32_407 : i32 to index
    %c0_415 = arith.constant 0 : index
    %c0_416 = arith.constant 0 : index
    %750 = vector.load %arg22[%749, %c0_415, %c0_416] : memref<8x8x32xf32, #tpu.memory_space<vmem>>, vector<1x8x32xf32>
    %751 = vector.shape_cast %750 : vector<1x8x32xf32> to vector<8x32xf32>
    %752 = arith.index_cast %737 : i32 to index
    %c0_417 = arith.constant 0 : index
    %c0_418 = arith.constant 0 : index
    %753 = vector.load %arg22[%752, %c0_417, %c0_418] : memref<8x8x32xf32, #tpu.memory_space<vmem>>, vector<1x8x32xf32>
    %754 = vector.shape_cast %753 : vector<1x8x32xf32> to vector<8x32xf32>
    %755 = arith.select %2, %751, %754 : vector<8x32xi1>, vector<8x32xf32>
    %756 = arith.index_cast %c4_i32_407 : i32 to index
    %c0_419 = arith.constant 0 : index
    %c0_420 = arith.constant 0 : index
    %757 = vector.load %arg20[%756, %c0_419, %c0_420] : memref<8x8x32xf32, #tpu.memory_space<vmem>>, vector<1x8x32xf32>
    %758 = vector.shape_cast %757 : vector<1x8x32xf32> to vector<8x32xf32>
    %759 = vector.shape_cast %755 : vector<8x32xf32> to vector<1x8x32xf32>
    tpu.vector_store %arg20[%756, %c0_419, %c0_420], %759 {strides = array<i32>} : memref<8x8x32xf32, #tpu.memory_space<vmem>>, vector<1x8x32xf32>,
    %c5_i32_421 = arith.constant 5 : i32
    %c7_i32_422 = arith.constant 7 : i32
    %760 = arith.subi %c7_i32_422, %c5_i32_421 : i32
    %761 = arith.index_cast %c5_i32_421 : i32 to index
    %c0_423 = arith.constant 0 : index
    %c0_424 = arith.constant 0 : index
    %762 = vector.load %arg21[%761, %c0_423, %c0_424] : memref<8x8x32xf32, #tpu.memory_space<vmem>>, vector<1x8x32xf32>
    %763 = vector.shape_cast %762 : vector<1x8x32xf32> to vector<8x32xf32>
    %764 = arith.index_cast %760 : i32 to index
    %c0_425 = arith.constant 0 : index
    %c0_426 = arith.constant 0 : index
    %765 = vector.load %arg21[%764, %c0_425, %c0_426] : memref<8x8x32xf32, #tpu.memory_space<vmem>>, vector<1x8x32xf32>
    %766 = vector.shape_cast %765 : vector<1x8x32xf32> to vector<8x32xf32>
    %767 = arith.select %2, %763, %766 : vector<8x32xi1>, vector<8x32xf32>
    %768 = arith.index_cast %c5_i32_421 : i32 to index
    %c0_427 = arith.constant 0 : index
    %c0_428 = arith.constant 0 : index
    %769 = vector.load %arg19[%768, %c0_427, %c0_428] : memref<8x8x32xf32, #tpu.memory_space<vmem>>, vector<1x8x32xf32>
    %770 = vector.shape_cast %769 : vector<1x8x32xf32> to vector<8x32xf32>
    %771 = vector.shape_cast %767 : vector<8x32xf32> to vector<1x8x32xf32>
    tpu.vector_store %arg19[%768, %c0_427, %c0_428], %771 {strides = array<i32>} : memref<8x8x32xf32, #tpu.memory_space<vmem>>, vector<1x8x32xf32>,
    %772 = arith.index_cast %c5_i32_421 : i32 to index
    %c0_429 = arith.constant 0 : index
    %c0_430 = arith.constant 0 : index
    %773 = vector.load %arg22[%772, %c0_429, %c0_430] : memref<8x8x32xf32, #tpu.memory_space<vmem>>, vector<1x8x32xf32>
    %774 = vector.shape_cast %773 : vector<1x8x32xf32> to vector<8x32xf32>
    %775 = arith.index_cast %760 : i32 to index
    %c0_431 = arith.constant 0 : index
    %c0_432 = arith.constant 0 : index
    %776 = vector.load %arg22[%775, %c0_431, %c0_432] : memref<8x8x32xf32, #tpu.memory_space<vmem>>, vector<1x8x32xf32>
    %777 = vector.shape_cast %776 : vector<1x8x32xf32> to vector<8x32xf32>
    %778 = arith.select %2, %774, %777 : vector<8x32xi1>, vector<8x32xf32>
    %779 = arith.index_cast %c5_i32_421 : i32 to index
    %c0_433 = arith.constant 0 : index
    %c0_434 = arith.constant 0 : index
    %780 = vector.load %arg20[%779, %c0_433, %c0_434] : memref<8x8x32xf32, #tpu.memory_space<vmem>>, vector<1x8x32xf32>
    %781 = vector.shape_cast %780 : vector<1x8x32xf32> to vector<8x32xf32>
    %782 = vector.shape_cast %778 : vector<8x32xf32> to vector<1x8x32xf32>
    tpu.vector_store %arg20[%779, %c0_433, %c0_434], %782 {strides = array<i32>} : memref<8x8x32xf32, #tpu.memory_space<vmem>>, vector<1x8x32xf32>,
    %c6_i32_435 = arith.constant 6 : i32
    %c7_i32_436 = arith.constant 7 : i32
    %783 = arith.subi %c7_i32_436, %c6_i32_435 : i32
    %784 = arith.index_cast %c6_i32_435 : i32 to index
    %c0_437 = arith.constant 0 : index
    %c0_438 = arith.constant 0 : index
    %785 = vector.load %arg21[%784, %c0_437, %c0_438] : memref<8x8x32xf32, #tpu.memory_space<vmem>>, vector<1x8x32xf32>
    %786 = vector.shape_cast %785 : vector<1x8x32xf32> to vector<8x32xf32>
    %787 = arith.index_cast %783 : i32 to index
    %c0_439 = arith.constant 0 : index
    %c0_440 = arith.constant 0 : index
    %788 = vector.load %arg21[%787, %c0_439, %c0_440] : memref<8x8x32xf32, #tpu.memory_space<vmem>>, vector<1x8x32xf32>
    %789 = vector.shape_cast %788 : vector<1x8x32xf32> to vector<8x32xf32>
    %790 = arith.select %2, %786, %789 : vector<8x32xi1>, vector<8x32xf32>
    %791 = arith.index_cast %c6_i32_435 : i32 to index
    %c0_441 = arith.constant 0 : index
    %c0_442 = arith.constant 0 : index
    %792 = vector.load %arg19[%791, %c0_441, %c0_442] : memref<8x8x32xf32, #tpu.memory_space<vmem>>, vector<1x8x32xf32>
    %793 = vector.shape_cast %792 : vector<1x8x32xf32> to vector<8x32xf32>
    %794 = vector.shape_cast %790 : vector<8x32xf32> to vector<1x8x32xf32>
    tpu.vector_store %arg19[%791, %c0_441, %c0_442], %794 {strides = array<i32>} : memref<8x8x32xf32, #tpu.memory_space<vmem>>, vector<1x8x32xf32>,
    %795 = arith.index_cast %c6_i32_435 : i32 to index
    %c0_443 = arith.constant 0 : index
    %c0_444 = arith.constant 0 : index
    %796 = vector.load %arg22[%795, %c0_443, %c0_444] : memref<8x8x32xf32, #tpu.memory_space<vmem>>, vector<1x8x32xf32>
    %797 = vector.shape_cast %796 : vector<1x8x32xf32> to vector<8x32xf32>
    %798 = arith.index_cast %783 : i32 to index
    %c0_445 = arith.constant 0 : index
    %c0_446 = arith.constant 0 : index
    %799 = vector.load %arg22[%798, %c0_445, %c0_446] : memref<8x8x32xf32, #tpu.memory_space<vmem>>, vector<1x8x32xf32>
    %800 = vector.shape_cast %799 : vector<1x8x32xf32> to vector<8x32xf32>
    %801 = arith.select %2, %797, %800 : vector<8x32xi1>, vector<8x32xf32>
    %802 = arith.index_cast %c6_i32_435 : i32 to index
    %c0_447 = arith.constant 0 : index
    %c0_448 = arith.constant 0 : index
    %803 = vector.load %arg20[%802, %c0_447, %c0_448] : memref<8x8x32xf32, #tpu.memory_space<vmem>>, vector<1x8x32xf32>
    %804 = vector.shape_cast %803 : vector<1x8x32xf32> to vector<8x32xf32>
    %805 = vector.shape_cast %801 : vector<8x32xf32> to vector<1x8x32xf32>
    tpu.vector_store %arg20[%802, %c0_447, %c0_448], %805 {strides = array<i32>} : memref<8x8x32xf32, #tpu.memory_space<vmem>>, vector<1x8x32xf32>,
    %c7_i32_449 = arith.constant 7 : i32
    %c7_i32_450 = arith.constant 7 : i32
    %806 = arith.subi %c7_i32_450, %c7_i32_449 : i32
    %807 = arith.index_cast %c7_i32_449 : i32 to index
    %c0_451 = arith.constant 0 : index
    %c0_452 = arith.constant 0 : index
    %808 = vector.load %arg21[%807, %c0_451, %c0_452] : memref<8x8x32xf32, #tpu.memory_space<vmem>>, vector<1x8x32xf32>
    %809 = vector.shape_cast %808 : vector<1x8x32xf32> to vector<8x32xf32>
    %810 = arith.index_cast %806 : i32 to index
    %c0_453 = arith.constant 0 : index
    %c0_454 = arith.constant 0 : index
    %811 = vector.load %arg21[%810, %c0_453, %c0_454] : memref<8x8x32xf32, #tpu.memory_space<vmem>>, vector<1x8x32xf32>
    %812 = vector.shape_cast %811 : vector<1x8x32xf32> to vector<8x32xf32>
    %813 = arith.select %2, %809, %812 : vector<8x32xi1>, vector<8x32xf32>
    %814 = arith.index_cast %c7_i32_449 : i32 to index
    %c0_455 = arith.constant 0 : index
    %c0_456 = arith.constant 0 : index
    %815 = vector.load %arg19[%814, %c0_455, %c0_456] : memref<8x8x32xf32, #tpu.memory_space<vmem>>, vector<1x8x32xf32>
    %816 = vector.shape_cast %815 : vector<1x8x32xf32> to vector<8x32xf32>
    %817 = vector.shape_cast %813 : vector<8x32xf32> to vector<1x8x32xf32>
    tpu.vector_store %arg19[%814, %c0_455, %c0_456], %817 {strides = array<i32>} : memref<8x8x32xf32, #tpu.memory_space<vmem>>, vector<1x8x32xf32>,
    %818 = arith.index_cast %c7_i32_449 : i32 to index
    %c0_457 = arith.constant 0 : index
    %c0_458 = arith.constant 0 : index
    %819 = vector.load %arg22[%818, %c0_457, %c0_458] : memref<8x8x32xf32, #tpu.memory_space<vmem>>, vector<1x8x32xf32>
    %820 = vector.shape_cast %819 : vector<1x8x32xf32> to vector<8x32xf32>
    %821 = arith.index_cast %806 : i32 to index
    %c0_459 = arith.constant 0 : index
    %c0_460 = arith.constant 0 : index
    %822 = vector.load %arg22[%821, %c0_459, %c0_460] : memref<8x8x32xf32, #tpu.memory_space<vmem>>, vector<1x8x32xf32>
    %823 = vector.shape_cast %822 : vector<1x8x32xf32> to vector<8x32xf32>
    %824 = arith.select %2, %820, %823 : vector<8x32xi1>, vector<8x32xf32>
    %825 = arith.index_cast %c7_i32_449 : i32 to index
    %c0_461 = arith.constant 0 : index
    %c0_462 = arith.constant 0 : index
    %826 = vector.load %arg20[%825, %c0_461, %c0_462] : memref<8x8x32xf32, #tpu.memory_space<vmem>>, vector<1x8x32xf32>
    %827 = vector.shape_cast %826 : vector<1x8x32xf32> to vector<8x32xf32>
    %828 = vector.shape_cast %824 : vector<8x32xf32> to vector<1x8x32xf32>
    tpu.vector_store %arg20[%825, %c0_461, %c0_462], %828 {strides = array<i32>} : memref<8x8x32xf32, #tpu.memory_space<vmem>>, vector<1x8x32xf32>,
    %c8_i32_463 = arith.constant 8 : i32
    %c0_464 = arith.constant 0 : index
    %c0_465 = arith.constant 0 : index
    %829 = vector.load %arg10[%c0_464, %c0_465] : memref<1x32xf32, #tpu.memory_space<vmem>>, vector<1x32xf32>
    %830 = vector.shape_cast %829 : vector<1x32xf32> to vector<1x32xf32>
    %831 = vector.broadcast %830 : vector<1x32xf32> to vector<8x32xf32>
    %c0_466 = arith.constant 0 : index
    %c0_467 = arith.constant 0 : index
    %832 = vector.load %arg11[%c0_466, %c0_467] : memref<1x32xf32, #tpu.memory_space<vmem>>, vector<1x32xf32>
    %833 = vector.shape_cast %832 : vector<1x32xf32> to vector<1x32xf32>
    %834 = vector.broadcast %833 : vector<1x32xf32> to vector<8x32xf32>
    %cst_468 = arith.constant 0.000000e+00 : f32
    %835 = vector.broadcast %cst_468 : f32 to vector<8x32xf32>
    %c0_i32_469 = arith.constant 0 : i32
    %836 = arith.index_cast %c0_i32_469 : i32 to index
    %c0_470 = arith.constant 0 : index
    %c0_471 = arith.constant 0 : index
    %837 = vector.load %arg19[%836, %c0_470, %c0_471] : memref<8x8x32xf32, #tpu.memory_space<vmem>>, vector<1x8x32xf32>
    %838 = vector.shape_cast %837 : vector<1x8x32xf32> to vector<8x32xf32>
    %839 = arith.index_cast %c0_i32_469 : i32 to index
    %c0_472 = arith.constant 0 : index
    %c0_473 = arith.constant 0 : index
    %840 = vector.load %arg20[%839, %c0_472, %c0_473] : memref<8x8x32xf32, #tpu.memory_space<vmem>>, vector<1x8x32xf32>
    %841 = vector.shape_cast %840 : vector<1x8x32xf32> to vector<8x32xf32>
    %842 = arith.mulf %831, %835 : vector<8x32xf32>
    %843 = arith.mulf %834, %835 : vector<8x32xf32>
    %844 = arith.subf %842, %843 : vector<8x32xf32>
    %845 = arith.addf %844, %838 : vector<8x32xf32>
    %846 = arith.mulf %831, %835 : vector<8x32xf32>
    %847 = arith.mulf %834, %835 : vector<8x32xf32>
    %848 = arith.addf %846, %847 : vector<8x32xf32>
    %849 = arith.addf %848, %841 : vector<8x32xf32>
    %850 = arith.index_cast %c0_i32_469 : i32 to index
    %c0_474 = arith.constant 0 : index
    %c0_475 = arith.constant 0 : index
    %851 = vector.load %arg21[%850, %c0_474, %c0_475] : memref<8x8x32xf32, #tpu.memory_space<vmem>>, vector<1x8x32xf32>
    %852 = vector.shape_cast %851 : vector<1x8x32xf32> to vector<8x32xf32>
    %853 = vector.shape_cast %845 : vector<8x32xf32> to vector<1x8x32xf32>
    tpu.vector_store %arg21[%850, %c0_474, %c0_475], %853 {strides = array<i32>} : memref<8x8x32xf32, #tpu.memory_space<vmem>>, vector<1x8x32xf32>,
    %854 = arith.index_cast %c0_i32_469 : i32 to index
    %c0_476 = arith.constant 0 : index
    %c0_477 = arith.constant 0 : index
    %855 = vector.load %arg22[%854, %c0_476, %c0_477] : memref<8x8x32xf32, #tpu.memory_space<vmem>>, vector<1x8x32xf32>
    %856 = vector.shape_cast %855 : vector<1x8x32xf32> to vector<8x32xf32>
    %857 = vector.shape_cast %849 : vector<8x32xf32> to vector<1x8x32xf32>
    tpu.vector_store %arg22[%854, %c0_476, %c0_477], %857 {strides = array<i32>} : memref<8x8x32xf32, #tpu.memory_space<vmem>>, vector<1x8x32xf32>,
    %c1_i32_478 = arith.constant 1 : i32
    %858 = arith.index_cast %c1_i32_478 : i32 to index
    %c0_479 = arith.constant 0 : index
    %c0_480 = arith.constant 0 : index
    %859 = vector.load %arg19[%858, %c0_479, %c0_480] : memref<8x8x32xf32, #tpu.memory_space<vmem>>, vector<1x8x32xf32>
    %860 = vector.shape_cast %859 : vector<1x8x32xf32> to vector<8x32xf32>
    %861 = arith.index_cast %c1_i32_478 : i32 to index
    %c0_481 = arith.constant 0 : index
    %c0_482 = arith.constant 0 : index
    %862 = vector.load %arg20[%861, %c0_481, %c0_482] : memref<8x8x32xf32, #tpu.memory_space<vmem>>, vector<1x8x32xf32>
    %863 = vector.shape_cast %862 : vector<1x8x32xf32> to vector<8x32xf32>
    %864 = arith.mulf %831, %845 : vector<8x32xf32>
    %865 = arith.mulf %834, %849 : vector<8x32xf32>
    %866 = arith.subf %864, %865 : vector<8x32xf32>
    %867 = arith.addf %866, %860 : vector<8x32xf32>
    %868 = arith.mulf %831, %849 : vector<8x32xf32>
    %869 = arith.mulf %834, %845 : vector<8x32xf32>
    %870 = arith.addf %868, %869 : vector<8x32xf32>
    %871 = arith.addf %870, %863 : vector<8x32xf32>
    %872 = arith.index_cast %c1_i32_478 : i32 to index
    %c0_483 = arith.constant 0 : index
    %c0_484 = arith.constant 0 : index
    %873 = vector.load %arg21[%872, %c0_483, %c0_484] : memref<8x8x32xf32, #tpu.memory_space<vmem>>, vector<1x8x32xf32>
    %874 = vector.shape_cast %873 : vector<1x8x32xf32> to vector<8x32xf32>
    %875 = vector.shape_cast %867 : vector<8x32xf32> to vector<1x8x32xf32>
    tpu.vector_store %arg21[%872, %c0_483, %c0_484], %875 {strides = array<i32>} : memref<8x8x32xf32, #tpu.memory_space<vmem>>, vector<1x8x32xf32>,
    %876 = arith.index_cast %c1_i32_478 : i32 to index
    %c0_485 = arith.constant 0 : index
    %c0_486 = arith.constant 0 : index
    %877 = vector.load %arg22[%876, %c0_485, %c0_486] : memref<8x8x32xf32, #tpu.memory_space<vmem>>, vector<1x8x32xf32>
    %878 = vector.shape_cast %877 : vector<1x8x32xf32> to vector<8x32xf32>
    %879 = vector.shape_cast %871 : vector<8x32xf32> to vector<1x8x32xf32>
    tpu.vector_store %arg22[%876, %c0_485, %c0_486], %879 {strides = array<i32>} : memref<8x8x32xf32, #tpu.memory_space<vmem>>, vector<1x8x32xf32>,
    %c2_i32_487 = arith.constant 2 : i32
    %880 = arith.index_cast %c2_i32_487 : i32 to index
    %c0_488 = arith.constant 0 : index
    %c0_489 = arith.constant 0 : index
    %881 = vector.load %arg19[%880, %c0_488, %c0_489] : memref<8x8x32xf32, #tpu.memory_space<vmem>>, vector<1x8x32xf32>
    %882 = vector.shape_cast %881 : vector<1x8x32xf32> to vector<8x32xf32>
    %883 = arith.index_cast %c2_i32_487 : i32 to index
    %c0_490 = arith.constant 0 : index
    %c0_491 = arith.constant 0 : index
    %884 = vector.load %arg20[%883, %c0_490, %c0_491] : memref<8x8x32xf32, #tpu.memory_space<vmem>>, vector<1x8x32xf32>
    %885 = vector.shape_cast %884 : vector<1x8x32xf32> to vector<8x32xf32>
    %886 = arith.mulf %831, %867 : vector<8x32xf32>
    %887 = arith.mulf %834, %871 : vector<8x32xf32>
    %888 = arith.subf %886, %887 : vector<8x32xf32>
    %889 = arith.addf %888, %882 : vector<8x32xf32>
    %890 = arith.mulf %831, %871 : vector<8x32xf32>
    %891 = arith.mulf %834, %867 : vector<8x32xf32>
    %892 = arith.addf %890, %891 : vector<8x32xf32>
    %893 = arith.addf %892, %885 : vector<8x32xf32>
    %894 = arith.index_cast %c2_i32_487 : i32 to index
    %c0_492 = arith.constant 0 : index
    %c0_493 = arith.constant 0 : index
    %895 = vector.load %arg21[%894, %c0_492, %c0_493] : memref<8x8x32xf32, #tpu.memory_space<vmem>>, vector<1x8x32xf32>
    %896 = vector.shape_cast %895 : vector<1x8x32xf32> to vector<8x32xf32>
    %897 = vector.shape_cast %889 : vector<8x32xf32> to vector<1x8x32xf32>
    tpu.vector_store %arg21[%894, %c0_492, %c0_493], %897 {strides = array<i32>} : memref<8x8x32xf32, #tpu.memory_space<vmem>>, vector<1x8x32xf32>,
    %898 = arith.index_cast %c2_i32_487 : i32 to index
    %c0_494 = arith.constant 0 : index
    %c0_495 = arith.constant 0 : index
    %899 = vector.load %arg22[%898, %c0_494, %c0_495] : memref<8x8x32xf32, #tpu.memory_space<vmem>>, vector<1x8x32xf32>
    %900 = vector.shape_cast %899 : vector<1x8x32xf32> to vector<8x32xf32>
    %901 = vector.shape_cast %893 : vector<8x32xf32> to vector<1x8x32xf32>
    tpu.vector_store %arg22[%898, %c0_494, %c0_495], %901 {strides = array<i32>} : memref<8x8x32xf32, #tpu.memory_space<vmem>>, vector<1x8x32xf32>,
    %c3_i32_496 = arith.constant 3 : i32
    %902 = arith.index_cast %c3_i32_496 : i32 to index
    %c0_497 = arith.constant 0 : index
    %c0_498 = arith.constant 0 : index
    %903 = vector.load %arg19[%902, %c0_497, %c0_498] : memref<8x8x32xf32, #tpu.memory_space<vmem>>, vector<1x8x32xf32>
    %904 = vector.shape_cast %903 : vector<1x8x32xf32> to vector<8x32xf32>
    %905 = arith.index_cast %c3_i32_496 : i32 to index
    %c0_499 = arith.constant 0 : index
    %c0_500 = arith.constant 0 : index
    %906 = vector.load %arg20[%905, %c0_499, %c0_500] : memref<8x8x32xf32, #tpu.memory_space<vmem>>, vector<1x8x32xf32>
    %907 = vector.shape_cast %906 : vector<1x8x32xf32> to vector<8x32xf32>
    %908 = arith.mulf %831, %889 : vector<8x32xf32>
    %909 = arith.mulf %834, %893 : vector<8x32xf32>
    %910 = arith.subf %908, %909 : vector<8x32xf32>
    %911 = arith.addf %910, %904 : vector<8x32xf32>
    %912 = arith.mulf %831, %893 : vector<8x32xf32>
    %913 = arith.mulf %834, %889 : vector<8x32xf32>
    %914 = arith.addf %912, %913 : vector<8x32xf32>
    %915 = arith.addf %914, %907 : vector<8x32xf32>
    %916 = arith.index_cast %c3_i32_496 : i32 to index
    %c0_501 = arith.constant 0 : index
    %c0_502 = arith.constant 0 : index
    %917 = vector.load %arg21[%916, %c0_501, %c0_502] : memref<8x8x32xf32, #tpu.memory_space<vmem>>, vector<1x8x32xf32>
    %918 = vector.shape_cast %917 : vector<1x8x32xf32> to vector<8x32xf32>
    %919 = vector.shape_cast %911 : vector<8x32xf32> to vector<1x8x32xf32>
    tpu.vector_store %arg21[%916, %c0_501, %c0_502], %919 {strides = array<i32>} : memref<8x8x32xf32, #tpu.memory_space<vmem>>, vector<1x8x32xf32>,
    %920 = arith.index_cast %c3_i32_496 : i32 to index
    %c0_503 = arith.constant 0 : index
    %c0_504 = arith.constant 0 : index
    %921 = vector.load %arg22[%920, %c0_503, %c0_504] : memref<8x8x32xf32, #tpu.memory_space<vmem>>, vector<1x8x32xf32>
    %922 = vector.shape_cast %921 : vector<1x8x32xf32> to vector<8x32xf32>
    %923 = vector.shape_cast %915 : vector<8x32xf32> to vector<1x8x32xf32>
    tpu.vector_store %arg22[%920, %c0_503, %c0_504], %923 {strides = array<i32>} : memref<8x8x32xf32, #tpu.memory_space<vmem>>, vector<1x8x32xf32>,
    %c4_i32_505 = arith.constant 4 : i32
    %924 = arith.index_cast %c4_i32_505 : i32 to index
    %c0_506 = arith.constant 0 : index
    %c0_507 = arith.constant 0 : index
    %925 = vector.load %arg19[%924, %c0_506, %c0_507] : memref<8x8x32xf32, #tpu.memory_space<vmem>>, vector<1x8x32xf32>
    %926 = vector.shape_cast %925 : vector<1x8x32xf32> to vector<8x32xf32>
    %927 = arith.index_cast %c4_i32_505 : i32 to index
    %c0_508 = arith.constant 0 : index
    %c0_509 = arith.constant 0 : index
    %928 = vector.load %arg20[%927, %c0_508, %c0_509] : memref<8x8x32xf32, #tpu.memory_space<vmem>>, vector<1x8x32xf32>
    %929 = vector.shape_cast %928 : vector<1x8x32xf32> to vector<8x32xf32>
    %930 = arith.mulf %831, %911 : vector<8x32xf32>
    %931 = arith.mulf %834, %915 : vector<8x32xf32>
    %932 = arith.subf %930, %931 : vector<8x32xf32>
    %933 = arith.addf %932, %926 : vector<8x32xf32>
    %934 = arith.mulf %831, %915 : vector<8x32xf32>
    %935 = arith.mulf %834, %911 : vector<8x32xf32>
    %936 = arith.addf %934, %935 : vector<8x32xf32>
    %937 = arith.addf %936, %929 : vector<8x32xf32>
    %938 = arith.index_cast %c4_i32_505 : i32 to index
    %c0_510 = arith.constant 0 : index
    %c0_511 = arith.constant 0 : index
    %939 = vector.load %arg21[%938, %c0_510, %c0_511] : memref<8x8x32xf32, #tpu.memory_space<vmem>>, vector<1x8x32xf32>
    %940 = vector.shape_cast %939 : vector<1x8x32xf32> to vector<8x32xf32>
    %941 = vector.shape_cast %933 : vector<8x32xf32> to vector<1x8x32xf32>
    tpu.vector_store %arg21[%938, %c0_510, %c0_511], %941 {strides = array<i32>} : memref<8x8x32xf32, #tpu.memory_space<vmem>>, vector<1x8x32xf32>,
    %942 = arith.index_cast %c4_i32_505 : i32 to index
    %c0_512 = arith.constant 0 : index
    %c0_513 = arith.constant 0 : index
    %943 = vector.load %arg22[%942, %c0_512, %c0_513] : memref<8x8x32xf32, #tpu.memory_space<vmem>>, vector<1x8x32xf32>
    %944 = vector.shape_cast %943 : vector<1x8x32xf32> to vector<8x32xf32>
    %945 = vector.shape_cast %937 : vector<8x32xf32> to vector<1x8x32xf32>
    tpu.vector_store %arg22[%942, %c0_512, %c0_513], %945 {strides = array<i32>} : memref<8x8x32xf32, #tpu.memory_space<vmem>>, vector<1x8x32xf32>,
    %c5_i32_514 = arith.constant 5 : i32
    %946 = arith.index_cast %c5_i32_514 : i32 to index
    %c0_515 = arith.constant 0 : index
    %c0_516 = arith.constant 0 : index
    %947 = vector.load %arg19[%946, %c0_515, %c0_516] : memref<8x8x32xf32, #tpu.memory_space<vmem>>, vector<1x8x32xf32>
    %948 = vector.shape_cast %947 : vector<1x8x32xf32> to vector<8x32xf32>
    %949 = arith.index_cast %c5_i32_514 : i32 to index
    %c0_517 = arith.constant 0 : index
    %c0_518 = arith.constant 0 : index
    %950 = vector.load %arg20[%949, %c0_517, %c0_518] : memref<8x8x32xf32, #tpu.memory_space<vmem>>, vector<1x8x32xf32>
    %951 = vector.shape_cast %950 : vector<1x8x32xf32> to vector<8x32xf32>
    %952 = arith.mulf %831, %933 : vector<8x32xf32>
    %953 = arith.mulf %834, %937 : vector<8x32xf32>
    %954 = arith.subf %952, %953 : vector<8x32xf32>
    %955 = arith.addf %954, %948 : vector<8x32xf32>
    %956 = arith.mulf %831, %937 : vector<8x32xf32>
    %957 = arith.mulf %834, %933 : vector<8x32xf32>
    %958 = arith.addf %956, %957 : vector<8x32xf32>
    %959 = arith.addf %958, %951 : vector<8x32xf32>
    %960 = arith.index_cast %c5_i32_514 : i32 to index
    %c0_519 = arith.constant 0 : index
    %c0_520 = arith.constant 0 : index
    %961 = vector.load %arg21[%960, %c0_519, %c0_520] : memref<8x8x32xf32, #tpu.memory_space<vmem>>, vector<1x8x32xf32>
    %962 = vector.shape_cast %961 : vector<1x8x32xf32> to vector<8x32xf32>
    %963 = vector.shape_cast %955 : vector<8x32xf32> to vector<1x8x32xf32>
    tpu.vector_store %arg21[%960, %c0_519, %c0_520], %963 {strides = array<i32>} : memref<8x8x32xf32, #tpu.memory_space<vmem>>, vector<1x8x32xf32>,
    %964 = arith.index_cast %c5_i32_514 : i32 to index
    %c0_521 = arith.constant 0 : index
    %c0_522 = arith.constant 0 : index
    %965 = vector.load %arg22[%964, %c0_521, %c0_522] : memref<8x8x32xf32, #tpu.memory_space<vmem>>, vector<1x8x32xf32>
    %966 = vector.shape_cast %965 : vector<1x8x32xf32> to vector<8x32xf32>
    %967 = vector.shape_cast %959 : vector<8x32xf32> to vector<1x8x32xf32>
    tpu.vector_store %arg22[%964, %c0_521, %c0_522], %967 {strides = array<i32>} : memref<8x8x32xf32, #tpu.memory_space<vmem>>, vector<1x8x32xf32>,
    %c6_i32_523 = arith.constant 6 : i32
    %968 = arith.index_cast %c6_i32_523 : i32 to index
    %c0_524 = arith.constant 0 : index
    %c0_525 = arith.constant 0 : index
    %969 = vector.load %arg19[%968, %c0_524, %c0_525] : memref<8x8x32xf32, #tpu.memory_space<vmem>>, vector<1x8x32xf32>
    %970 = vector.shape_cast %969 : vector<1x8x32xf32> to vector<8x32xf32>
    %971 = arith.index_cast %c6_i32_523 : i32 to index
    %c0_526 = arith.constant 0 : index
    %c0_527 = arith.constant 0 : index
    %972 = vector.load %arg20[%971, %c0_526, %c0_527] : memref<8x8x32xf32, #tpu.memory_space<vmem>>, vector<1x8x32xf32>
    %973 = vector.shape_cast %972 : vector<1x8x32xf32> to vector<8x32xf32>
    %974 = arith.mulf %831, %955 : vector<8x32xf32>
    %975 = arith.mulf %834, %959 : vector<8x32xf32>
    %976 = arith.subf %974, %975 : vector<8x32xf32>
    %977 = arith.addf %976, %970 : vector<8x32xf32>
    %978 = arith.mulf %831, %959 : vector<8x32xf32>
    %979 = arith.mulf %834, %955 : vector<8x32xf32>
    %980 = arith.addf %978, %979 : vector<8x32xf32>
    %981 = arith.addf %980, %973 : vector<8x32xf32>
    %982 = arith.index_cast %c6_i32_523 : i32 to index
    %c0_528 = arith.constant 0 : index
    %c0_529 = arith.constant 0 : index
    %983 = vector.load %arg21[%982, %c0_528, %c0_529] : memref<8x8x32xf32, #tpu.memory_space<vmem>>, vector<1x8x32xf32>
    %984 = vector.shape_cast %983 : vector<1x8x32xf32> to vector<8x32xf32>
    %985 = vector.shape_cast %977 : vector<8x32xf32> to vector<1x8x32xf32>
    tpu.vector_store %arg21[%982, %c0_528, %c0_529], %985 {strides = array<i32>} : memref<8x8x32xf32, #tpu.memory_space<vmem>>, vector<1x8x32xf32>,
    %986 = arith.index_cast %c6_i32_523 : i32 to index
    %c0_530 = arith.constant 0 : index
    %c0_531 = arith.constant 0 : index
    %987 = vector.load %arg22[%986, %c0_530, %c0_531] : memref<8x8x32xf32, #tpu.memory_space<vmem>>, vector<1x8x32xf32>
    %988 = vector.shape_cast %987 : vector<1x8x32xf32> to vector<8x32xf32>
    %989 = vector.shape_cast %981 : vector<8x32xf32> to vector<1x8x32xf32>
    tpu.vector_store %arg22[%986, %c0_530, %c0_531], %989 {strides = array<i32>} : memref<8x8x32xf32, #tpu.memory_space<vmem>>, vector<1x8x32xf32>,
    %c7_i32_532 = arith.constant 7 : i32
    %990 = arith.index_cast %c7_i32_532 : i32 to index
    %c0_533 = arith.constant 0 : index
    %c0_534 = arith.constant 0 : index
    %991 = vector.load %arg19[%990, %c0_533, %c0_534] : memref<8x8x32xf32, #tpu.memory_space<vmem>>, vector<1x8x32xf32>
    %992 = vector.shape_cast %991 : vector<1x8x32xf32> to vector<8x32xf32>
    %993 = arith.index_cast %c7_i32_532 : i32 to index
    %c0_535 = arith.constant 0 : index
    %c0_536 = arith.constant 0 : index
    %994 = vector.load %arg20[%993, %c0_535, %c0_536] : memref<8x8x32xf32, #tpu.memory_space<vmem>>, vector<1x8x32xf32>
    %995 = vector.shape_cast %994 : vector<1x8x32xf32> to vector<8x32xf32>
    %996 = arith.mulf %831, %977 : vector<8x32xf32>
    %997 = arith.mulf %834, %981 : vector<8x32xf32>
    %998 = arith.subf %996, %997 : vector<8x32xf32>
    %999 = arith.addf %998, %992 : vector<8x32xf32>
    %1000 = arith.mulf %831, %981 : vector<8x32xf32>
    %1001 = arith.mulf %834, %977 : vector<8x32xf32>
    %1002 = arith.addf %1000, %1001 : vector<8x32xf32>
    %1003 = arith.addf %1002, %995 : vector<8x32xf32>
    %1004 = arith.index_cast %c7_i32_532 : i32 to index
    %c0_537 = arith.constant 0 : index
    %c0_538 = arith.constant 0 : index
    %1005 = vector.load %arg21[%1004, %c0_537, %c0_538] : memref<8x8x32xf32, #tpu.memory_space<vmem>>, vector<1x8x32xf32>
    %1006 = vector.shape_cast %1005 : vector<1x8x32xf32> to vector<8x32xf32>
    %1007 = vector.shape_cast %999 : vector<8x32xf32> to vector<1x8x32xf32>
    tpu.vector_store %arg21[%1004, %c0_537, %c0_538], %1007 {strides = array<i32>} : memref<8x8x32xf32, #tpu.memory_space<vmem>>, vector<1x8x32xf32>,
    %1008 = arith.index_cast %c7_i32_532 : i32 to index
    %c0_539 = arith.constant 0 : index
    %c0_540 = arith.constant 0 : index
    %1009 = vector.load %arg22[%1008, %c0_539, %c0_540] : memref<8x8x32xf32, #tpu.memory_space<vmem>>, vector<1x8x32xf32>
    %1010 = vector.shape_cast %1009 : vector<1x8x32xf32> to vector<8x32xf32>
    %1011 = vector.shape_cast %1003 : vector<8x32xf32> to vector<1x8x32xf32>
    tpu.vector_store %arg22[%1008, %c0_539, %c0_540], %1011 {strides = array<i32>} : memref<8x8x32xf32, #tpu.memory_space<vmem>>, vector<1x8x32xf32>,
    %c8_i32_541 = arith.constant 8 : i32
    %c0_i32_542 = arith.constant 0 : i32
    %c7_i32_543 = arith.constant 7 : i32
    %1012 = arith.subi %c7_i32_543, %c0_i32_542 : i32
    %1013 = arith.index_cast %c0_i32_542 : i32 to index
    %c0_544 = arith.constant 0 : index
    %c0_545 = arith.constant 0 : index
    %1014 = vector.load %arg21[%1013, %c0_544, %c0_545] : memref<8x8x32xf32, #tpu.memory_space<vmem>>, vector<1x8x32xf32>
    %1015 = vector.shape_cast %1014 : vector<1x8x32xf32> to vector<8x32xf32>
    %1016 = arith.index_cast %1012 : i32 to index
    %c0_546 = arith.constant 0 : index
    %c0_547 = arith.constant 0 : index
    %1017 = vector.load %arg21[%1016, %c0_546, %c0_547] : memref<8x8x32xf32, #tpu.memory_space<vmem>>, vector<1x8x32xf32>
    %1018 = vector.shape_cast %1017 : vector<1x8x32xf32> to vector<8x32xf32>
    %1019 = arith.select %2, %1015, %1018 : vector<8x32xi1>, vector<8x32xf32>
    %1020 = arith.index_cast %c0_i32_542 : i32 to index
    %c0_548 = arith.constant 0 : index
    %c0_549 = arith.constant 0 : index
    %1021 = vector.load %arg19[%1020, %c0_548, %c0_549] : memref<8x8x32xf32, #tpu.memory_space<vmem>>, vector<1x8x32xf32>
    %1022 = vector.shape_cast %1021 : vector<1x8x32xf32> to vector<8x32xf32>
    %1023 = vector.shape_cast %1019 : vector<8x32xf32> to vector<1x8x32xf32>
    tpu.vector_store %arg19[%1020, %c0_548, %c0_549], %1023 {strides = array<i32>} : memref<8x8x32xf32, #tpu.memory_space<vmem>>, vector<1x8x32xf32>,
    %1024 = arith.index_cast %c0_i32_542 : i32 to index
    %c0_550 = arith.constant 0 : index
    %c0_551 = arith.constant 0 : index
    %1025 = vector.load %arg22[%1024, %c0_550, %c0_551] : memref<8x8x32xf32, #tpu.memory_space<vmem>>, vector<1x8x32xf32>
    %1026 = vector.shape_cast %1025 : vector<1x8x32xf32> to vector<8x32xf32>
    %1027 = arith.index_cast %1012 : i32 to index
    %c0_552 = arith.constant 0 : index
    %c0_553 = arith.constant 0 : index
    %1028 = vector.load %arg22[%1027, %c0_552, %c0_553] : memref<8x8x32xf32, #tpu.memory_space<vmem>>, vector<1x8x32xf32>
    %1029 = vector.shape_cast %1028 : vector<1x8x32xf32> to vector<8x32xf32>
    %1030 = arith.select %2, %1026, %1029 : vector<8x32xi1>, vector<8x32xf32>
    %1031 = arith.index_cast %c0_i32_542 : i32 to index
    %c0_554 = arith.constant 0 : index
    %c0_555 = arith.constant 0 : index
    %1032 = vector.load %arg20[%1031, %c0_554, %c0_555] : memref<8x8x32xf32, #tpu.memory_space<vmem>>, vector<1x8x32xf32>
    %1033 = vector.shape_cast %1032 : vector<1x8x32xf32> to vector<8x32xf32>
    %1034 = vector.shape_cast %1030 : vector<8x32xf32> to vector<1x8x32xf32>
    tpu.vector_store %arg20[%1031, %c0_554, %c0_555], %1034 {strides = array<i32>} : memref<8x8x32xf32, #tpu.memory_space<vmem>>, vector<1x8x32xf32>,
    %c1_i32_556 = arith.constant 1 : i32
    %c7_i32_557 = arith.constant 7 : i32
    %1035 = arith.subi %c7_i32_557, %c1_i32_556 : i32
    %1036 = arith.index_cast %c1_i32_556 : i32 to index
    %c0_558 = arith.constant 0 : index
    %c0_559 = arith.constant 0 : index
    %1037 = vector.load %arg21[%1036, %c0_558, %c0_559] : memref<8x8x32xf32, #tpu.memory_space<vmem>>, vector<1x8x32xf32>
    %1038 = vector.shape_cast %1037 : vector<1x8x32xf32> to vector<8x32xf32>
    %1039 = arith.index_cast %1035 : i32 to index
    %c0_560 = arith.constant 0 : index
    %c0_561 = arith.constant 0 : index
    %1040 = vector.load %arg21[%1039, %c0_560, %c0_561] : memref<8x8x32xf32, #tpu.memory_space<vmem>>, vector<1x8x32xf32>
    %1041 = vector.shape_cast %1040 : vector<1x8x32xf32> to vector<8x32xf32>
    %1042 = arith.select %2, %1038, %1041 : vector<8x32xi1>, vector<8x32xf32>
    %1043 = arith.index_cast %c1_i32_556 : i32 to index
    %c0_562 = arith.constant 0 : index
    %c0_563 = arith.constant 0 : index
    %1044 = vector.load %arg19[%1043, %c0_562, %c0_563] : memref<8x8x32xf32, #tpu.memory_space<vmem>>, vector<1x8x32xf32>
    %1045 = vector.shape_cast %1044 : vector<1x8x32xf32> to vector<8x32xf32>
    %1046 = vector.shape_cast %1042 : vector<8x32xf32> to vector<1x8x32xf32>
    tpu.vector_store %arg19[%1043, %c0_562, %c0_563], %1046 {strides = array<i32>} : memref<8x8x32xf32, #tpu.memory_space<vmem>>, vector<1x8x32xf32>,
    %1047 = arith.index_cast %c1_i32_556 : i32 to index
    %c0_564 = arith.constant 0 : index
    %c0_565 = arith.constant 0 : index
    %1048 = vector.load %arg22[%1047, %c0_564, %c0_565] : memref<8x8x32xf32, #tpu.memory_space<vmem>>, vector<1x8x32xf32>
    %1049 = vector.shape_cast %1048 : vector<1x8x32xf32> to vector<8x32xf32>
    %1050 = arith.index_cast %1035 : i32 to index
    %c0_566 = arith.constant 0 : index
    %c0_567 = arith.constant 0 : index
    %1051 = vector.load %arg22[%1050, %c0_566, %c0_567] : memref<8x8x32xf32, #tpu.memory_space<vmem>>, vector<1x8x32xf32>
    %1052 = vector.shape_cast %1051 : vector<1x8x32xf32> to vector<8x32xf32>
    %1053 = arith.select %2, %1049, %1052 : vector<8x32xi1>, vector<8x32xf32>
    %1054 = arith.index_cast %c1_i32_556 : i32 to index
    %c0_568 = arith.constant 0 : index
    %c0_569 = arith.constant 0 : index
    %1055 = vector.load %arg20[%1054, %c0_568, %c0_569] : memref<8x8x32xf32, #tpu.memory_space<vmem>>, vector<1x8x32xf32>
    %1056 = vector.shape_cast %1055 : vector<1x8x32xf32> to vector<8x32xf32>
    %1057 = vector.shape_cast %1053 : vector<8x32xf32> to vector<1x8x32xf32>
    tpu.vector_store %arg20[%1054, %c0_568, %c0_569], %1057 {strides = array<i32>} : memref<8x8x32xf32, #tpu.memory_space<vmem>>, vector<1x8x32xf32>,
    %c2_i32_570 = arith.constant 2 : i32
    %c7_i32_571 = arith.constant 7 : i32
    %1058 = arith.subi %c7_i32_571, %c2_i32_570 : i32
    %1059 = arith.index_cast %c2_i32_570 : i32 to index
    %c0_572 = arith.constant 0 : index
    %c0_573 = arith.constant 0 : index
    %1060 = vector.load %arg21[%1059, %c0_572, %c0_573] : memref<8x8x32xf32, #tpu.memory_space<vmem>>, vector<1x8x32xf32>
    %1061 = vector.shape_cast %1060 : vector<1x8x32xf32> to vector<8x32xf32>
    %1062 = arith.index_cast %1058 : i32 to index
    %c0_574 = arith.constant 0 : index
    %c0_575 = arith.constant 0 : index
    %1063 = vector.load %arg21[%1062, %c0_574, %c0_575] : memref<8x8x32xf32, #tpu.memory_space<vmem>>, vector<1x8x32xf32>
    %1064 = vector.shape_cast %1063 : vector<1x8x32xf32> to vector<8x32xf32>
    %1065 = arith.select %2, %1061, %1064 : vector<8x32xi1>, vector<8x32xf32>
    %1066 = arith.index_cast %c2_i32_570 : i32 to index
    %c0_576 = arith.constant 0 : index
    %c0_577 = arith.constant 0 : index
    %1067 = vector.load %arg19[%1066, %c0_576, %c0_577] : memref<8x8x32xf32, #tpu.memory_space<vmem>>, vector<1x8x32xf32>
    %1068 = vector.shape_cast %1067 : vector<1x8x32xf32> to vector<8x32xf32>
    %1069 = vector.shape_cast %1065 : vector<8x32xf32> to vector<1x8x32xf32>
    tpu.vector_store %arg19[%1066, %c0_576, %c0_577], %1069 {strides = array<i32>} : memref<8x8x32xf32, #tpu.memory_space<vmem>>, vector<1x8x32xf32>,
    %1070 = arith.index_cast %c2_i32_570 : i32 to index
    %c0_578 = arith.constant 0 : index
    %c0_579 = arith.constant 0 : index
    %1071 = vector.load %arg22[%1070, %c0_578, %c0_579] : memref<8x8x32xf32, #tpu.memory_space<vmem>>, vector<1x8x32xf32>
    %1072 = vector.shape_cast %1071 : vector<1x8x32xf32> to vector<8x32xf32>
    %1073 = arith.index_cast %1058 : i32 to index
    %c0_580 = arith.constant 0 : index
    %c0_581 = arith.constant 0 : index
    %1074 = vector.load %arg22[%1073, %c0_580, %c0_581] : memref<8x8x32xf32, #tpu.memory_space<vmem>>, vector<1x8x32xf32>
    %1075 = vector.shape_cast %1074 : vector<1x8x32xf32> to vector<8x32xf32>
    %1076 = arith.select %2, %1072, %1075 : vector<8x32xi1>, vector<8x32xf32>
    %1077 = arith.index_cast %c2_i32_570 : i32 to index
    %c0_582 = arith.constant 0 : index
    %c0_583 = arith.constant 0 : index
    %1078 = vector.load %arg20[%1077, %c0_582, %c0_583] : memref<8x8x32xf32, #tpu.memory_space<vmem>>, vector<1x8x32xf32>
    %1079 = vector.shape_cast %1078 : vector<1x8x32xf32> to vector<8x32xf32>
    %1080 = vector.shape_cast %1076 : vector<8x32xf32> to vector<1x8x32xf32>
    tpu.vector_store %arg20[%1077, %c0_582, %c0_583], %1080 {strides = array<i32>} : memref<8x8x32xf32, #tpu.memory_space<vmem>>, vector<1x8x32xf32>,
    %c3_i32_584 = arith.constant 3 : i32
    %c7_i32_585 = arith.constant 7 : i32
    %1081 = arith.subi %c7_i32_585, %c3_i32_584 : i32
    %1082 = arith.index_cast %c3_i32_584 : i32 to index
    %c0_586 = arith.constant 0 : index
    %c0_587 = arith.constant 0 : index
    %1083 = vector.load %arg21[%1082, %c0_586, %c0_587] : memref<8x8x32xf32, #tpu.memory_space<vmem>>, vector<1x8x32xf32>
    %1084 = vector.shape_cast %1083 : vector<1x8x32xf32> to vector<8x32xf32>
    %1085 = arith.index_cast %1081 : i32 to index
    %c0_588 = arith.constant 0 : index
    %c0_589 = arith.constant 0 : index
    %1086 = vector.load %arg21[%1085, %c0_588, %c0_589] : memref<8x8x32xf32, #tpu.memory_space<vmem>>, vector<1x8x32xf32>
    %1087 = vector.shape_cast %1086 : vector<1x8x32xf32> to vector<8x32xf32>
    %1088 = arith.select %2, %1084, %1087 : vector<8x32xi1>, vector<8x32xf32>
    %1089 = arith.index_cast %c3_i32_584 : i32 to index
    %c0_590 = arith.constant 0 : index
    %c0_591 = arith.constant 0 : index
    %1090 = vector.load %arg19[%1089, %c0_590, %c0_591] : memref<8x8x32xf32, #tpu.memory_space<vmem>>, vector<1x8x32xf32>
    %1091 = vector.shape_cast %1090 : vector<1x8x32xf32> to vector<8x32xf32>
    %1092 = vector.shape_cast %1088 : vector<8x32xf32> to vector<1x8x32xf32>
    tpu.vector_store %arg19[%1089, %c0_590, %c0_591], %1092 {strides = array<i32>} : memref<8x8x32xf32, #tpu.memory_space<vmem>>, vector<1x8x32xf32>,
    %1093 = arith.index_cast %c3_i32_584 : i32 to index
    %c0_592 = arith.constant 0 : index
    %c0_593 = arith.constant 0 : index
    %1094 = vector.load %arg22[%1093, %c0_592, %c0_593] : memref<8x8x32xf32, #tpu.memory_space<vmem>>, vector<1x8x32xf32>
    %1095 = vector.shape_cast %1094 : vector<1x8x32xf32> to vector<8x32xf32>
    %1096 = arith.index_cast %1081 : i32 to index
    %c0_594 = arith.constant 0 : index
    %c0_595 = arith.constant 0 : index
    %1097 = vector.load %arg22[%1096, %c0_594, %c0_595] : memref<8x8x32xf32, #tpu.memory_space<vmem>>, vector<1x8x32xf32>
    %1098 = vector.shape_cast %1097 : vector<1x8x32xf32> to vector<8x32xf32>
    %1099 = arith.select %2, %1095, %1098 : vector<8x32xi1>, vector<8x32xf32>
    %1100 = arith.index_cast %c3_i32_584 : i32 to index
    %c0_596 = arith.constant 0 : index
    %c0_597 = arith.constant 0 : index
    %1101 = vector.load %arg20[%1100, %c0_596, %c0_597] : memref<8x8x32xf32, #tpu.memory_space<vmem>>, vector<1x8x32xf32>
    %1102 = vector.shape_cast %1101 : vector<1x8x32xf32> to vector<8x32xf32>
    %1103 = vector.shape_cast %1099 : vector<8x32xf32> to vector<1x8x32xf32>
    tpu.vector_store %arg20[%1100, %c0_596, %c0_597], %1103 {strides = array<i32>} : memref<8x8x32xf32, #tpu.memory_space<vmem>>, vector<1x8x32xf32>,
    %c4_i32_598 = arith.constant 4 : i32
    %c7_i32_599 = arith.constant 7 : i32
    %1104 = arith.subi %c7_i32_599, %c4_i32_598 : i32
    %1105 = arith.index_cast %c4_i32_598 : i32 to index
    %c0_600 = arith.constant 0 : index
    %c0_601 = arith.constant 0 : index
    %1106 = vector.load %arg21[%1105, %c0_600, %c0_601] : memref<8x8x32xf32, #tpu.memory_space<vmem>>, vector<1x8x32xf32>
    %1107 = vector.shape_cast %1106 : vector<1x8x32xf32> to vector<8x32xf32>
    %1108 = arith.index_cast %1104 : i32 to index
    %c0_602 = arith.constant 0 : index
    %c0_603 = arith.constant 0 : index
    %1109 = vector.load %arg21[%1108, %c0_602, %c0_603] : memref<8x8x32xf32, #tpu.memory_space<vmem>>, vector<1x8x32xf32>
    %1110 = vector.shape_cast %1109 : vector<1x8x32xf32> to vector<8x32xf32>
    %1111 = arith.select %2, %1107, %1110 : vector<8x32xi1>, vector<8x32xf32>
    %1112 = arith.index_cast %c4_i32_598 : i32 to index
    %c0_604 = arith.constant 0 : index
    %c0_605 = arith.constant 0 : index
    %1113 = vector.load %arg19[%1112, %c0_604, %c0_605] : memref<8x8x32xf32, #tpu.memory_space<vmem>>, vector<1x8x32xf32>
    %1114 = vector.shape_cast %1113 : vector<1x8x32xf32> to vector<8x32xf32>
    %1115 = vector.shape_cast %1111 : vector<8x32xf32> to vector<1x8x32xf32>
    tpu.vector_store %arg19[%1112, %c0_604, %c0_605], %1115 {strides = array<i32>} : memref<8x8x32xf32, #tpu.memory_space<vmem>>, vector<1x8x32xf32>,
    %1116 = arith.index_cast %c4_i32_598 : i32 to index
    %c0_606 = arith.constant 0 : index
    %c0_607 = arith.constant 0 : index
    %1117 = vector.load %arg22[%1116, %c0_606, %c0_607] : memref<8x8x32xf32, #tpu.memory_space<vmem>>, vector<1x8x32xf32>
    %1118 = vector.shape_cast %1117 : vector<1x8x32xf32> to vector<8x32xf32>
    %1119 = arith.index_cast %1104 : i32 to index
    %c0_608 = arith.constant 0 : index
    %c0_609 = arith.constant 0 : index
    %1120 = vector.load %arg22[%1119, %c0_608, %c0_609] : memref<8x8x32xf32, #tpu.memory_space<vmem>>, vector<1x8x32xf32>
    %1121 = vector.shape_cast %1120 : vector<1x8x32xf32> to vector<8x32xf32>
    %1122 = arith.select %2, %1118, %1121 : vector<8x32xi1>, vector<8x32xf32>
    %1123 = arith.index_cast %c4_i32_598 : i32 to index
    %c0_610 = arith.constant 0 : index
    %c0_611 = arith.constant 0 : index
    %1124 = vector.load %arg20[%1123, %c0_610, %c0_611] : memref<8x8x32xf32, #tpu.memory_space<vmem>>, vector<1x8x32xf32>
    %1125 = vector.shape_cast %1124 : vector<1x8x32xf32> to vector<8x32xf32>
    %1126 = vector.shape_cast %1122 : vector<8x32xf32> to vector<1x8x32xf32>
    tpu.vector_store %arg20[%1123, %c0_610, %c0_611], %1126 {strides = array<i32>} : memref<8x8x32xf32, #tpu.memory_space<vmem>>, vector<1x8x32xf32>,
    %c5_i32_612 = arith.constant 5 : i32
    %c7_i32_613 = arith.constant 7 : i32
    %1127 = arith.subi %c7_i32_613, %c5_i32_612 : i32
    %1128 = arith.index_cast %c5_i32_612 : i32 to index
    %c0_614 = arith.constant 0 : index
    %c0_615 = arith.constant 0 : index
    %1129 = vector.load %arg21[%1128, %c0_614, %c0_615] : memref<8x8x32xf32, #tpu.memory_space<vmem>>, vector<1x8x32xf32>
    %1130 = vector.shape_cast %1129 : vector<1x8x32xf32> to vector<8x32xf32>
    %1131 = arith.index_cast %1127 : i32 to index
    %c0_616 = arith.constant 0 : index
    %c0_617 = arith.constant 0 : index
    %1132 = vector.load %arg21[%1131, %c0_616, %c0_617] : memref<8x8x32xf32, #tpu.memory_space<vmem>>, vector<1x8x32xf32>
    %1133 = vector.shape_cast %1132 : vector<1x8x32xf32> to vector<8x32xf32>
    %1134 = arith.select %2, %1130, %1133 : vector<8x32xi1>, vector<8x32xf32>
    %1135 = arith.index_cast %c5_i32_612 : i32 to index
    %c0_618 = arith.constant 0 : index
    %c0_619 = arith.constant 0 : index
    %1136 = vector.load %arg19[%1135, %c0_618, %c0_619] : memref<8x8x32xf32, #tpu.memory_space<vmem>>, vector<1x8x32xf32>
    %1137 = vector.shape_cast %1136 : vector<1x8x32xf32> to vector<8x32xf32>
    %1138 = vector.shape_cast %1134 : vector<8x32xf32> to vector<1x8x32xf32>
    tpu.vector_store %arg19[%1135, %c0_618, %c0_619], %1138 {strides = array<i32>} : memref<8x8x32xf32, #tpu.memory_space<vmem>>, vector<1x8x32xf32>,
    %1139 = arith.index_cast %c5_i32_612 : i32 to index
    %c0_620 = arith.constant 0 : index
    %c0_621 = arith.constant 0 : index
    %1140 = vector.load %arg22[%1139, %c0_620, %c0_621] : memref<8x8x32xf32, #tpu.memory_space<vmem>>, vector<1x8x32xf32>
    %1141 = vector.shape_cast %1140 : vector<1x8x32xf32> to vector<8x32xf32>
    %1142 = arith.index_cast %1127 : i32 to index
    %c0_622 = arith.constant 0 : index
    %c0_623 = arith.constant 0 : index
    %1143 = vector.load %arg22[%1142, %c0_622, %c0_623] : memref<8x8x32xf32, #tpu.memory_space<vmem>>, vector<1x8x32xf32>
    %1144 = vector.shape_cast %1143 : vector<1x8x32xf32> to vector<8x32xf32>
    %1145 = arith.select %2, %1141, %1144 : vector<8x32xi1>, vector<8x32xf32>
    %1146 = arith.index_cast %c5_i32_612 : i32 to index
    %c0_624 = arith.constant 0 : index
    %c0_625 = arith.constant 0 : index
    %1147 = vector.load %arg20[%1146, %c0_624, %c0_625] : memref<8x8x32xf32, #tpu.memory_space<vmem>>, vector<1x8x32xf32>
    %1148 = vector.shape_cast %1147 : vector<1x8x32xf32> to vector<8x32xf32>
    %1149 = vector.shape_cast %1145 : vector<8x32xf32> to vector<1x8x32xf32>
    tpu.vector_store %arg20[%1146, %c0_624, %c0_625], %1149 {strides = array<i32>} : memref<8x8x32xf32, #tpu.memory_space<vmem>>, vector<1x8x32xf32>,
    %c6_i32_626 = arith.constant 6 : i32
    %c7_i32_627 = arith.constant 7 : i32
    %1150 = arith.subi %c7_i32_627, %c6_i32_626 : i32
    %1151 = arith.index_cast %c6_i32_626 : i32 to index
    %c0_628 = arith.constant 0 : index
    %c0_629 = arith.constant 0 : index
    %1152 = vector.load %arg21[%1151, %c0_628, %c0_629] : memref<8x8x32xf32, #tpu.memory_space<vmem>>, vector<1x8x32xf32>
    %1153 = vector.shape_cast %1152 : vector<1x8x32xf32> to vector<8x32xf32>
    %1154 = arith.index_cast %1150 : i32 to index
    %c0_630 = arith.constant 0 : index
    %c0_631 = arith.constant 0 : index
    %1155 = vector.load %arg21[%1154, %c0_630, %c0_631] : memref<8x8x32xf32, #tpu.memory_space<vmem>>, vector<1x8x32xf32>
    %1156 = vector.shape_cast %1155 : vector<1x8x32xf32> to vector<8x32xf32>
    %1157 = arith.select %2, %1153, %1156 : vector<8x32xi1>, vector<8x32xf32>
    %1158 = arith.index_cast %c6_i32_626 : i32 to index
    %c0_632 = arith.constant 0 : index
    %c0_633 = arith.constant 0 : index
    %1159 = vector.load %arg19[%1158, %c0_632, %c0_633] : memref<8x8x32xf32, #tpu.memory_space<vmem>>, vector<1x8x32xf32>
    %1160 = vector.shape_cast %1159 : vector<1x8x32xf32> to vector<8x32xf32>
    %1161 = vector.shape_cast %1157 : vector<8x32xf32> to vector<1x8x32xf32>
    tpu.vector_store %arg19[%1158, %c0_632, %c0_633], %1161 {strides = array<i32>} : memref<8x8x32xf32, #tpu.memory_space<vmem>>, vector<1x8x32xf32>,
    %1162 = arith.index_cast %c6_i32_626 : i32 to index
    %c0_634 = arith.constant 0 : index
    %c0_635 = arith.constant 0 : index
    %1163 = vector.load %arg22[%1162, %c0_634, %c0_635] : memref<8x8x32xf32, #tpu.memory_space<vmem>>, vector<1x8x32xf32>
    %1164 = vector.shape_cast %1163 : vector<1x8x32xf32> to vector<8x32xf32>
    %1165 = arith.index_cast %1150 : i32 to index
    %c0_636 = arith.constant 0 : index
    %c0_637 = arith.constant 0 : index
    %1166 = vector.load %arg22[%1165, %c0_636, %c0_637] : memref<8x8x32xf32, #tpu.memory_space<vmem>>, vector<1x8x32xf32>
    %1167 = vector.shape_cast %1166 : vector<1x8x32xf32> to vector<8x32xf32>
    %1168 = arith.select %2, %1164, %1167 : vector<8x32xi1>, vector<8x32xf32>
    %1169 = arith.index_cast %c6_i32_626 : i32 to index
    %c0_638 = arith.constant 0 : index
    %c0_639 = arith.constant 0 : index
    %1170 = vector.load %arg20[%1169, %c0_638, %c0_639] : memref<8x8x32xf32, #tpu.memory_space<vmem>>, vector<1x8x32xf32>
    %1171 = vector.shape_cast %1170 : vector<1x8x32xf32> to vector<8x32xf32>
    %1172 = vector.shape_cast %1168 : vector<8x32xf32> to vector<1x8x32xf32>
    tpu.vector_store %arg20[%1169, %c0_638, %c0_639], %1172 {strides = array<i32>} : memref<8x8x32xf32, #tpu.memory_space<vmem>>, vector<1x8x32xf32>,
    %c7_i32_640 = arith.constant 7 : i32
    %c7_i32_641 = arith.constant 7 : i32
    %1173 = arith.subi %c7_i32_641, %c7_i32_640 : i32
    %1174 = arith.index_cast %c7_i32_640 : i32 to index
    %c0_642 = arith.constant 0 : index
    %c0_643 = arith.constant 0 : index
    %1175 = vector.load %arg21[%1174, %c0_642, %c0_643] : memref<8x8x32xf32, #tpu.memory_space<vmem>>, vector<1x8x32xf32>
    %1176 = vector.shape_cast %1175 : vector<1x8x32xf32> to vector<8x32xf32>
    %1177 = arith.index_cast %1173 : i32 to index
    %c0_644 = arith.constant 0 : index
    %c0_645 = arith.constant 0 : index
    %1178 = vector.load %arg21[%1177, %c0_644, %c0_645] : memref<8x8x32xf32, #tpu.memory_space<vmem>>, vector<1x8x32xf32>
    %1179 = vector.shape_cast %1178 : vector<1x8x32xf32> to vector<8x32xf32>
    %1180 = arith.select %2, %1176, %1179 : vector<8x32xi1>, vector<8x32xf32>
    %1181 = arith.index_cast %c7_i32_640 : i32 to index
    %c0_646 = arith.constant 0 : index
    %c0_647 = arith.constant 0 : index
    %1182 = vector.load %arg19[%1181, %c0_646, %c0_647] : memref<8x8x32xf32, #tpu.memory_space<vmem>>, vector<1x8x32xf32>
    %1183 = vector.shape_cast %1182 : vector<1x8x32xf32> to vector<8x32xf32>
    %1184 = vector.shape_cast %1180 : vector<8x32xf32> to vector<1x8x32xf32>
    tpu.vector_store %arg19[%1181, %c0_646, %c0_647], %1184 {strides = array<i32>} : memref<8x8x32xf32, #tpu.memory_space<vmem>>, vector<1x8x32xf32>,
    %1185 = arith.index_cast %c7_i32_640 : i32 to index
    %c0_648 = arith.constant 0 : index
    %c0_649 = arith.constant 0 : index
    %1186 = vector.load %arg22[%1185, %c0_648, %c0_649] : memref<8x8x32xf32, #tpu.memory_space<vmem>>, vector<1x8x32xf32>
    %1187 = vector.shape_cast %1186 : vector<1x8x32xf32> to vector<8x32xf32>
    %1188 = arith.index_cast %1173 : i32 to index
    %c0_650 = arith.constant 0 : index
    %c0_651 = arith.constant 0 : index
    %1189 = vector.load %arg22[%1188, %c0_650, %c0_651] : memref<8x8x32xf32, #tpu.memory_space<vmem>>, vector<1x8x32xf32>
    %1190 = vector.shape_cast %1189 : vector<1x8x32xf32> to vector<8x32xf32>
    %1191 = arith.select %2, %1187, %1190 : vector<8x32xi1>, vector<8x32xf32>
    %1192 = arith.index_cast %c7_i32_640 : i32 to index
    %c0_652 = arith.constant 0 : index
    %c0_653 = arith.constant 0 : index
    %1193 = vector.load %arg20[%1192, %c0_652, %c0_653] : memref<8x8x32xf32, #tpu.memory_space<vmem>>, vector<1x8x32xf32>
    %1194 = vector.shape_cast %1193 : vector<1x8x32xf32> to vector<8x32xf32>
    %1195 = vector.shape_cast %1191 : vector<8x32xf32> to vector<1x8x32xf32>
    tpu.vector_store %arg20[%1192, %c0_652, %c0_653], %1195 {strides = array<i32>} : memref<8x8x32xf32, #tpu.memory_space<vmem>>, vector<1x8x32xf32>,
    %c8_i32_654 = arith.constant 8 : i32
    %c0_655 = arith.constant 0 : index
    %c0_656 = arith.constant 0 : index
    %c0_657 = arith.constant 0 : index
    %1196 = vector.load %arg19[%c0_655, %c0_656, %c0_657] : memref<8x8x32xf32, #tpu.memory_space<vmem>>, vector<8x8x32xf32>
    %1197 = vector.shape_cast %1196 : vector<8x8x32xf32> to vector<64x32xf32>
    %c0_658 = arith.constant 0 : index
    %c0_659 = arith.constant 0 : index
    %c0_660 = arith.constant 0 : index
    %1198 = vector.load %arg20[%c0_658, %c0_659, %c0_660] : memref<8x8x32xf32, #tpu.memory_space<vmem>>, vector<8x8x32xf32>
    %1199 = vector.shape_cast %1198 : vector<8x8x32xf32> to vector<64x32xf32>
    %1200 = tpu.concatenate %1197, %1199 in 1 : vector<64x32xf32>, vector<64x32xf32> -> vector<64x64xf32>
    %c0_661 = arith.constant 0 : index
    %c0_662 = arith.constant 0 : index
    %1201 = vector.load %arg12[%c0_661, %c0_662] : memref<32x64xf32, #tpu.memory_space<vmem>>, vector<32x64xf32>
    %cst_663 = arith.constant dense<0.000000e+00> : vector<64x32xf32>
    %1202 = tpu.matmul %1200, %1201, %cst_663 {dimension_numbers = #tpu.dot_dimension_numbers<[1], [1], [0], [0], [0, 0, 1, 0], [], []>} : vector<64x64xf32>, vector<32x64xf32>, vector<64x32xf32> -> vector<64x32xf32>
    %c0_664 = arith.constant 0 : index
    %c0_665 = arith.constant 0 : index
    %1203 = vector.load %arg13[%c0_664, %c0_665] : memref<1x32xf32, #tpu.memory_space<vmem>>, vector<1x32xf32>
    %1204 = vector.broadcast %1203 : vector<1x32xf32> to vector<64x32xf32>
    %1205 = arith.mulf %636, %1204 : vector<64x32xf32>
    %1206 = arith.addf %1202, %1205 : vector<64x32xf32>
    %cst_666 = arith.constant 5.000000e-01 : f32
    %1207 = vector.broadcast %cst_666 : f32 to vector<64x32xf32>
    %1208 = arith.mulf %1207, %1206 : vector<64x32xf32>
    %cst_667 = arith.constant 0.707106769 : f32
    %1209 = vector.broadcast %cst_667 : f32 to vector<64x32xf32>
    %1210 = arith.mulf %1206, %1209 : vector<64x32xf32>
    %cst_668 = arith.constant 0.000000e+00 : f32
    %1211 = vector.broadcast %cst_668 : f32 to vector<64x32xf32>
    %1212 = arith.cmpf olt, %1210, %1211 : vector<64x32xf32>
    %cst_669 = arith.constant -1.000000e+00 : f32
    %cst_670 = arith.constant 1.000000e+00 : f32
    %1213 = vector.broadcast %cst_669 : f32 to vector<64x32xf32>
    %1214 = vector.broadcast %cst_670 : f32 to vector<64x32xf32>
    %1215 = arith.select %1212, %1213, %1214 : vector<64x32xi1>, vector<64x32xf32>
    %1216 = math.absf %1210 : vector<64x32xf32>
    %cst_671 = arith.constant 0.327591091 : f32
    %1217 = vector.broadcast %cst_671 : f32 to vector<64x32xf32>
    %1218 = arith.mulf %1217, %1216 : vector<64x32xf32>
    %cst_672 = arith.constant 1.000000e+00 : f32
    %1219 = vector.broadcast %cst_672 : f32 to vector<64x32xf32>
    %1220 = arith.addf %1219, %1218 : vector<64x32xf32>
    %cst_673 = arith.constant 1.000000e+00 : f32
    %1221 = vector.broadcast %cst_673 : f32 to vector<64x32xf32>
    %1222 = arith.divf %1221, %1220 : vector<64x32xf32>
    %cst_674 = arith.constant 1.06140542 : f32
    %1223 = vector.broadcast %cst_674 : f32 to vector<64x32xf32>
    %1224 = arith.mulf %1223, %1222 : vector<64x32xf32>
    %cst_675 = arith.constant -1.45315206 : f32
    %1225 = vector.broadcast %cst_675 : f32 to vector<64x32xf32>
    %1226 = arith.addf %1224, %1225 : vector<64x32xf32>
    %1227 = arith.mulf %1226, %1222 : vector<64x32xf32>
    %cst_676 = arith.constant 1.42141378 : f32
    %1228 = vector.broadcast %cst_676 : f32 to vector<64x32xf32>
    %1229 = arith.addf %1227, %1228 : vector<64x32xf32>
    %1230 = arith.mulf %1229, %1222 : vector<64x32xf32>
    %cst_677 = arith.constant -0.284496725 : f32
    %1231 = vector.broadcast %cst_677 : f32 to vector<64x32xf32>
    %1232 = arith.addf %1230, %1231 : vector<64x32xf32>
    %1233 = arith.mulf %1232, %1222 : vector<64x32xf32>
    %cst_678 = arith.constant 0.254829586 : f32
    %1234 = vector.broadcast %cst_678 : f32 to vector<64x32xf32>
    %1235 = arith.addf %1233, %1234 : vector<64x32xf32>
    %1236 = arith.mulf %1235, %1222 : vector<64x32xf32>
    %cst_679 = arith.constant 0.000000e+00 : f32
    %1237 = vector.broadcast %cst_679 : f32 to vector<64x32xf32>
    %1238 = arith.subf %1237, %1216 : vector<64x32xf32>
    %1239 = arith.mulf %1238, %1216 : vector<64x32xf32>
    %1240 = math.exp %1239 : vector<64x32xf32>
    %1241 = arith.mulf %1236, %1240 : vector<64x32xf32>
    %cst_680 = arith.constant 1.000000e+00 : f32
    %1242 = vector.broadcast %cst_680 : f32 to vector<64x32xf32>
    %1243 = arith.subf %1242, %1241 : vector<64x32xf32>
    %1244 = arith.mulf %1215, %1243 : vector<64x32xf32>
    %cst_681 = arith.constant 1.000000e+00 : f32
    %1245 = vector.broadcast %cst_681 : f32 to vector<64x32xf32>
    %1246 = arith.addf %1245, %1244 : vector<64x32xf32>
    %1247 = arith.mulf %1208, %1246 : vector<64x32xf32>
    %c0_682 = arith.constant 0 : index
    %c0_683 = arith.constant 0 : index
    %1248 = vector.load %arg14[%c0_682, %c0_683] : memref<32x32xf32, #tpu.memory_space<vmem>>, vector<32x32xf32>
    %cst_684 = arith.constant dense<0.000000e+00> : vector<64x32xf32>
    %1249 = tpu.matmul %1247, %1248, %cst_684 {dimension_numbers = #tpu.dot_dimension_numbers<[1], [1], [0], [0], [0, 0, 1, 0], [], []>} : vector<64x32xf32>, vector<32x32xf32>, vector<64x32xf32> -> vector<64x32xf32>
    %c0_685 = arith.constant 0 : index
    %c0_686 = arith.constant 0 : index
    %1250 = vector.load %arg15[%c0_685, %c0_686] : memref<1x32xf32, #tpu.memory_space<vmem>>, vector<1x32xf32>
    %1251 = vector.broadcast %1250 : vector<1x32xf32> to vector<64x32xf32>
    %1252 = arith.addf %1249, %1251 : vector<64x32xf32>
    %1253 = math.absf %1252 : vector<64x32xf32>
    %cst_687 = arith.constant 0.000000e+00 : f32
    %1254 = vector.broadcast %cst_687 : f32 to vector<64x32xf32>
    %1255 = arith.subf %1254, %1253 : vector<64x32xf32>
    %1256 = math.exp %1255 : vector<64x32xf32>
    %cst_688 = arith.constant 0.000000e+00 : f32
    %1257 = vector.broadcast %cst_688 : f32 to vector<64x32xf32>
    %1258 = arith.cmpf oge, %1252, %1257 : vector<64x32xf32>
    %cst_689 = arith.constant 1.000000e+00 : f32
    %1259 = vector.broadcast %cst_689 : f32 to vector<64x32xf32>
    %1260 = arith.addf %1259, %1256 : vector<64x32xf32>
    %cst_690 = arith.constant 1.000000e+00 : f32
    %1261 = vector.broadcast %cst_690 : f32 to vector<64x32xf32>
    %1262 = arith.divf %1261, %1260 : vector<64x32xf32>
    %cst_691 = arith.constant 1.000000e+00 : f32
    %1263 = vector.broadcast %cst_691 : f32 to vector<64x32xf32>
    %1264 = arith.addf %1263, %1256 : vector<64x32xf32>
    %1265 = arith.divf %1256, %1264 : vector<64x32xf32>
    %1266 = arith.select %1258, %1262, %1265 : vector<64x32xi1>, vector<64x32xf32>
    %1267 = arith.mulf %1247, %1266 : vector<64x32xf32>
    %1268 = arith.addf %1267, %636 : vector<64x32xf32>
    %1269 = vector.shape_cast %1268 : vector<64x32xf32> to vector<8x8x32xf32>
    %cst_692 = arith.constant dense<0.000000e+00> : vector<8x32xf32>
    %1270 = vector.multi_reduction <add>, %1269, %cst_692 [0] : vector<8x8x32xf32> to vector<8x32xf32>
    %c0_693 = arith.constant 0 : index
    %c0_694 = arith.constant 0 : index
    %1271 = vector.load %arg16[%c0_693, %c0_694] : memref<8x32xf32, #tpu.memory_space<vmem>>, vector<8x32xf32>
    %cst_695 = arith.constant dense<0.000000e+00> : vector<8x8xf32>
    %1272 = tpu.matmul %1270, %1271, %cst_695 {dimension_numbers = #tpu.dot_dimension_numbers<[1], [1], [0], [0], [0, 0, 1, 0], [], []>} : vector<8x32xf32>, vector<8x32xf32>, vector<8x8xf32> -> vector<8x8xf32>
    %c0_696 = arith.constant 0 : index
    %c0_697 = arith.constant 0 : index
    %1273 = vector.load %arg17[%c0_696, %c0_697] : memref<1x8xf32, #tpu.memory_space<vmem>>, vector<1x8xf32>
    %1274 = vector.broadcast %1273 : vector<1x8xf32> to vector<8x8xf32>
    %1275 = arith.addf %1272, %1274 : vector<8x8xf32>
    %c0_698 = arith.constant 0 : index
    %c0_699 = arith.constant 0 : index
    %1276 = vector.load %arg18[%c0_698, %c0_699] : memref<8x8xf32, #tpu.memory_space<vmem>>, vector<8x8xf32>
    tpu.vector_store %arg18[%c0_698, %c0_699], %1275 {strides = array<i32>} : memref<8x8xf32, #tpu.memory_space<vmem>>, vector<8x8xf32>,
    return
  }
  func.func @transform_0(%arg0: i32) -> (i32, i32, i32) {
    %c0_i32 = arith.constant 0 : i32
    %c0_i32_0 = arith.constant 0 : i32
    %c0_i32_1 = arith.constant 0 : i32
    return %c0_i32, %arg0, %c0_i32_0 : i32, i32, i32
  }
  func.func @transform_1(%arg0: i32) -> (i32, i32) {
    %c0_i32 = arith.constant 0 : i32
    %c0_i32_0 = arith.constant 0 : i32
    %c0_i32_1 = arith.constant 0 : i32
    return %c0_i32, %c0_i32_0 : i32, i32
  }
  func.func @transform_2(%arg0: i32) -> (i32, i32) {
    %c0_i32 = arith.constant 0 : i32
    %c0_i32_0 = arith.constant 0 : i32
    %c0_i32_1 = arith.constant 0 : i32
    return %c0_i32, %c0_i32_0 : i32, i32
  }
  func.func @transform_3(%arg0: i32) -> (i32, i32) {
    %c0_i32 = arith.constant 0 : i32
    %c0_i32_0 = arith.constant 0 : i32
    %c0_i32_1 = arith.constant 0 : i32
    return %c0_i32, %c0_i32_0 : i32, i32
  }
  func.func @transform_4(%arg0: i32) -> (i32, i32) {
    %c0_i32 = arith.constant 0 : i32
    %c0_i32_0 = arith.constant 0 : i32
    %c0_i32_1 = arith.constant 0 : i32
    return %c0_i32, %c0_i32_0 : i32, i32
  }
  func.func @transform_5(%arg0: i32) -> (i32, i32) {
    %c0_i32 = arith.constant 0 : i32
    %c0_i32_0 = arith.constant 0 : i32
    %c0_i32_1 = arith.constant 0 : i32
    return %c0_i32, %c0_i32_0 : i32, i32
  }
  func.func @transform_6(%arg0: i32) -> (i32, i32) {
    %c0_i32 = arith.constant 0 : i32
    %c0_i32_0 = arith.constant 0 : i32
    %c0_i32_1 = arith.constant 0 : i32
    return %c0_i32, %c0_i32_0 : i32, i32
  }
  func.func @transform_7(%arg0: i32) -> (i32, i32) {
    %c0_i32 = arith.constant 0 : i32
    %c0_i32_0 = arith.constant 0 : i32
    %c0_i32_1 = arith.constant 0 : i32
    return %c0_i32, %c0_i32_0 : i32, i32
  }
  func.func @transform_8(%arg0: i32) -> (i32, i32) {
    %c0_i32 = arith.constant 0 : i32
    %c0_i32_0 = arith.constant 0 : i32
    %c0_i32_1 = arith.constant 0 : i32
    return %c0_i32, %c0_i32_0 : i32, i32
  }
  func.func @transform_9(%arg0: i32) -> (i32, i32) {
    %c0_i32 = arith.constant 0 : i32
    %c0_i32_0 = arith.constant 0 : i32
    %c0_i32_1 = arith.constant 0 : i32
    return %c0_i32, %c0_i32_0 : i32, i32
  }
  func.func @transform_10(%arg0: i32) -> (i32, i32) {
    %c0_i32 = arith.constant 0 : i32
    %c0_i32_0 = arith.constant 0 : i32
    %c0_i32_1 = arith.constant 0 : i32
    return %c0_i32, %c0_i32_0 : i32, i32
  }
  func.func @transform_11(%arg0: i32) -> (i32, i32) {
    %c0_i32 = arith.constant 0 : i32
    %c0_i32_0 = arith.constant 0 : i32
    %c0_i32_1 = arith.constant 0 : i32
    return %c0_i32, %c0_i32_0 : i32, i32
  }
  func.func @transform_12(%arg0: i32) -> (i32, i32) {
    %c0_i32 = arith.constant 0 : i32
    %c0_i32_0 = arith.constant 0 : i32
    %c0_i32_1 = arith.constant 0 : i32
    return %c0_i32, %c0_i32_0 : i32, i32
  }
  func.func @transform_13(%arg0: i32) -> (i32, i32) {
    %c0_i32 = arith.constant 0 : i32
    %c0_i32_0 = arith.constant 0 : i32
    %c0_i32_1 = arith.constant 0 : i32
    return %c0_i32, %c0_i32_0 : i32, i32
  }
  func.func @transform_14(%arg0: i32) -> (i32, i32) {
    %c0_i32 = arith.constant 0 : i32
    %c0_i32_0 = arith.constant 0 : i32
    %c0_i32_1 = arith.constant 0 : i32
    return %c0_i32, %c0_i32_0 : i32, i32
  }
  func.func @transform_15(%arg0: i32) -> (i32, i32) {
    %c0_i32 = arith.constant 0 : i32
    %c0_i32_0 = arith.constant 0 : i32
    %c0_i32_1 = arith.constant 0 : i32
    return %c0_i32, %c0_i32_0 : i32, i32
  }
  func.func @transform_16(%arg0: i32) -> (i32, i32) {
    %c0_i32 = arith.constant 0 : i32
    %c0_i32_0 = arith.constant 0 : i32
    %c0_i32_1 = arith.constant 0 : i32
    return %c0_i32, %c0_i32_0 : i32, i32
  }
  func.func @transform_17(%arg0: i32) -> (i32, i32) {
    %c0_i32 = arith.constant 0 : i32
    %c0_i32_0 = arith.constant 0 : i32
    return %arg0, %c0_i32 : i32, i32
  }
}

</mosaic_0001>

<llo_original>
// kernel: tpu_custom_call.1
$region0: #{tpu_custom_call.1}
  #allocation0 [shape = 'u32[]', space=smem, size = 0x4, offset = 0x4, fixed_abs, tag = 'smem constant byte address 0x4 - core index']
  #allocation1 [shape = 'u32[144,128]{1,0:T(1,128)}', space=vmem, size = 0x12000, scoped, tag = 'internal scratch']
  #allocation2 [shape = 'f32[8,8,32]{2,1,0:T(8,128)}', space=vmem, size = 0x8000, scoped, tag = 'scratch operand']
  #allocation3 [shape = 'f32[8,8,32]{2,1,0:T(8,128)}', space=vmem, size = 0x8000, scoped, tag = 'scratch operand']
  #allocation4 [shape = 'f32[8,8,32]{2,1,0:T(8,128)}', space=vmem, size = 0x8000, scoped, tag = 'scratch operand']
  #allocation5 [shape = 'f32[8,8,32]{2,1,0:T(8,128)}', space=vmem, size = 0x8000, scoped, tag = 'scratch operand']
  %s0 = inlined_call_operand.vmem [shape: f32[8,16,32], index: 0, kind: input, shape index: {}]
  %s1 = inlined_call_operand.vmem [shape: f32[64,32], index: 1, kind: input, shape index: {}]
  %s2 = inlined_call_operand.vmem [shape: f32[1,32], index: 2, kind: input, shape index: {}]
  %s3 = inlined_call_operand.hbm [shape: f32[1,32], index: 3, kind: input, shape index: {}]
  %s4 = inlined_call_operand.vmem [shape: f32[32,64], index: 4, kind: input, shape index: {}]
  %s5 = inlined_call_operand.hbm [shape: f32[1,32], index: 5, kind: input, shape index: {}]
  %s6 = inlined_call_operand.hbm [shape: f32[32,32], index: 6, kind: input, shape index: {}]
  %s7 = inlined_call_operand.hbm [shape: f32[1,32], index: 7, kind: input, shape index: {}]
  %s8 = inlined_call_operand.vmem [shape: f32[64,32], index: 8, kind: input, shape index: {}]
  %s9 = inlined_call_operand.hbm [shape: f32[1,32], index: 9, kind: input, shape index: {}]
  %s10 = inlined_call_operand.hbm [shape: f32[1,32], index: 10, kind: input, shape index: {}]
  %s11 = inlined_call_operand.vmem [shape: f32[32,64], index: 11, kind: input, shape index: {}]
  %s12 = inlined_call_operand.vmem [shape: f32[1,32], index: 12, kind: input, shape index: {}]
  %s13 = inlined_call_operand.hbm [shape: f32[32,32], index: 13, kind: input, shape index: {}]
  %s14 = inlined_call_operand.vmem [shape: f32[1,32], index: 14, kind: input, shape index: {}]
  %s15 = inlined_call_operand.vmem [shape: f32[8,32], index: 15, kind: input, shape index: {}]
  %s16 = inlined_call_operand.vmem [shape: f32[1,8], index: 16, kind: input, shape index: {}]
  %s17 = inlined_call_operand.vmem [shape: f32[16,8], index: 17, kind: output, shape index: {}]
  %s18 = sld [smem:[#allocation0]]
  $region167: #{tpu_custom_call.1} parent=0
    _
  %s20 = ssub.s32 1, %s18
  %s21 = scalar_select 0, %s20, %s18
  $region1: #{tpu_custom_call.1} parent=0
    #allocation6 [shape = 'u8[65536]{0}', space=vmem, size = 0x10000, scoped, tag = 'input window, operand 0']
    #allocation7 [shape = 'u8[512]{0}', space=vmem, size = 0x400, scoped, tag = 'input window, operand 3, single buffered']
    #allocation8 [shape = 's32[2]{0}', space=sflag, size = 0x8, scoped, tag = 'scoped memory for tpu_custom_call.1']
    #allocation9 [shape = 'u8[512]{0}', space=vmem, size = 0x400, scoped, tag = 'input window, operand 5, single buffered']
    #allocation10 [shape = 's32[1]{0}', space=sflag, size = 0x4, scoped, tag = 'scoped memory for tpu_custom_call.1']
    #allocation11 [shape = 'u8[16384]{0}', space=vmem, size = 0x4000, scoped, tag = 'input window, operand 6, single buffered']
    #allocation12 [shape = 'u8[512]{0}', space=vmem, size = 0x400, scoped, tag = 'input window, operand 7, single buffered']
    #allocation13 [shape = 's32[1]{0}', space=sflag, size = 0x4, scoped, tag = 'scoped memory for tpu_custom_call.1']
    #allocation14 [shape = 'u8[512]{0}', space=vmem, size = 0x400, scoped, tag = 'input window, operand 9, single buffered']
    #allocation15 [shape = 'u8[512]{0}', space=vmem, size = 0x400, scoped, tag = 'input window, operand 10, single buffered']
    #allocation16 [shape = 's32[1]{0}', space=sflag, size = 0x4, scoped, tag = 'scoped memory for tpu_custom_call.1']
    #allocation17 [shape = 'u8[16384]{0}', space=vmem, size = 0x4000, scoped, tag = 'input window, operand 13, single buffered']
    %22 = vsyncpa [#allocation8], 0
    %23 = vsyncpa [#allocation10], 0
    %24 = vsyncpa [#allocation13], 0
    %25 = vsyncpa [#allocation16], 0
    loop: start=0, step=1, limit=4
    $region2: #{tpu_custom_call.1} parent=1 // loop_pre_header
      _
    $region3: #{tpu_custom_call.1} parent=1 // loop_header
      %s27 = sphi 0, %s31
      %p28 = scmp.ge.s32.totalorder %s27, 4
      %s37 = sphi 0, %s39
      %s40 = sphi 0, %s37
      %s41 = sphi 0, %s40
      %s57 = sphi 0, %s41
      %s61 = sphi 0, %s61
      %s63 = sphi 0, %s61
      %s64 = sphi 0, %s63
      %s78 = sphi 0, %s64
      %s82 = sphi 0, %s82
      %s84 = sphi 0, %s82
      %s85 = sphi 0, %s84
      %s99 = sphi 0, %s85
      %s103 = sphi 0, %s103
      %s105 = sphi 0, %s103
      %s106 = sphi 0, %s105
      %s120 = sphi 0, %s106
      %s124 = sphi 0, %s124
      %s126 = sphi 0, %s124
      %s127 = sphi 0, %s126
      %s141 = sphi 0, %s127
      %s145 = sphi 0, %s145
      %s147 = sphi 0, %s145
      %s148 = sphi 0, %s147
      %s162 = sphi 0, %s148
      %s166 = sphi 0, %s166
      %s168 = sphi 0, %s166
      %s169 = sphi 0, %s168
      %s183 = sphi 0, %s169
      %s187 = sphi 0, %s187
      %s189 = sphi 0, %s187
      %s190 = sphi 0, %s189
      %s204 = sphi 0, %s190
      %s208 = sphi 0, %s208
      %s210 = sphi 0, %s208
      %s211 = sphi 0, %s210
      %s225 = sphi 0, %s211
      %s229 = sphi 0, %s229
      %s231 = sphi 0, %s229
      %s232 = sphi 0, %s231
      %s246 = sphi 0, %s232
      %s250 = sphi 0, %s250
      %s252 = sphi 0, %s250
      %s253 = sphi 0, %s252
      %s267 = sphi 0, %s253
      %s271 = sphi 0, %s271
      %s273 = sphi 0, %s271
      %s274 = sphi 0, %s273
      %s288 = sphi 0, %s274
      %s292 = sphi 0, %s292
      %s294 = sphi 0, %s292
      %s295 = sphi 0, %s294
      %s309 = sphi 0, %s295
      %s313 = sphi 0, %s313
      %s315 = sphi 0, %s313
      %s316 = sphi 0, %s315
      %s330 = sphi 0, %s316
      %s334 = sphi 0, %s334
      %s336 = sphi 0, %s334
      %s337 = sphi 0, %s336
      %s351 = sphi 0, %s337
      %s355 = sphi 0, %s355
      %s357 = sphi 0, %s355
      %s358 = sphi 0, %s357
      %s372 = sphi 0, %s358
      %s376 = sphi 0, %s376
      %s378 = sphi 0, %s376
      %s379 = sphi 0, %s378
      %s393 = sphi 0, %s379
      %s399 = sphi 0, %s401
      %s402 = sphi 0, %s399
      %s403 = sphi 0, %s402
      %s419 = sphi 0, %s403
    $region4: #{tpu_custom_call.1} parent=1 // loop_header_branch
      %30 = sbr.rel (%p28) target = $region8
    $region5: #{tpu_custom_call.1} parent=1 // loop_body
      %s32 = ssub.s32 %s27, 1
      %s33 = ssub.s32 %s27, 2
      %s34 = sadd.s32 %s27, 1
      %s35 = ssub.s32 %s27, %s34
      %p36 = scmp.eq.s32.totalorder %s35, 0
      %s38 = sadd.s32 %s37, 1
      %s39 = scalar_select %p36, %s37, %s38
      %p42 = pneg %p36
      %p43 = scmp.eq.s32.totalorder %s27, 1
      %p44 = por %p42, %p43
      %p45 = scmp.ne.s32.totalorder %s37, %s40
      %p46 = scmp.eq.s32.totalorder %s27, 0
      %p47 = por %p45, %p46
      %p48 = scmp.ne.s32.totalorder %s37, %s40
      %p49 = scmp.eq.s32.totalorder %s32, 1
      %p50 = por %p48, %p49
      %p51 = scmp.ne.s32.totalorder %s40, %s41
      %p52 = scmp.eq.s32.totalorder %s32, 0
      %p53 = por %p51, %p52
      %p54 = scmp.ne.s32.totalorder %s40, %s41
      %p55 = scmp.eq.s32.totalorder %s33, 1
      %p56 = por %p54, %p55
      %p58 = scmp.ne.s32.totalorder %s41, %s57
      %p59 = scmp.eq.s32.totalorder %s33, 0
      %p60 = por %p58, %p59
      %s62 = sadd.s32 %s61, 1
      %p65 = scmp.eq.s32.totalorder %s27, 1
      %p66 = scmp.ne.s32.totalorder %s61, %s63
      %p67 = scmp.eq.s32.totalorder %s27, 0
      %p68 = por %p66, %p67
      %p69 = scmp.ne.s32.totalorder %s61, %s63
      %p70 = scmp.eq.s32.totalorder %s32, 1
      %p71 = por %p69, %p70
      %p72 = scmp.ne.s32.totalorder %s63, %s64
      %p73 = scmp.eq.s32.totalorder %s32, 0
      %p74 = por %p72, %p73
      %p75 = scmp.ne.s32.totalorder %s63, %s64
      %p76 = scmp.eq.s32.totalorder %s33, 1
      %p77 = por %p75, %p76
      %p79 = scmp.ne.s32.totalorder %s64, %s78
      %p80 = scmp.eq.s32.totalorder %s33, 0
      %p81 = por %p79, %p80
      %s83 = sadd.s32 %s82, 1
      %p86 = scmp.eq.s32.totalorder %s27, 1
      %p87 = scmp.ne.s32.totalorder %s82, %s84
      %p88 = scmp.eq.s32.totalorder %s27, 0
      %p89 = por %p87, %p88
      %p90 = scmp.ne.s32.totalorder %s82, %s84
      %p91 = scmp.eq.s32.totalorder %s32, 1
      %p92 = por %p90, %p91
      %p93 = scmp.ne.s32.totalorder %s84, %s85
      %p94 = scmp.eq.s32.totalorder %s32, 0
      %p95 = por %p93, %p94
      %p96 = scmp.ne.s32.totalorder %s84, %s85
      %p97 = scmp.eq.s32.totalorder %s33, 1
      %p98 = por %p96, %p97
      %p100 = scmp.ne.s32.totalorder %s85, %s99
      %p101 = scmp.eq.s32.totalorder %s33, 0
      %p102 = por %p100, %p101
      %s104 = sadd.s32 %s103, 1
      %p107 = scmp.eq.s32.totalorder %s27, 1
      %p108 = scmp.ne.s32.totalorder %s103, %s105
      %p109 = scmp.eq.s32.totalorder %s27, 0
      %p110 = por %p108, %p109
      %p111 = scmp.ne.s32.totalorder %s103, %s105
      %p112 = scmp.eq.s32.totalorder %s32, 1
      %p113 = por %p111, %p112
      %p114 = scmp.ne.s32.totalorder %s105, %s106
      %p115 = scmp.eq.s32.totalorder %s32, 0
      %p116 = por %p114, %p115
      %p117 = scmp.ne.s32.totalorder %s105, %s106
      %p118 = scmp.eq.s32.totalorder %s33, 1
      %p119 = por %p117, %p118
      %p121 = scmp.ne.s32.totalorder %s106, %s120
      %p122 = scmp.eq.s32.totalorder %s33, 0
      %p123 = por %p121, %p122
      %s125 = sadd.s32 %s124, 1
      %p128 = scmp.eq.s32.totalorder %s27, 1
      %p129 = scmp.ne.s32.totalorder %s124, %s126
      %p130 = scmp.eq.s32.totalorder %s27, 0
      %p131 = por %p129, %p130
      %p132 = scmp.ne.s32.totalorder %s124, %s126
      %p133 = scmp.eq.s32.totalorder %s32, 1
      %p134 = por %p132, %p133
      %p135 = scmp.ne.s32.totalorder %s126, %s127
      %p136 = scmp.eq.s32.totalorder %s32, 0
      %p137 = por %p135, %p136
      %p138 = scmp.ne.s32.totalorder %s126, %s127
      %p139 = scmp.eq.s32.totalorder %s33, 1
      %p140 = por %p138, %p139
      %p142 = scmp.ne.s32.totalorder %s127, %s141
      %p143 = scmp.eq.s32.totalorder %s33, 0
      %p144 = por %p142, %p143
      %s146 = sadd.s32 %s145, 1
      %p149 = scmp.eq.s32.totalorder %s27, 1
      %p150 = scmp.ne.s32.totalorder %s145, %s147
      %p151 = scmp.eq.s32.totalorder %s27, 0
      %p152 = por %p150, %p151
      %p153 = scmp.ne.s32.totalorder %s145, %s147
      %p154 = scmp.eq.s32.totalorder %s32, 1
      %p155 = por %p153, %p154
      %p156 = scmp.ne.s32.totalorder %s147, %s148
      %p157 = scmp.eq.s32.totalorder %s32, 0
      %p158 = por %p156, %p157
      %p159 = scmp.ne.s32.totalorder %s147, %s148
      %p160 = scmp.eq.s32.totalorder %s33, 1
      %p161 = por %p159, %p160
      %p163 = scmp.ne.s32.totalorder %s148, %s162
      %p164 = scmp.eq.s32.totalorder %s33, 0
      %p165 = por %p163, %p164
      %s167 = sadd.s32 %s166, 1
      %p170 = scmp.eq.s32.totalorder %s27, 1
      %p171 = scmp.ne.s32.totalorder %s166, %s168
      %p172 = scmp.eq.s32.totalorder %s27, 0
      %p173 = por %p171, %p172
      %p174 = scmp.ne.s32.totalorder %s166, %s168
      %p175 = scmp.eq.s32.totalorder %s32, 1
      %p176 = por %p174, %p175
      %p177 = scmp.ne.s32.totalorder %s168, %s169
      %p178 = scmp.eq.s32.totalorder %s32, 0
      %p179 = por %p177, %p178
      %p180 = scmp.ne.s32.totalorder %s168, %s169
      %p181 = scmp.eq.s32.totalorder %s33, 1
      %p182 = por %p180, %p181
      %p184 = scmp.ne.s32.totalorder %s169, %s183
      %p185 = scmp.eq.s32.totalorder %s33, 0
      %p186 = por %p184, %p185
      %s188 = sadd.s32 %s187, 1
      %p191 = scmp.eq.s32.totalorder %s27, 1
      %p192 = scmp.ne.s32.totalorder %s187, %s189
      %p193 = scmp.eq.s32.totalorder %s27, 0
      %p194 = por %p192, %p193
      %p195 = scmp.ne.s32.totalorder %s187, %s189
      %p196 = scmp.eq.s32.totalorder %s32, 1
      %p197 = por %p195, %p196
      %p198 = scmp.ne.s32.totalorder %s189, %s190
      %p199 = scmp.eq.s32.totalorder %s32, 0
      %p200 = por %p198, %p199
      %p201 = scmp.ne.s32.totalorder %s189, %s190
      %p202 = scmp.eq.s32.totalorder %s33, 1
      %p203 = por %p201, %p202
      %p205 = scmp.ne.s32.totalorder %s190, %s204
      %p206 = scmp.eq.s32.totalorder %s33, 0
      %p207 = por %p205, %p206
      %s209 = sadd.s32 %s208, 1
      %p212 = scmp.eq.s32.totalorder %s27, 1
      %p213 = scmp.ne.s32.totalorder %s208, %s210
      %p214 = scmp.eq.s32.totalorder %s27, 0
      %p215 = por %p213, %p214
      %p216 = scmp.ne.s32.totalorder %s208, %s210
      %p217 = scmp.eq.s32.totalorder %s32, 1
      %p218 = por %p216, %p217
      %p219 = scmp.ne.s32.totalorder %s210, %s211
      %p220 = scmp.eq.s32.totalorder %s32, 0
      %p221 = por %p219, %p220
      %p222 = scmp.ne.s32.totalorder %s210, %s211
      %p223 = scmp.eq.s32.totalorder %s33, 1
      %p224 = por %p222, %p223
      %p226 = scmp.ne.s32.totalorder %s211, %s225
      %p227 = scmp.eq.s32.totalorder %s33, 0
      %p228 = por %p226, %p227
      %s230 = sadd.s32 %s229, 1
      %p233 = scmp.eq.s32.totalorder %s27, 1
      %p234 = scmp.ne.s32.totalorder %s229, %s231
      %p235 = scmp.eq.s32.totalorder %s27, 0
      %p236 = por %p234, %p235
      %p237 = scmp.ne.s32.totalorder %s229, %s231
      %p238 = scmp.eq.s32.totalorder %s32, 1
      %p239 = por %p237, %p238
      %p240 = scmp.ne.s32.totalorder %s231, %s232
      %p241 = scmp.eq.s32.totalorder %s32, 0
      %p242 = por %p240, %p241
      %p243 = scmp.ne.s32.totalorder %s231, %s232
      %p244 = scmp.eq.s32.totalorder %s33, 1
      %p245 = por %p243, %p244
      %p247 = scmp.ne.s32.totalorder %s232, %s246
      %p248 = scmp.eq.s32.totalorder %s33, 0
      %p249 = por %p247, %p248
      %s251 = sadd.s32 %s250, 1
      %p254 = scmp.eq.s32.totalorder %s27, 1
      %p255 = scmp.ne.s32.totalorder %s250, %s252
      %p256 = scmp.eq.s32.totalorder %s27, 0
      %p257 = por %p255, %p256
      %p258 = scmp.ne.s32.totalorder %s250, %s252
      %p259 = scmp.eq.s32.totalorder %s32, 1
      %p260 = por %p258, %p259
      %p261 = scmp.ne.s32.totalorder %s252, %s253
      %p262 = scmp.eq.s32.totalorder %s32, 0
      %p263 = por %p261, %p262
      %p264 = scmp.ne.s32.totalorder %s252, %s253
      %p265 = scmp.eq.s32.totalorder %s33, 1
      %p266 = por %p264, %p265
      %p268 = scmp.ne.s32.totalorder %s253, %s267
      %p269 = scmp.eq.s32.totalorder %s33, 0
      %p270 = por %p268, %p269
      %s272 = sadd.s32 %s271, 1
      %p275 = scmp.eq.s32.totalorder %s27, 1
      %p276 = scmp.ne.s32.totalorder %s271, %s273
      %p277 = scmp.eq.s32.totalorder %s27, 0
      %p278 = por %p276, %p277
      %p279 = scmp.ne.s32.totalorder %s271, %s273
      %p280 = scmp.eq.s32.totalorder %s32, 1
      %p281 = por %p279, %p280
      %p282 = scmp.ne.s32.totalorder %s273, %s274
      %p283 = scmp.eq.s32.totalorder %s32, 0
      %p284 = por %p282, %p283
      %p285 = scmp.ne.s32.totalorder %s273, %s274
      %p286 = scmp.eq.s32.totalorder %s33, 1
      %p287 = por %p285, %p286
      %p289 = scmp.ne.s32.totalorder %s274, %s288
      %p290 = scmp.eq.s32.totalorder %s33, 0
      %p291 = por %p289, %p290
      %s293 = sadd.s32 %s292, 1
      %p296 = scmp.eq.s32.totalorder %s27, 1
      %p297 = scmp.ne.s32.totalorder %s292, %s294
      %p298 = scmp.eq.s32.totalorder %s27, 0
      %p299 = por %p297, %p298
      %p300 = scmp.ne.s32.totalorder %s292, %s294
      %p301 = scmp.eq.s32.totalorder %s32, 1
      %p302 = por %p300, %p301
      %p303 = scmp.ne.s32.totalorder %s294, %s295
      %p304 = scmp.eq.s32.totalorder %s32, 0
      %p305 = por %p303, %p304
      %p306 = scmp.ne.s32.totalorder %s294, %s295
      %p307 = scmp.eq.s32.totalorder %s33, 1
      %p308 = por %p306, %p307
      %p310 = scmp.ne.s32.totalorder %s295, %s309
      %p311 = scmp.eq.s32.totalorder %s33, 0
      %p312 = por %p310, %p311
      %s314 = sadd.s32 %s313, 1
      %p317 = scmp.eq.s32.totalorder %s27, 1
      %p318 = scmp.ne.s32.totalorder %s313, %s315
      %p319 = scmp.eq.s32.totalorder %s27, 0
      %p320 = por %p318, %p319
      %p321 = scmp.ne.s32.totalorder %s313, %s315
      %p322 = scmp.eq.s32.totalorder %s32, 1
      %p323 = por %p321, %p322
      %p324 = scmp.ne.s32.totalorder %s315, %s316
      %p325 = scmp.eq.s32.totalorder %s32, 0
      %p326 = por %p324, %p325
      %p327 = scmp.ne.s32.totalorder %s315, %s316
      %p328 = scmp.eq.s32.totalorder %s33, 1
      %p329 = por %p327, %p328
      %p331 = scmp.ne.s32.totalorder %s316, %s330
      %p332 = scmp.eq.s32.totalorder %s33, 0
      %p333 = por %p331, %p332
      %s335 = sadd.s32 %s334, 1
      %p338 = scmp.eq.s32.totalorder %s27, 1
      %p339 = scmp.ne.s32.totalorder %s334, %s336
      %p340 = scmp.eq.s32.totalorder %s27, 0
      %p341 = por %p339, %p340
      %p342 = scmp.ne.s32.totalorder %s334, %s336
      %p343 = scmp.eq.s32.totalorder %s32, 1
      %p344 = por %p342, %p343
      %p345 = scmp.ne.s32.totalorder %s336, %s337
      %p346 = scmp.eq.s32.totalorder %s32, 0
      %p347 = por %p345, %p346
      %p348 = scmp.ne.s32.totalorder %s336, %s337
      %p349 = scmp.eq.s32.totalorder %s33, 1
      %p350 = por %p348, %p349
      %p352 = scmp.ne.s32.totalorder %s337, %s351
      %p353 = scmp.eq.s32.totalorder %s33, 0
      %p354 = por %p352, %p353
      %s356 = sadd.s32 %s355, 1
      %p359 = scmp.eq.s32.totalorder %s27, 1
      %p360 = scmp.ne.s32.totalorder %s355, %s357
      %p361 = scmp.eq.s32.totalorder %s27, 0
      %p362 = por %p360, %p361
      %p363 = scmp.ne.s32.totalorder %s355, %s357
      %p364 = scmp.eq.s32.totalorder %s32, 1
      %p365 = por %p363, %p364
      %p366 = scmp.ne.s32.totalorder %s357, %s358
      %p367 = scmp.eq.s32.totalorder %s32, 0
      %p368 = por %p366, %p367
      %p369 = scmp.ne.s32.totalorder %s357, %s358
      %p370 = scmp.eq.s32.totalorder %s33, 1
      %p371 = por %p369, %p370
      %p373 = scmp.ne.s32.totalorder %s358, %s372
      %p374 = scmp.eq.s32.totalorder %s33, 0
      %p375 = por %p373, %p374
      %s377 = sadd.s32 %s376, 1
      %p380 = scmp.eq.s32.totalorder %s27, 1
      %p381 = scmp.ne.s32.totalorder %s376, %s378
      %p382 = scmp.eq.s32.totalorder %s27, 0
      %p383 = por %p381, %p382
      %p384 = scmp.ne.s32.totalorder %s376, %s378
      %p385 = scmp.eq.s32.totalorder %s32, 1
      %p386 = por %p384, %p385
      %p387 = scmp.ne.s32.totalorder %s378, %s379
      %p388 = scmp.eq.s32.totalorder %s32, 0
      %p389 = por %p387, %p388
      %p390 = scmp.ne.s32.totalorder %s378, %s379
      %p391 = scmp.eq.s32.totalorder %s33, 1
      %p392 = por %p390, %p391
      %p394 = scmp.ne.s32.totalorder %s379, %s393
      %p395 = scmp.eq.s32.totalorder %s33, 0
      %p396 = por %p394, %p395
      %s397 = ssub.s32 %s27, %s34
      %p398 = scmp.eq.s32.totalorder %s397, 0
      %s400 = sadd.s32 %s399, 1
      %s401 = scalar_select %p398, %s399, %s400
      %p404 = pneg %p398
      %p405 = scmp.eq.s32.totalorder %s27, 1
      %p406 = por %p404, %p405
      %p407 = scmp.ne.s32.totalorder %s399, %s402
      %p408 = scmp.eq.s32.totalorder %s27, 0
      %p409 = por %p407, %p408
      %p410 = scmp.ne.s32.totalorder %s399, %s402
      %p411 = scmp.eq.s32.totalorder %s32, 1
      %p412 = por %p410, %p411
      %p413 = scmp.ne.s32.totalorder %s402, %s403
      %p414 = scmp.eq.s32.totalorder %s32, 0
      %p415 = por %p413, %p414
      %p416 = scmp.ne.s32.totalorder %s402, %s403
      %p417 = scmp.eq.s32.totalorder %s33, 1
      %p418 = por %p416, %p417
      %p420 = scmp.ne.s32.totalorder %s403, %s419
      %p421 = scmp.eq.s32.totalorder %s33, 0
      %p422 = por %p420, %p421
      %p423 = scmp.le.s32.totalorder 1, %s27
      %p424 = scmp.lt.s32.totalorder %s27, 3
      %p425 = pnand %p423, %p424
      %p426 = pneg %p425
      // Predicated region
      $region9: #{tpu_custom_call.1} parent=5 // pred_check
        _
      $region10: #{tpu_custom_call.1} parent=5 // pred_check_branch
        %428 = sbr.rel (%p425) target = $region12
      $region11: #{tpu_custom_call.1} parent=5 // pred_region
        %s429 = ssub.s32 %s27, 1
        // Predicated region
        $region13: #{tpu_custom_call.1} parent=11 // pred_check
          %p430 = pneg %p74
        $region14: #{tpu_custom_call.1} parent=11 // pred_check_branch
          %432 = sbr.rel (%p430) target = $region16
        $region15: #{tpu_custom_call.1} parent=11 // pred_region
          _
        $region16: #{tpu_custom_call.1} parent=11 // pred_fallthru
          _
        // Predicated region
        $region17: #{tpu_custom_call.1} parent=11 // pred_check
          %p433 = pneg %p95
        $region18: #{tpu_custom_call.1} parent=11 // pred_check_branch
          %435 = sbr.rel (%p433) target = $region20
        $region19: #{tpu_custom_call.1} parent=11 // pred_region
          _
        $region20: #{tpu_custom_call.1} parent=11 // pred_fallthru
          _
        // Predicated region
        $region21: #{tpu_custom_call.1} parent=11 // pred_check
          %p436 = pneg %p116
        $region22: #{tpu_custom_call.1} parent=11 // pred_check_branch
          %438 = sbr.rel (%p436) target = $region24
        $region23: #{tpu_custom_call.1} parent=11 // pred_region
          %s440 = ssub.s32 16, 16
          %441 = vsyncadd [#allocation8], %s440
          %s443 = sshll.u32 [#allocation7], 4
          %s444 = int_to_ptr.vmem [resolvable:$true] %s443
          %446 = dma.hbm_to_vmem [thread:$0]  %s3, 16, %s444, [#allocation8]
        $region24: #{tpu_custom_call.1} parent=11 // pred_fallthru
          _
        // Predicated region
        $region25: #{tpu_custom_call.1} parent=11 // pred_check
          %p447 = pneg %p137
        $region26: #{tpu_custom_call.1} parent=11 // pred_check_branch
          %449 = sbr.rel (%p447) target = $region28
        $region27: #{tpu_custom_call.1} parent=11 // pred_region
          _
        $region28: #{tpu_custom_call.1} parent=11 // pred_fallthru
          _
        // Predicated region
        $region29: #{tpu_custom_call.1} parent=11 // pred_check
          %p450 = pneg %p158
        $region30: #{tpu_custom_call.1} parent=11 // pred_check_branch
          %452 = sbr.rel (%p450) target = $region32
        $region31: #{tpu_custom_call.1} parent=11 // pred_region
          %s454 = ssub.s32 16, 16
          %455 = vsyncadd [#allocation10], %s454
          %s457 = sshll.u32 [#allocation9], 4
          %s458 = int_to_ptr.vmem [resolvable:$true] %s457
          %460 = dma.hbm_to_vmem [thread:$0]  %s5, 16, %s458, [#allocation10]
        $region32: #{tpu_custom_call.1} parent=11 // pred_fallthru
          _
        // Predicated region
        $region33: #{tpu_custom_call.1} parent=11 // pred_check
          %p461 = pneg %p179
        $region34: #{tpu_custom_call.1} parent=11 // pred_check_branch
          %463 = sbr.rel (%p461) target = $region36
        $region35: #{tpu_custom_call.1} parent=11 // pred_region
          %s465 = ssub.s32 512, 512
          %466 = vsyncadd [#allocation10], %s465
          %s467 = sshll.u32 [#allocation11], 4
          %s468 = int_to_ptr.vmem [resolvable:$true] %s467
          %473 = dma.hbm_to_vmem [thread:$0]  %s6, 512, %s468, [#allocation10], 128, 128, 8
        $region36: #{tpu_custom_call.1} parent=11 // pred_fallthru
          _
        // Predicated region
        $region37: #{tpu_custom_call.1} parent=11 // pred_check
          %p474 = pneg %p200
        $region38: #{tpu_custom_call.1} parent=11 // pred_check_branch
          %476 = sbr.rel (%p474) target = $region40
        $region39: #{tpu_custom_call.1} parent=11 // pred_region
          %s478 = ssub.s32 16, 16
          %479 = vsyncadd [#allocation13], %s478
          %s481 = sshll.u32 [#allocation12], 4
          %s482 = int_to_ptr.vmem [resolvable:$true] %s481
          %484 = dma.hbm_to_vmem [thread:$0]  %s7, 16, %s482, [#allocation13]
        $region40: #{tpu_custom_call.1} parent=11 // pred_fallthru
          _
        // Predicated region
        $region41: #{tpu_custom_call.1} parent=11 // pred_check
          %p485 = pneg %p221
        $region42: #{tpu_custom_call.1} parent=11 // pred_check_branch
          %487 = sbr.rel (%p485) target = $region44
        $region43: #{tpu_custom_call.1} parent=11 // pred_region
          _
        $region44: #{tpu_custom_call.1} parent=11 // pred_fallthru
          _
        // Predicated region
        $region45: #{tpu_custom_call.1} parent=11 // pred_check
          %p488 = pneg %p242
        $region46: #{tpu_custom_call.1} parent=11 // pred_check_branch
          %490 = sbr.rel (%p488) target = $region48
        $region47: #{tpu_custom_call.1} parent=11 // pred_region
          %s492 = ssub.s32 16, 16
          %493 = vsyncadd [#allocation13], %s492
          %s495 = sshll.u32 [#allocation14], 4
          %s496 = int_to_ptr.vmem [resolvable:$true] %s495
          %498 = dma.hbm_to_vmem [thread:$0]  %s9, 16, %s496, [#allocation13]
        $region48: #{tpu_custom_call.1} parent=11 // pred_fallthru
          _
        // Predicated region
        $region49: #{tpu_custom_call.1} parent=11 // pred_check
          %p499 = pneg %p263
        $region50: #{tpu_custom_call.1} parent=11 // pred_check_branch
          %501 = sbr.rel (%p499) target = $region52
        $region51: #{tpu_custom_call.1} parent=11 // pred_region
          %s503 = ssub.s32 16, 16
          %504 = vsyncadd [#allocation16], %s503
          %s506 = sshll.u32 [#allocation15], 4
          %s507 = int_to_ptr.vmem [resolvable:$true] %s506
          %509 = dma.hbm_to_vmem [thread:$0]  %s10, 16, %s507, [#allocation16]
        $region52: #{tpu_custom_call.1} parent=11 // pred_fallthru
          _
        // Predicated region
        $region53: #{tpu_custom_call.1} parent=11 // pred_check
          %p510 = pneg %p284
        $region54: #{tpu_custom_call.1} parent=11 // pred_check_branch
          %512 = sbr.rel (%p510) target = $region56
        $region55: #{tpu_custom_call.1} parent=11 // pred_region
          _
        $region56: #{tpu_custom_call.1} parent=11 // pred_fallthru
          _
        // Predicated region
        $region57: #{tpu_custom_call.1} parent=11 // pred_check
          %p513 = pneg %p305
        $region58: #{tpu_custom_call.1} parent=11 // pred_check_branch
          %515 = sbr.rel (%p513) target = $region60
        $region59: #{tpu_custom_call.1} parent=11 // pred_region
          _
        $region60: #{tpu_custom_call.1} parent=11 // pred_fallthru
          _
        // Predicated region
        $region61: #{tpu_custom_call.1} parent=11 // pred_check
          %p516 = pneg %p326
        $region62: #{tpu_custom_call.1} parent=11 // pred_check_branch
          %518 = sbr.rel (%p516) target = $region64
        $region63: #{tpu_custom_call.1} parent=11 // pred_region
          %s520 = ssub.s32 512, 512
          %521 = vsyncadd [#allocation16], %s520
          %s522 = sshll.u32 [#allocation17], 4
          %s523 = int_to_ptr.vmem [resolvable:$true] %s522
          %528 = dma.hbm_to_vmem [thread:$0]  %s13, 512, %s523, [#allocation16], 128, 128, 8
        $region64: #{tpu_custom_call.1} parent=11 // pred_fallthru
          _
        // Predicated region
        $region65: #{tpu_custom_call.1} parent=11 // pred_check
          %p529 = pneg %p347
        $region66: #{tpu_custom_call.1} parent=11 // pred_check_branch
          %531 = sbr.rel (%p529) target = $region68
        $region67: #{tpu_custom_call.1} parent=11 // pred_region
          _
        $region68: #{tpu_custom_call.1} parent=11 // pred_fallthru
          _
        // Predicated region
        $region69: #{tpu_custom_call.1} parent=11 // pred_check
          %p532 = pneg %p368
        $region70: #{tpu_custom_call.1} parent=11 // pred_check_branch
          %534 = sbr.rel (%p532) target = $region72
        $region71: #{tpu_custom_call.1} parent=11 // pred_region
          _
        $region72: #{tpu_custom_call.1} parent=11 // pred_fallthru
          _
        // Predicated region
        $region73: #{tpu_custom_call.1} parent=11 // pred_check
          %p535 = pneg %p389
        $region74: #{tpu_custom_call.1} parent=11 // pred_check_branch
          %537 = sbr.rel (%p535) target = $region76
        $region75: #{tpu_custom_call.1} parent=11 // pred_region
          _
        $region76: #{tpu_custom_call.1} parent=11 // pred_fallthru
          _
      $region12: #{tpu_custom_call.1} parent=5 // pred_fallthru
        _
      %p538 = scmp.lt.s32.totalorder %s27, 2
      // Predicated region
      $region77: #{tpu_custom_call.1} parent=5 // pred_check
        %p539 = pneg %p538
      $region78: #{tpu_custom_call.1} parent=5 // pred_check_branch
        %541 = sbr.rel (%p539) target = $region80
      $region79: #{tpu_custom_call.1} parent=5 // pred_region
        // Predicated region
        $region81: #{tpu_custom_call.1} parent=79 // pred_check
          %p542 = pneg %p47
        $region82: #{tpu_custom_call.1} parent=79 // pred_check_branch
          %544 = sbr.rel (%p542) target = $region84
        $region83: #{tpu_custom_call.1} parent=79 // pred_region
          %s545 = sand.u32 %s37, 1
          %s546 = sand.u32 %s37, 1
          %s547 = smul.addr %s546, 64
          %s548 = scalar_lea.vmem [#allocation6], %s547
          %s549 = smul.addr %s27, 8
          %s550 = scalar_lea.vmem %s0, %s549
          // Predicated region
          $region85: #{tpu_custom_call.1} parent=83 // pred_check
            _
          $region86: #{tpu_custom_call.1} parent=83 // pred_check_branch
            %552 = sbr.rel (0) target = $region88
          $region87: #{tpu_custom_call.1} parent=83 // pred_region
            // Predicated region
            $region89: #{tpu_custom_call.1} parent=87 // pred_check
              _
            $region90: #{tpu_custom_call.1} parent=87 // pred_check_branch
              %554 = sbr.rel (0) target = $region92
            $region91: #{tpu_custom_call.1} parent=87 // pred_region
              // Predicated region
              $region104: #{tpu_custom_call.1} parent=91 // pred_check
                _
              $region105: #{tpu_custom_call.1} parent=91 // pred_check_branch
                %583 = sbr.rel (0) target = $region107
              $region106: #{tpu_custom_call.1} parent=91 // pred_region
                loop: start=0, step=1, limit=1
                $region108: #{tpu_custom_call.1} parent=106 // loop_pre_header
                  _
                $region109: #{tpu_custom_call.1} parent=106 // loop_header
                  %s585 = sphi 0, %s589
                  %p586 = scmp.ge.s32.totalorder %s585, 1
                  %s590 = sphi %s550, %s550
                  %s591 = sphi %s548, %s548
                $region110: #{tpu_custom_call.1} parent=106 // loop_header_branch
                  %588 = sbr.rel (%p586) target = $region114
                $region111: #{tpu_custom_call.1} parent=106 // loop_body
                  %v592 = vld [vmem:[%s590] sm:$0xff]
                  %593 = vst [vmem:[%s591] sm:$0xff] %v592
                  %v594 = vld [vmem:[%s590 + $0x10] sm:$0xff]
                  %595 = vst [vmem:[%s591 + $0x8] sm:$0xff] %v594
                  %v596 = vld [vmem:[%s590 + $0x20] sm:$0xff]
                  %597 = vst [vmem:[%s591 + $0x10] sm:$0xff] %v596
                  %v598 = vld [vmem:[%s590 + $0x30] sm:$0xff]
                  %599 = vst [vmem:[%s591 + $0x18] sm:$0xff] %v598
                  %v600 = vld [vmem:[%s590 + $0x40] sm:$0xff]
                  %601 = vst [vmem:[%s591 + $0x20] sm:$0xff] %v600
                  %v602 = vld [vmem:[%s590 + $0x50] sm:$0xff]
                  %603 = vst [vmem:[%s591 + $0x28] sm:$0xff] %v602
                  %v604 = vld [vmem:[%s590 + $0x60] sm:$0xff]
                  %605 = vst [vmem:[%s591 + $0x30] sm:$0xff] %v604
                  %v606 = vld [vmem:[%s590 + $0x70] sm:$0xff]
                  %607 = vst [vmem:[%s591 + $0x38] sm:$0xff] %v606
                $region112: #{tpu_custom_call.1} parent=106 // loop_footer
                  %s589 = sadd.s32 1, %s585
                $region113: #{tpu_custom_call.1} parent=106 // loop_footer_branch
                  %584 = sbr.rel target = $region109
                $region114: #{tpu_custom_call.1} parent=106 // loop_exit
                  _
              $region107: #{tpu_custom_call.1} parent=91 // pred_fallthru
                _
              // Predicated region
              $region115: #{tpu_custom_call.1} parent=91 // pred_check
                _
              $region116: #{tpu_custom_call.1} parent=91 // pred_check_branch
                %609 = sbr.rel target = $region118
              $region117: #{tpu_custom_call.1} parent=91 // pred_region
                _
              $region118: #{tpu_custom_call.1} parent=91 // pred_fallthru
                _
            $region92: #{tpu_custom_call.1} parent=87 // pred_fallthru
              _
            // Predicated region
            $region93: #{tpu_custom_call.1} parent=87 // pred_check
              _
            $region94: #{tpu_custom_call.1} parent=87 // pred_check_branch
              %556 = sbr.rel target = $region96
            $region95: #{tpu_custom_call.1} parent=87 // pred_region
              loop: start=0, step=1, limit=1
              $region97: #{tpu_custom_call.1} parent=95 // loop_pre_header
                _
              $region98: #{tpu_custom_call.1} parent=95 // loop_header
                %s559 = sphi 0, %s563
                %p560 = scmp.ge.s32.totalorder %s559, 1
                %s564 = sphi %s550, %s550
                %s565 = sphi %s548, %s548
              $region99: #{tpu_custom_call.1} parent=95 // loop_header_branch
                %562 = sbr.rel (%p560) target = $region103
              $region100: #{tpu_custom_call.1} parent=95 // loop_body
                %v566 = vld [vmem:[%s564] sm:$0xff]
                %567 = vst [vmem:[%s565] sm:$0xff] %v566
                %v568 = vld [vmem:[%s564 + $0x10] sm:$0xff]
                %569 = vst [vmem:[%s565 + $0x8] sm:$0xff] %v568
                %v570 = vld [vmem:[%s564 + $0x20] sm:$0xff]
                %571 = vst [vmem:[%s565 + $0x10] sm:$0xff] %v570
                %v572 = vld [vmem:[%s564 + $0x30] sm:$0xff]
                %573 = vst [vmem:[%s565 + $0x18] sm:$0xff] %v572
                %v574 = vld [vmem:[%s564 + $0x40] sm:$0xff]
                %575 = vst [vmem:[%s565 + $0x20] sm:$0xff] %v574
                %v576 = vld [vmem:[%s564 + $0x50] sm:$0xff]
                %577 = vst [vmem:[%s565 + $0x28] sm:$0xff] %v576
                %v578 = vld [vmem:[%s564 + $0x60] sm:$0xff]
                %579 = vst [vmem:[%s565 + $0x30] sm:$0xff] %v578
                %v580 = vld [vmem:[%s564 + $0x70] sm:$0xff]
                %581 = vst [vmem:[%s565 + $0x38] sm:$0xff] %v580
              $region101: #{tpu_custom_call.1} parent=95 // loop_footer
                %s563 = sadd.s32 1, %s559
              $region102: #{tpu_custom_call.1} parent=95 // loop_footer_branch
                %558 = sbr.rel target = $region98
              $region103: #{tpu_custom_call.1} parent=95 // loop_exit
                _
            $region96: #{tpu_custom_call.1} parent=87 // pred_fallthru
              _
          $region88: #{tpu_custom_call.1} parent=83 // pred_fallthru
            _
          %610 = vnop
        $region84: #{tpu_custom_call.1} parent=79 // pred_fallthru
          _
      $region80: #{tpu_custom_call.1} parent=5 // pred_fallthru
        _
      %p611 = scmp.le.s32.totalorder 1, %s27
      %p612 = scmp.lt.s32.totalorder %s27, 3
      %p613 = pnand %p611, %p612
      %p614 = pneg %p613
      // Predicated region
      $region119: #{tpu_custom_call.1} parent=5 // pred_check
        _
      $region120: #{tpu_custom_call.1} parent=5 // pred_check_branch
        %616 = sbr.rel (%p613) target = $region122
      $region121: #{tpu_custom_call.1} parent=5 // pred_region
        %s617 = ssub.s32 %s27, 1
        %s618 = sand.u32 %s40, 1
        %s619 = sand.u32 %s40, 1
        %s620 = smul.addr %s619, 64
        %s621 = scalar_lea.vmem [#allocation6], %s620
        // Predicated region
        $region123: #{tpu_custom_call.1} parent=121 // pred_check
          %p622 = pneg %p53
        $region124: #{tpu_custom_call.1} parent=121 // pred_check_branch
          %624 = sbr.rel (%p622) target = $region126
        $region125: #{tpu_custom_call.1} parent=121 // pred_region
          _
        $region126: #{tpu_custom_call.1} parent=121 // pred_fallthru
          _
        // Predicated region
        $region127: #{tpu_custom_call.1} parent=121 // pred_check
          %p625 = pneg %p116
        $region128: #{tpu_custom_call.1} parent=121 // pred_check_branch
          %627 = sbr.rel (%p625) target = $region130
        $region129: #{tpu_custom_call.1} parent=121 // pred_region
          %628 = dma.done [#allocation8], 16
        $region130: #{tpu_custom_call.1} parent=121 // pred_fallthru
          _
        // Predicated region
        $region131: #{tpu_custom_call.1} parent=121 // pred_check
          %p629 = pneg %p158
        $region132: #{tpu_custom_call.1} parent=121 // pred_check_branch
          %631 = sbr.rel (%p629) target = $region134
        $region133: #{tpu_custom_call.1} parent=121 // pred_region
          %632 = dma.done [#allocation10], 16
        $region134: #{tpu_custom_call.1} parent=121 // pred_fallthru
          _
        // Predicated region
        $region135: #{tpu_custom_call.1} parent=121 // pred_check
          %p633 = pneg %p179
        $region136: #{tpu_custom_call.1} parent=121 // pred_check_branch
          %635 = sbr.rel (%p633) target = $region138
        $region137: #{tpu_custom_call.1} parent=121 // pred_region
          %636 = dma.done [#allocation10], 512
        $region138: #{tpu_custom_call.1} parent=121 // pred_fallthru
          _
        // Predicated region
        $region139: #{tpu_custom_call.1} parent=121 // pred_check
          %p637 = pneg %p200
        $region140: #{tpu_custom_call.1} parent=121 // pred_check_branch
          %639 = sbr.rel (%p637) target = $region142
        $region141: #{tpu_custom_call.1} parent=121 // pred_region
          %640 = dma.done [#allocation13], 16
        $region142: #{tpu_custom_call.1} parent=121 // pred_fallthru
          _
        // Predicated region
        $region143: #{tpu_custom_call.1} parent=121 // pred_check
          %p641 = pneg %p242
        $region144: #{tpu_custom_call.1} parent=121 // pred_check_branch
          %643 = sbr.rel (%p641) target = $region146
        $region145: #{tpu_custom_call.1} parent=121 // pred_region
          %644 = dma.done [#allocation13], 16
        $region146: #{tpu_custom_call.1} parent=121 // pred_fallthru
          _
        // Predicated region
        $region147: #{tpu_custom_call.1} parent=121 // pred_check
          %p645 = pneg %p263
        $region148: #{tpu_custom_call.1} parent=121 // pred_check_branch
          %647 = sbr.rel (%p645) target = $region150
        $region149: #{tpu_custom_call.1} parent=121 // pred_region
          %648 = dma.done [#allocation16], 16
        $region150: #{tpu_custom_call.1} parent=121 // pred_fallthru
          _
        // Predicated region
        $region151: #{tpu_custom_call.1} parent=121 // pred_check
          %p649 = pneg %p326
        $region152: #{tpu_custom_call.1} parent=121 // pred_check_branch
          %651 = sbr.rel (%p649) target = $region154
        $region153: #{tpu_custom_call.1} parent=121 // pred_region
          %652 = dma.done [#allocation16], 512
        $region154: #{tpu_custom_call.1} parent=121 // pred_fallthru
          _
        %s653 = sand.u32 %s40, 1
        %s654 = sand.u32 %s40, 1
        %s655 = smul.addr %s654, 64
        %s656 = scalar_lea.vmem [#allocation6], %s655
        %p657 = pneg %p53
        %p658 = pneg %p50
        %p659 = pneg %p74
        %p660 = pneg %p71
        %p661 = pneg %p95
        %p662 = pneg %p92
        %p663 = pneg %p116
        %p664 = pneg %p113
        %p665 = pneg %p137
        %p666 = pneg %p134
        %p667 = pneg %p158
        %p668 = pneg %p155
        %p669 = pneg %p179
        %p670 = pneg %p176
        %p671 = pneg %p200
        %p672 = pneg %p197
        %p673 = pneg %p221
        %p674 = pneg %p218
        %p675 = pneg %p242
        %p676 = pneg %p239
        %p677 = pneg %p263
        %p678 = pneg %p260
        %p679 = pneg %p284
        %p680 = pneg %p281
        %p681 = pneg %p305
        %p682 = pneg %p302
        %p683 = pneg %p326
        %p684 = pneg %p323
        %p685 = pneg %p347
        %p686 = pneg %p344
        %p687 = pneg %p368
        %p688 = pneg %p365
        %p689 = pneg %p389
        %p690 = pneg %p386
        %p691 = pneg %p415
        %p692 = pneg %p412
        %p693 = scmp.lt.s32.totalorder %s32, 1
        %s694 = scalar_select %p693, %s32, 1
        %s695 = smul.addr %s694, 8
        %s696 = scalar_lea.vmem %s17, %s695
        %p697 = scmp.lt.s32.totalorder %s32, 1
        %s698 = scalar_select %p697, %s32, 1
        %s699 = smul.addr %s698, 8
        %s700 = scalar_lea.vmem %s17, %s699
        %v701 = vlaneseq
        %v702 = vand.u32 %v701, 127
        %vm703 = vcmp.lt.s32.totalorder %v702, 16
        %v704 = vld [vmem:[%s621] sm:$0xff]
        %v705 = vld [vmem:[%s621 + $0x8] sm:$0xff]
        %v706 = vld [vmem:[%s621 + $0x10] sm:$0xff]
        %v707 = vld [vmem:[%s621 + $0x18] sm:$0xff]
        %v708 = vld [vmem:[%s621 + $0x20] sm:$0xff]
        %v709 = vld [vmem:[%s621 + $0x28] sm:$0xff]
        %v710 = vld [vmem:[%s621 + $0x30] sm:$0xff]
        %v711 = vld [vmem:[%s621 + $0x38] sm:$0xff]
        %v712 = vld [vmem:[%s1] sm:$0xff]
        %v713 = vld [vmem:[%s1 + $0x8] sm:$0xff]
        %v714 = vld [vmem:[%s1 + $0x10] sm:$0xff]
        %v715 = vld [vmem:[%s1 + $0x18] sm:$0xff]
        %v716 = vld [vmem:[%s1 + $0x20] sm:$0xff]
        %v717 = vld [vmem:[%s1 + $0x28] sm:$0xff]
        %v718 = vld [vmem:[%s1 + $0x30] sm:$0xff]
        %v719 = vld [vmem:[%s1 + $0x38] sm:$0xff]
        %vm720 = vcmask 261120
        %v722 = vsel %vm720, %v704, 0
        %v725 = vsel %vm720, %v705, 0
        %v728 = vsel %vm720, %v706, 0
        %v731 = vsel %vm720, %v707, 0
        %v734 = vsel %vm720, %v708, 0
        %v737 = vsel %vm720, %v709, 0
        %v740 = vsel %vm720, %v710, 0
        %v743 = vsel %vm720, %v711, 0
        %v746 = vsel %vm720, %v712, 0
        %v749 = vsel %vm720, %v713, 0
        %v752 = vsel %vm720, %v714, 0
        %v755 = vsel %vm720, %v715, 0
        %v758 = vsel %vm720, %v716, 0
        %v761 = vsel %vm720, %v717, 0
        %v764 = vsel %vm720, %v718, 0
        %v767 = vsel %vm720, %v719, 0
        %769 = vmatprep.subr.mxu0 0.0
        %770 = vmatpush1.xpose.msra.mxu0 %v746
        %771 = vmatprep.subr.mxu0 0.0
        %772 = vmatpush1.xpose.msra.mxu0 %v749
        %773 = vmatprep.subr.mxu0 0.0
        %774 = vmatpush1.xpose.msra.mxu0 %v752
        %775 = vmatprep.subr.mxu0 0.0
        %776 = vmatpush1.xpose.msra.mxu0 %v755
        %777 = vmatprep.subr.mxu0 0.0
        %778 = vmatpush1.xpose.msra.mxu0 %v758
        %779 = vmatprep.subr.mxu0 0.0
        %780 = vmatpush1.xpose.msra.mxu0 %v761
        %781 = vmatprep.subr.mxu0 0.0
        %782 = vmatpush1.xpose.msra.mxu0 %v764
        %783 = vmatprep.subr.mxu0 0.0
        %784 = vmatpush1.xpose.msra.mxu0 %v767
        %785 = vmatprep.subr.mxu0 0.0
        %786 = vmatpush1.xpose.msra.mxu0 0.0
        %787 = vmatprep.subr.mxu0 0.0
        %788 = vmatpush1.xpose.msra.mxu0 0.0
        %789 = vmatprep.subr.mxu0 0.0
        %790 = vmatpush1.xpose.msra.mxu0 0.0
        %791 = vmatprep.subr.mxu0 0.0
        %792 = vmatpush1.xpose.msra.mxu0 0.0
        %793 = vmatprep.subr.mxu0 0.0
        %794 = vmatpush1.xpose.msra.mxu0 0.0
        %795 = vmatprep.subr.mxu0 0.0
        %796 = vmatpush1.xpose.msra.mxu0 0.0
        %797 = vmatprep.subr.mxu0 0.0
        %798 = vmatpush1.xpose.msra.mxu0 0.0
        %799 = vmatprep.subr.mxu0 0.0
        %800 = vmatpush1.xpose.msra.mxu0 0.0
        %801 = vmatprep.subr.mxu0 0.0
        %802 = vmatpush1.xpose.msra.mxu0 0.0
        %803 = vmatprep.subr.mxu0 0.0
        %804 = vmatpush1.xpose.msra.mxu0 0.0
        %805 = vmatprep.subr.mxu0 0.0
        %806 = vmatpush1.xpose.msra.mxu0 0.0
        %807 = vmatprep.subr.mxu0 0.0
        %808 = vmatpush1.xpose.msra.mxu0 0.0
        %809 = vmatprep.subr.mxu0 0.0
        %810 = vmatpush1.xpose.msra.mxu0 0.0
        %811 = vmatprep.subr.mxu0 0.0
        %812 = vmatpush1.xpose.msra.mxu0 0.0
        %813 = vmatprep.subr.mxu0 0.0
        %814 = vmatpush1.xpose.msra.mxu0 0.0
        %815 = vmatprep.subr.mxu0 0.0
        %816 = vmatpush1.xpose.msra.mxu0 0.0
        %817 = vmatprep.subr.mxu0 0.0
        %818 = vmatpush1.xpose.msra.mxu0 0.0
        %819 = vmatprep.subr.mxu0 0.0
        %820 = vmatpush1.xpose.msra.mxu0 0.0
        %821 = vmatprep.subr.mxu0 0.0
        %822 = vmatpush1.xpose.msra.mxu0 0.0
        %823 = vmatprep.subr.mxu0 0.0
        %824 = vmatpush1.xpose.msra.mxu0 0.0
        %825 = vmatprep.subr.mxu0 0.0
        %826 = vmatpush1.xpose.msra.mxu0 0.0
        %827 = vmatprep.subr.mxu0 0.0
        %828 = vmatpush1.xpose.msra.mxu0 0.0
        %829 = vmatprep.subr.mxu0 0.0
        %830 = vmatpush1.xpose.msra.mxu0 0.0
        %831 = vmatprep.subr.mxu0 0.0
        %832 = vmatpush1.xpose.msra.mxu0 0.0
        %833 = vmatprep.mubr.f32.mxu0 0.0
        %834 = vmatmul.mubr.f32.gmra.mrb[0].mxu0 %v722
        %v835 = vpop.f32.mrb[0].mxu0
        %v836 = vadd.f32 0.0, %v835
        %v837 = vpop.f32.mrb[0].mxu0
        %838 = vmatprep.mubr.f32.mxu0 0.0
        %839 = vmatmul.mubr.f32.gmra.mrb[0].mxu0 %v725
        %v840 = vpop.f32.mrb[0].mxu0
        %v841 = vadd.f32 0.0, %v840
        %v842 = vpop.f32.mrb[0].mxu0
        %843 = vmatprep.mubr.f32.mxu0 0.0
        %844 = vmatmul.mubr.f32.gmra.mrb[0].mxu0 %v728
        %v845 = vpop.f32.mrb[0].mxu0
        %v846 = vadd.f32 0.0, %v845
        %v847 = vpop.f32.mrb[0].mxu0
        %848 = vmatprep.mubr.f32.mxu0 0.0
        %849 = vmatmul.mubr.f32.gmra.mrb[0].mxu0 %v731
        %v850 = vpop.f32.mrb[0].mxu0
        %v851 = vadd.f32 0.0, %v850
        %v852 = vpop.f32.mrb[0].mxu0
        %853 = vmatprep.mubr.f32.mxu0 0.0
        %854 = vmatmul.mubr.f32.gmra.mrb[0].mxu0 %v734
        %v855 = vpop.f32.mrb[0].mxu0
        %v856 = vadd.f32 0.0, %v855
        %v857 = vpop.f32.mrb[0].mxu0
        %858 = vmatprep.mubr.f32.mxu0 0.0
        %859 = vmatmul.mubr.f32.gmra.mrb[0].mxu0 %v737
        %v860 = vpop.f32.mrb[0].mxu0
        %v861 = vadd.f32 0.0, %v860
        %v862 = vpop.f32.mrb[0].mxu0
        %863 = vmatprep.mubr.f32.mxu0 0.0
        %864 = vmatmul.mubr.f32.gmra.mrb[0].mxu0 %v740
        %v865 = vpop.f32.mrb[0].mxu0
        %v866 = vadd.f32 0.0, %v865
        %v867 = vpop.f32.mrb[0].mxu0
        %868 = vmatprep.mubr.f32.mxu0 0.0
        %869 = vmatmul.mubr.f32.gmra.mrb[0].mxu0 %v743
        %v870 = vpop.f32.mrb[0].mxu0
        %v871 = vadd.f32 0.0, %v870
        %v872 = vpop.f32.mrb[0].mxu0
        %873 = vdwg.mxu0
        %874 = vst.msk [vmem:[#allocation4] sm:$0xff] %vm720, %v836
        %875 = vst.msk [vmem:[#allocation4 + $0x8] sm:$0xff] %vm720, %v841
        %876 = vst.msk [vmem:[#allocation4 + $0x10] sm:$0xff] %vm720, %v846
        %877 = vst.msk [vmem:[#allocation4 + $0x18] sm:$0xff] %vm720, %v851
        %878 = vst.msk [vmem:[#allocation4 + $0x20] sm:$0xff] %vm720, %v856
        %879 = vst.msk [vmem:[#allocation4 + $0x28] sm:$0xff] %vm720, %v861
        %880 = vst.msk [vmem:[#allocation4 + $0x30] sm:$0xff] %vm720, %v866
        %881 = vst.msk [vmem:[#allocation4 + $0x38] sm:$0xff] %vm720, %v871
        %890 = vrot.lane.b32.xlu0 %v836, 96
        %v891 = vpop.permute.xlu0 %890
        %892 = vrot.lane.b32.xlu0 %v841, 96
        %v893 = vpop.permute.xlu0 %892
        %894 = vrot.lane.b32.xlu0 %v846, 96
        %v895 = vpop.permute.xlu0 %894
        %896 = vrot.lane.b32.xlu0 %v851, 96
        %v897 = vpop.permute.xlu0 %896
        %898 = vrot.lane.b32.xlu0 %v856, 96
        %v899 = vpop.permute.xlu0 %898
        %900 = vrot.lane.b32.xlu0 %v861, 96
        %v901 = vpop.permute.xlu0 %900
        %902 = vrot.lane.b32.xlu0 %v866, 96
        %v903 = vpop.permute.xlu0 %902
        %904 = vrot.lane.b32.xlu0 %v871, 96
        %v905 = vpop.permute.xlu0 %904
        %914 = vst.msk [vmem:[#allocation5] sm:$0xff] %vm720, %v891
        %915 = vst.msk [vmem:[#allocation5 + $0x8] sm:$0xff] %vm720, %v893
        %916 = vst.msk [vmem:[#allocation5 + $0x10] sm:$0xff] %vm720, %v895
        %917 = vst.msk [vmem:[#allocation5 + $0x18] sm:$0xff] %vm720, %v897
        %918 = vst.msk [vmem:[#allocation5 + $0x20] sm:$0xff] %vm720, %v899
        %919 = vst.msk [vmem:[#allocation5 + $0x28] sm:$0xff] %vm720, %v901
        %920 = vst.msk [vmem:[#allocation5 + $0x30] sm:$0xff] %vm720, %v903
        %921 = vst.msk [vmem:[#allocation5 + $0x38] sm:$0xff] %vm720, %v905
        %v922 = vld [vmem:[#allocation4] sm:$0xff]
        %s923 = scalar_lea.vmem [#allocation4], 56
        %v924 = vld [vmem:[%s923] sm:$0xff]
        %v925 = vsel %vm703, %v922, %v924
        %926 = vst.msk [vmem:[#allocation2] sm:$0xff] %vm720, %v925
        %v927 = vld [vmem:[#allocation5] sm:$0xff]
        %s928 = scalar_lea.vmem [#allocation5], 56
        %v929 = vld [vmem:[%s928] sm:$0xff]
        %v930 = vsel %vm703, %v927, %v929
        %931 = vst.msk [vmem:[#allocation3] sm:$0xff] %vm720, %v930
        %s932 = scalar_lea.vmem [#allocation4], 8
        %v933 = vld [vmem:[%s932] sm:$0xff]
        %s934 = scalar_lea.vmem [#allocation4], 48
        %v935 = vld [vmem:[%s934] sm:$0xff]
        %v936 = vsel %vm703, %v933, %v935
        %s937 = scalar_lea.vmem [#allocation2], 8
        %938 = vst.msk [vmem:[%s937] sm:$0xff] %vm720, %v936
        %s939 = scalar_lea.vmem [#allocation5], 8
        %v940 = vld [vmem:[%s939] sm:$0xff]
        %s941 = scalar_lea.vmem [#allocation5], 48
        %v942 = vld [vmem:[%s941] sm:$0xff]
        %v943 = vsel %vm703, %v940, %v942
        %s944 = scalar_lea.vmem [#allocation3], 8
        %945 = vst.msk [vmem:[%s944] sm:$0xff] %vm720, %v943
        %s946 = scalar_lea.vmem [#allocation4], 16
        %v947 = vld [vmem:[%s946] sm:$0xff]
        %s948 = scalar_lea.vmem [#allocation4], 40
        %v949 = vld [vmem:[%s948] sm:$0xff]
        %v950 = vsel %vm703, %v947, %v949
        %s951 = scalar_lea.vmem [#allocation2], 16
        %952 = vst.msk [vmem:[%s951] sm:$0xff] %vm720, %v950
        %s953 = scalar_lea.vmem [#allocation5], 16
        %v954 = vld [vmem:[%s953] sm:$0xff]
        %s955 = scalar_lea.vmem [#allocation5], 40
        %v956 = vld [vmem:[%s955] sm:$0xff]
        %v957 = vsel %vm703, %v954, %v956
        %s958 = scalar_lea.vmem [#allocation3], 16
        %959 = vst.msk [vmem:[%s958] sm:$0xff] %vm720, %v957
        %s960 = scalar_lea.vmem [#allocation4], 24
        %v961 = vld [vmem:[%s960] sm:$0xff]
        %s962 = scalar_lea.vmem [#allocation4], 32
        %v963 = vld [vmem:[%s962] sm:$0xff]
        %v964 = vsel %vm703, %v961, %v963
        %s965 = scalar_lea.vmem [#allocation2], 24
        %966 = vst.msk [vmem:[%s965] sm:$0xff] %vm720, %v964
        %s967 = scalar_lea.vmem [#allocation5], 24
        %v968 = vld [vmem:[%s967] sm:$0xff]
        %s969 = scalar_lea.vmem [#allocation5], 32
        %v970 = vld [vmem:[%s969] sm:$0xff]
        %v971 = vsel %vm703, %v968, %v970
        %s972 = scalar_lea.vmem [#allocation3], 24
        %973 = vst.msk [vmem:[%s972] sm:$0xff] %vm720, %v971
        %v974 = vld [vmem:[%s962] sm:$0xff]
        %v975 = vld [vmem:[%s960] sm:$0xff]
        %v976 = vsel %vm703, %v974, %v975
        %s977 = scalar_lea.vmem [#allocation2], 32
        %978 = vst.msk [vmem:[%s977] sm:$0xff] %vm720, %v976
        %v979 = vld [vmem:[%s969] sm:$0xff]
        %v980 = vld [vmem:[%s967] sm:$0xff]
        %v981 = vsel %vm703, %v979, %v980
        %s982 = scalar_lea.vmem [#allocation3], 32
        %983 = vst.msk [vmem:[%s982] sm:$0xff] %vm720, %v981
        %v984 = vld [vmem:[%s948] sm:$0xff]
        %v985 = vld [vmem:[%s946] sm:$0xff]
        %v986 = vsel %vm703, %v984, %v985
        %s987 = scalar_lea.vmem [#allocation2], 40
        %988 = vst.msk [vmem:[%s987] sm:$0xff] %vm720, %v986
        %v989 = vld [vmem:[%s955] sm:$0xff]
        %v990 = vld [vmem:[%s953] sm:$0xff]
        %v991 = vsel %vm703, %v989, %v990
        %s992 = scalar_lea.vmem [#allocation3], 40
        %993 = vst.msk [vmem:[%s992] sm:$0xff] %vm720, %v991
        %v994 = vld [vmem:[%s934] sm:$0xff]
        %v995 = vld [vmem:[%s932] sm:$0xff]
        %v996 = vsel %vm703, %v994, %v995
        %s997 = scalar_lea.vmem [#allocation2], 48
        %998 = vst.msk [vmem:[%s997] sm:$0xff] %vm720, %v996
        %v999 = vld [vmem:[%s941] sm:$0xff]
        %v1000 = vld [vmem:[%s939] sm:$0xff]
        %v1001 = vsel %vm703, %v999, %v1000
        %s1002 = scalar_lea.vmem [#allocation3], 48
        %1003 = vst.msk [vmem:[%s1002] sm:$0xff] %vm720, %v1001
        %v1004 = vld [vmem:[%s923] sm:$0xff]
        %v1005 = vld [vmem:[#allocation4] sm:$0xff]
        %v1006 = vsel %vm703, %v1004, %v1005
        %s1007 = scalar_lea.vmem [#allocation2], 56
        %1008 = vst.msk [vmem:[%s1007] sm:$0xff] %vm720, %v1006
        %v1009 = vld [vmem:[%s928] sm:$0xff]
        %v1010 = vld [vmem:[#allocation5] sm:$0xff]
        %v1011 = vsel %vm703, %v1009, %v1010
        %s1012 = scalar_lea.vmem [#allocation3], 56
        %1013 = vst.msk [vmem:[%s1012] sm:$0xff] %vm720, %v1011
        %v1014 = vld [vmem:[%s2] sm:$0x1]
        %v1016 = vlaneseq
        %v1017 = vshrl.u32 %v1016, 7
        %v1018 = vsub.s32 0, %v1017
        %v1019 = vrot.slane %v1014, %v1018
        %v1021 = vld [vmem:[#allocation7] sm:$0x1]
        %v1023 = vlaneseq
        %v1024 = vshrl.u32 %v1023, 7
        %v1025 = vsub.s32 0, %v1024
        %v1026 = vrot.slane %v1021, %v1025
        %v1028 = vld [vmem:[#allocation2] sm:$0xff]
        %v1029 = vld [vmem:[#allocation3] sm:$0xff]
        %v1030 = vmul.f32 %v1019, 0.0
        %v1031 = vmul.f32 %v1026, 0.0
        %v1032 = vsub.f32 %v1030, %v1031
        %v1033 = vadd.f32 %v1032, %v1028
        %v1034 = vadd.f32 %v1030, %v1031
        %v1035 = vadd.f32 %v1034, %v1029
        %1036 = vst.msk [vmem:[#allocation4] sm:$0xff] %vm720, %v1033
        %1037 = vst.msk [vmem:[#allocation5] sm:$0xff] %vm720, %v1035
        %v1038 = vld [vmem:[%s937] sm:$0xff]
        %v1039 = vld [vmem:[%s944] sm:$0xff]
        %v1040 = vmul.f32 %v1019, %v1033
        %v1041 = vmul.f32 %v1026, %v1035
        %v1042 = vsub.f32 %v1040, %v1041
        %v1043 = vadd.f32 %v1042, %v1038
        %v1044 = vmul.f32 %v1019, %v1035
        %v1045 = vmul.f32 %v1026, %v1033
        %v1046 = vadd.f32 %v1044, %v1045
        %v1047 = vadd.f32 %v1046, %v1039
        %1048 = vst.msk [vmem:[%s932] sm:$0xff] %vm720, %v1043
        %1049 = vst.msk [vmem:[%s939] sm:$0xff] %vm720, %v1047
        %v1050 = vld [vmem:[%s951] sm:$0xff]
        %v1051 = vld [vmem:[%s958] sm:$0xff]
        %v1052 = vmul.f32 %v1019, %v1043
        %v1053 = vmul.f32 %v1026, %v1047
        %v1054 = vsub.f32 %v1052, %v1053
        %v1055 = vadd.f32 %v1054, %v1050
        %v1056 = vmul.f32 %v1019, %v1047
        %v1057 = vmul.f32 %v1026, %v1043
        %v1058 = vadd.f32 %v1056, %v1057
        %v1059 = vadd.f32 %v1058, %v1051
        %1060 = vst.msk [vmem:[%s946] sm:$0xff] %vm720, %v1055
        %1061 = vst.msk [vmem:[%s953] sm:$0xff] %vm720, %v1059
        %v1062 = vld [vmem:[%s965] sm:$0xff]
        %v1063 = vld [vmem:[%s972] sm:$0xff]
        %v1064 = vmul.f32 %v1019, %v1055
        %v1065 = vmul.f32 %v1026, %v1059
        %v1066 = vsub.f32 %v1064, %v1065
        %v1067 = vadd.f32 %v1066, %v1062
        %v1068 = vmul.f32 %v1019, %v1059
        %v1069 = vmul.f32 %v1026, %v1055
        %v1070 = vadd.f32 %v1068, %v1069
        %v1071 = vadd.f32 %v1070, %v1063
        %1072 = vst.msk [vmem:[%s960] sm:$0xff] %vm720, %v1067
        %1073 = vst.msk [vmem:[%s967] sm:$0xff] %vm720, %v1071
        %v1074 = vld [vmem:[%s977] sm:$0xff]
        %v1075 = vld [vmem:[%s982] sm:$0xff]
        %v1076 = vmul.f32 %v1019, %v1067
        %v1077 = vmul.f32 %v1026, %v1071
        %v1078 = vsub.f32 %v1076, %v1077
        %v1079 = vadd.f32 %v1078, %v1074
        %v1080 = vmul.f32 %v1019, %v1071
        %v1081 = vmul.f32 %v1026, %v1067
        %v1082 = vadd.f32 %v1080, %v1081
        %v1083 = vadd.f32 %v1082, %v1075
        %1084 = vst.msk [vmem:[%s962] sm:$0xff] %vm720, %v1079
        %1085 = vst.msk [vmem:[%s969] sm:$0xff] %vm720, %v1083
        %v1086 = vld [vmem:[%s987] sm:$0xff]
        %v1087 = vld [vmem:[%s992] sm:$0xff]
        %v1088 = vmul.f32 %v1019, %v1079
        %v1089 = vmul.f32 %v1026, %v1083
        %v1090 = vsub.f32 %v1088, %v1089
        %v1091 = vadd.f32 %v1090, %v1086
        %v1092 = vmul.f32 %v1019, %v1083
        %v1093 = vmul.f32 %v1026, %v1079
        %v1094 = vadd.f32 %v1092, %v1093
        %v1095 = vadd.f32 %v1094, %v1087
        %1096 = vst.msk [vmem:[%s948] sm:$0xff] %vm720, %v1091
        %1097 = vst.msk [vmem:[%s955] sm:$0xff] %vm720, %v1095
        %v1098 = vld [vmem:[%s997] sm:$0xff]
        %v1099 = vld [vmem:[%s1002] sm:$0xff]
        %v1100 = vmul.f32 %v1019, %v1091
        %v1101 = vmul.f32 %v1026, %v1095
        %v1102 = vsub.f32 %v1100, %v1101
        %v1103 = vadd.f32 %v1102, %v1098
        %v1104 = vmul.f32 %v1019, %v1095
        %v1105 = vmul.f32 %v1026, %v1091
        %v1106 = vadd.f32 %v1104, %v1105
        %v1107 = vadd.f32 %v1106, %v1099
        %1108 = vst.msk [vmem:[%s934] sm:$0xff] %vm720, %v1103
        %1109 = vst.msk [vmem:[%s941] sm:$0xff] %vm720, %v1107
        %v1110 = vld [vmem:[%s1007] sm:$0xff]
        %v1111 = vld [vmem:[%s1012] sm:$0xff]
        %v1112 = vmul.f32 %v1019, %v1103
        %v1113 = vmul.f32 %v1026, %v1107
        %v1114 = vsub.f32 %v1112, %v1113
        %v1115 = vadd.f32 %v1114, %v1110
        %v1116 = vmul.f32 %v1019, %v1107
        %v1117 = vmul.f32 %v1026, %v1103
        %v1118 = vadd.f32 %v1116, %v1117
        %v1119 = vadd.f32 %v1118, %v1111
        %1120 = vst.msk [vmem:[%s923] sm:$0xff] %vm720, %v1115
        %1121 = vst.msk [vmem:[%s928] sm:$0xff] %vm720, %v1119
        %v1122 = vld [vmem:[#allocation4] sm:$0xff]
        %v1123 = vld [vmem:[%s923] sm:$0xff]
        %v1124 = vsel %vm703, %v1122, %v1123
        %1125 = vst.msk [vmem:[#allocation2] sm:$0xff] %vm720, %v1124
        %v1126 = vld [vmem:[#allocation5] sm:$0xff]
        %v1127 = vld [vmem:[%s928] sm:$0xff]
        %v1128 = vsel %vm703, %v1126, %v1127
        %1129 = vst.msk [vmem:[#allocation3] sm:$0xff] %vm720, %v1128
        %v1130 = vld [vmem:[%s932] sm:$0xff]
        %v1131 = vld [vmem:[%s934] sm:$0xff]
        %v1132 = vsel %vm703, %v1130, %v1131
        %1133 = vst.msk [vmem:[%s937] sm:$0xff] %vm720, %v1132
        %v1134 = vld [vmem:[%s939] sm:$0xff]
        %v1135 = vld [vmem:[%s941] sm:$0xff]
        %v1136 = vsel %vm703, %v1134, %v1135
        %1137 = vst.msk [vmem:[%s944] sm:$0xff] %vm720, %v1136
        %v1138 = vld [vmem:[%s946] sm:$0xff]
        %v1139 = vld [vmem:[%s948] sm:$0xff]
        %v1140 = vsel %vm703, %v1138, %v1139
        %1141 = vst.msk [vmem:[%s951] sm:$0xff] %vm720, %v1140
        %v1142 = vld [vmem:[%s953] sm:$0xff]
        %v1143 = vld [vmem:[%s955] sm:$0xff]
        %v1144 = vsel %vm703, %v1142, %v1143
        %1145 = vst.msk [vmem:[%s958] sm:$0xff] %vm720, %v1144
        %v1146 = vld [vmem:[%s960] sm:$0xff]
        %v1147 = vld [vmem:[%s962] sm:$0xff]
        %v1148 = vsel %vm703, %v1146, %v1147
        %1149 = vst.msk [vmem:[%s965] sm:$0xff] %vm720, %v1148
        %v1150 = vld [vmem:[%s967] sm:$0xff]
        %v1151 = vld [vmem:[%s969] sm:$0xff]
        %v1152 = vsel %vm703, %v1150, %v1151
        %1153 = vst.msk [vmem:[%s972] sm:$0xff] %vm720, %v1152
        %v1154 = vld [vmem:[%s962] sm:$0xff]
        %v1155 = vld [vmem:[%s960] sm:$0xff]
        %v1156 = vsel %vm703, %v1154, %v1155
        %1157 = vst.msk [vmem:[%s977] sm:$0xff] %vm720, %v1156
        %v1158 = vld [vmem:[%s969] sm:$0xff]
        %v1159 = vld [vmem:[%s967] sm:$0xff]
        %v1160 = vsel %vm703, %v1158, %v1159
        %1161 = vst.msk [vmem:[%s982] sm:$0xff] %vm720, %v1160
        %v1162 = vld [vmem:[%s948] sm:$0xff]
        %v1163 = vld [vmem:[%s946] sm:$0xff]
        %v1164 = vsel %vm703, %v1162, %v1163
        %1165 = vst.msk [vmem:[%s987] sm:$0xff] %vm720, %v1164
        %v1166 = vld [vmem:[%s955] sm:$0xff]
        %v1167 = vld [vmem:[%s953] sm:$0xff]
        %v1168 = vsel %vm703, %v1166, %v1167
        %1169 = vst.msk [vmem:[%s992] sm:$0xff] %vm720, %v1168
        %v1170 = vld [vmem:[%s934] sm:$0xff]
        %v1171 = vld [vmem:[%s932] sm:$0xff]
        %v1172 = vsel %vm703, %v1170, %v1171
        %1173 = vst.msk [vmem:[%s997] sm:$0xff] %vm720, %v1172
        %v1174 = vld [vmem:[%s941] sm:$0xff]
        %v1175 = vld [vmem:[%s939] sm:$0xff]
        %v1176 = vsel %vm703, %v1174, %v1175
        %1177 = vst.msk [vmem:[%s1002] sm:$0xff] %vm720, %v1176
        %v1178 = vld [vmem:[%s923] sm:$0xff]
        %v1179 = vld [vmem:[#allocation4] sm:$0xff]
        %v1180 = vsel %vm703, %v1178, %v1179
        %1181 = vst.msk [vmem:[%s1007] sm:$0xff] %vm720, %v1180
        %v1182 = vld [vmem:[%s928] sm:$0xff]
        %v1183 = vld [vmem:[#allocation5] sm:$0xff]
        %v1184 = vsel %vm703, %v1182, %v1183
        %1185 = vst.msk [vmem:[%s1012] sm:$0xff] %vm720, %v1184
        %v1186 = vld [vmem:[#allocation2] sm:$0xff]
        %v1187 = vld [vmem:[#allocation2 + $0x8] sm:$0xff]
        %v1188 = vld [vmem:[#allocation2 + $0x10] sm:$0xff]
        %v1189 = vld [vmem:[#allocation2 + $0x18] sm:$0xff]
        %v1190 = vld [vmem:[#allocation2 + $0x20] sm:$0xff]
        %v1191 = vld [vmem:[#allocation2 + $0x28] sm:$0xff]
        %v1192 = vld [vmem:[#allocation2 + $0x30] sm:$0xff]
        %v1193 = vld [vmem:[#allocation2 + $0x38] sm:$0xff]
        %v1194 = vld [vmem:[#allocation3] sm:$0xff]
        %v1195 = vld [vmem:[#allocation3 + $0x8] sm:$0xff]
        %v1196 = vld [vmem:[#allocation3 + $0x10] sm:$0xff]
        %v1197 = vld [vmem:[#allocation3 + $0x18] sm:$0xff]
        %v1198 = vld [vmem:[#allocation3 + $0x20] sm:$0xff]
        %v1199 = vld [vmem:[#allocation3 + $0x28] sm:$0xff]
        %v1200 = vld [vmem:[#allocation3 + $0x30] sm:$0xff]
        %v1201 = vld [vmem:[#allocation3 + $0x38] sm:$0xff]
        %1210 = vrot.lane.b32.xlu0 %v1194, 32
        %v1211 = vpop.permute.xlu0 %1210
        %1212 = vrot.lane.b32.xlu0 %v1195, 32
        %v1213 = vpop.permute.xlu0 %1212
        %1214 = vrot.lane.b32.xlu0 %v1196, 32
        %v1215 = vpop.permute.xlu0 %1214
        %1216 = vrot.lane.b32.xlu0 %v1197, 32
        %v1217 = vpop.permute.xlu0 %1216
        %1218 = vrot.lane.b32.xlu0 %v1198, 32
        %v1219 = vpop.permute.xlu0 %1218
        %1220 = vrot.lane.b32.xlu0 %v1199, 32
        %v1221 = vpop.permute.xlu0 %1220
        %1222 = vrot.lane.b32.xlu0 %v1200, 32
        %v1223 = vpop.permute.xlu0 %1222
        %1224 = vrot.lane.b32.xlu0 %v1201, 32
        %v1225 = vpop.permute.xlu0 %1224
        %v1234 = vsel %vm720, %v1186, %v1211
        %v1235 = vsel %vm720, %v1187, %v1213
        %v1236 = vsel %vm720, %v1188, %v1215
        %v1237 = vsel %vm720, %v1189, %v1217
        %v1238 = vsel %vm720, %v1190, %v1219
        %v1239 = vsel %vm720, %v1191, %v1221
        %v1240 = vsel %vm720, %v1192, %v1223
        %v1241 = vsel %vm720, %v1193, %v1225
        %v1242 = vld [vmem:[%s4] sm:$0xff]
        %v1243 = vld [vmem:[%s4 + $0x8] sm:$0xff]
        %v1244 = vld [vmem:[%s4 + $0x10] sm:$0xff]
        %v1245 = vld [vmem:[%s4 + $0x18] sm:$0xff]
        %v1246 = vld [vmem:[#allocation9] sm:$0x1]
        %v1248 = vlaneseq
        %v1249 = vshrl.u32 %v1248, 7
        %v1250 = vsub.s32 0, %v1249
        %v1251 = vrot.slane %v1246, %v1250
        %v1253 = vmul.f32 %v704, %v1251
        %v1254 = vmul.f32 %v705, %v1251
        %v1255 = vmul.f32 %v706, %v1251
        %v1256 = vmul.f32 %v707, %v1251
        %v1257 = vmul.f32 %v708, %v1251
        %v1258 = vmul.f32 %v709, %v1251
        %v1259 = vmul.f32 %v710, %v1251
        %v1260 = vmul.f32 %v711, %v1251
        %vm1261 = vcmask 523264
        %v1263 = vsel %vm1261, %v1234, 0
        %v1266 = vsel %vm1261, %v1235, 0
        %v1269 = vsel %vm1261, %v1236, 0
        %v1272 = vsel %vm1261, %v1237, 0
        %v1275 = vsel %vm1261, %v1238, 0
        %v1278 = vsel %vm1261, %v1239, 0
        %v1281 = vsel %vm1261, %v1240, 0
        %v1284 = vsel %vm1261, %v1241, 0
        %v1287 = vsel %vm1261, %v1242, 0
        %v1290 = vsel %vm1261, %v1243, 0
        %v1293 = vsel %vm1261, %v1244, 0
        %v1296 = vsel %vm1261, %v1245, 0
        %1298 = vmatprep.subr.mxu0 0.0
        %1299 = vmatpush1.xpose.msra.mxu0 %v1287
        %1300 = vmatprep.subr.mxu0 0.0
        %1301 = vmatpush1.xpose.msra.mxu0 %v1290
        %1302 = vmatprep.subr.mxu0 0.0
        %1303 = vmatpush1.xpose.msra.mxu0 %v1293
        %1304 = vmatprep.subr.mxu0 0.0
        %1305 = vmatpush1.xpose.msra.mxu0 %v1296
        %1306 = vmatprep.subr.mxu0 0.0
        %1307 = vmatpush1.xpose.msra.mxu0 0.0
        %1308 = vmatprep.subr.mxu0 0.0
        %1309 = vmatpush1.xpose.msra.mxu0 0.0
        %1310 = vmatprep.subr.mxu0 0.0
        %1311 = vmatpush1.xpose.msra.mxu0 0.0
        %1312 = vmatprep.subr.mxu0 0.0
        %1313 = vmatpush1.xpose.msra.mxu0 0.0
        %1314 = vmatprep.subr.mxu0 0.0
        %1315 = vmatpush1.xpose.msra.mxu0 0.0
        %1316 = vmatprep.subr.mxu0 0.0
        %1317 = vmatpush1.xpose.msra.mxu0 0.0
        %1318 = vmatprep.subr.mxu0 0.0
        %1319 = vmatpush1.xpose.msra.mxu0 0.0
        %1320 = vmatprep.subr.mxu0 0.0
        %1321 = vmatpush1.xpose.msra.mxu0 0.0
        %1322 = vmatprep.subr.mxu0 0.0
        %1323 = vmatpush1.xpose.msra.mxu0 0.0
        %1324 = vmatprep.subr.mxu0 0.0
        %1325 = vmatpush1.xpose.msra.mxu0 0.0
        %1326 = vmatprep.subr.mxu0 0.0
        %1327 = vmatpush1.xpose.msra.mxu0 0.0
        %1328 = vmatprep.subr.mxu0 0.0
        %1329 = vmatpush1.xpose.msra.mxu0 0.0
        %1330 = vmatprep.subr.mxu0 0.0
        %1331 = vmatpush1.xpose.msra.mxu0 0.0
        %1332 = vmatprep.subr.mxu0 0.0
        %1333 = vmatpush1.xpose.msra.mxu0 0.0
        %1334 = vmatprep.subr.mxu0 0.0
        %1335 = vmatpush1.xpose.msra.mxu0 0.0
        %1336 = vmatprep.subr.mxu0 0.0
        %1337 = vmatpush1.xpose.msra.mxu0 0.0
        %1338 = vmatprep.subr.mxu0 0.0
        %1339 = vmatpush1.xpose.msra.mxu0 0.0
        %1340 = vmatprep.subr.mxu0 0.0
        %1341 = vmatpush1.xpose.msra.mxu0 0.0
        %1342 = vmatprep.subr.mxu0 0.0
        %1343 = vmatpush1.xpose.msra.mxu0 0.0
        %1344 = vmatprep.subr.mxu0 0.0
        %1345 = vmatpush1.xpose.msra.mxu0 0.0
        %1346 = vmatprep.subr.mxu0 0.0
        %1347 = vmatpush1.xpose.msra.mxu0 0.0
        %1348 = vmatprep.subr.mxu0 0.0
        %1349 = vmatpush1.xpose.msra.mxu0 0.0
        %1350 = vmatprep.subr.mxu0 0.0
        %1351 = vmatpush1.xpose.msra.mxu0 0.0
        %1352 = vmatprep.subr.mxu0 0.0
        %1353 = vmatpush1.xpose.msra.mxu0 0.0
        %1354 = vmatprep.subr.mxu0 0.0
        %1355 = vmatpush1.xpose.msra.mxu0 0.0
        %1356 = vmatprep.subr.mxu0 0.0
        %1357 = vmatpush1.xpose.msra.mxu0 0.0
        %1358 = vmatprep.subr.mxu0 0.0
        %1359 = vmatpush1.xpose.msra.mxu0 0.0
        %1360 = vmatprep.subr.mxu0 0.0
        %1361 = vmatpush1.xpose.msra.mxu0 0.0
        %1362 = vmatprep.mubr.f32.mxu0 0.0
        %1363 = vmatmul.mubr.f32.gmra.mrb[0].mxu0 %v1263
        %v1364 = vpop.f32.mrb[0].mxu0
        %v1365 = vadd.f32 %v1253, %v1364
        %v1366 = vpop.f32.mrb[0].mxu0
        %1367 = vmatprep.mubr.f32.mxu0 0.0
        %1368 = vmatmul.mubr.f32.gmra.mrb[0].mxu0 %v1266
        %v1369 = vpop.f32.mrb[0].mxu0
        %v1370 = vadd.f32 %v1254, %v1369
        %v1371 = vpop.f32.mrb[0].mxu0
        %1372 = vmatprep.mubr.f32.mxu0 0.0
        %1373 = vmatmul.mubr.f32.gmra.mrb[0].mxu0 %v1269
        %v1374 = vpop.f32.mrb[0].mxu0
        %v1375 = vadd.f32 %v1255, %v1374
        %v1376 = vpop.f32.mrb[0].mxu0
        %1377 = vmatprep.mubr.f32.mxu0 0.0
        %1378 = vmatmul.mubr.f32.gmra.mrb[0].mxu0 %v1272
        %v1379 = vpop.f32.mrb[0].mxu0
        %v1380 = vadd.f32 %v1256, %v1379
        %v1381 = vpop.f32.mrb[0].mxu0
        %1382 = vmatprep.mubr.f32.mxu0 0.0
        %1383 = vmatmul.mubr.f32.gmra.mrb[0].mxu0 %v1275
        %v1384 = vpop.f32.mrb[0].mxu0
        %v1385 = vadd.f32 %v1257, %v1384
        %v1386 = vpop.f32.mrb[0].mxu0
        %1387 = vmatprep.mubr.f32.mxu0 0.0
        %1388 = vmatmul.mubr.f32.gmra.mrb[0].mxu0 %v1278
        %v1389 = vpop.f32.mrb[0].mxu0
        %v1390 = vadd.f32 %v1258, %v1389
        %v1391 = vpop.f32.mrb[0].mxu0
        %1392 = vmatprep.mubr.f32.mxu0 0.0
        %1393 = vmatmul.mubr.f32.gmra.mrb[0].mxu0 %v1281
        %v1394 = vpop.f32.mrb[0].mxu0
        %v1395 = vadd.f32 %v1259, %v1394
        %v1396 = vpop.f32.mrb[0].mxu0
        %1397 = vmatprep.mubr.f32.mxu0 0.0
        %1398 = vmatmul.mubr.f32.gmra.mrb[0].mxu0 %v1284
        %v1399 = vpop.f32.mrb[0].mxu0
        %v1400 = vadd.f32 %v1260, %v1399
        %v1401 = vpop.f32.mrb[0].mxu0
        %1402 = vdwg.mxu0
        %v1403 = vmul.f32 %v1365, 0.5
        %v1404 = vmul.f32 %v1370, 0.5
        %v1405 = vmul.f32 %v1375, 0.5
        %v1406 = vmul.f32 %v1380, 0.5
        %v1407 = vmul.f32 %v1385, 0.5
        %v1408 = vmul.f32 %v1390, 0.5
        %v1409 = vmul.f32 %v1395, 0.5
        %v1410 = vmul.f32 %v1400, 0.5
        %v1411 = vmul.f32 %v1365, 0.70710677
        %v1412 = vmul.f32 %v1370, 0.70710677
        %v1413 = vmul.f32 %v1375, 0.70710677
        %v1414 = vmul.f32 %v1380, 0.70710677
        %v1415 = vmul.f32 %v1385, 0.70710677
        %v1416 = vmul.f32 %v1390, 0.70710677
        %v1417 = vmul.f32 %v1395, 0.70710677
        %v1418 = vmul.f32 %v1400, 0.70710677
        %vm1419 = vcmp.lt.f32.partialorder %v1411, 0.0
        %vm1420 = vcmp.lt.f32.partialorder %v1412, 0.0
        %vm1421 = vcmp.lt.f32.partialorder %v1413, 0.0
        %vm1422 = vcmp.lt.f32.partialorder %v1414, 0.0
        %vm1423 = vcmp.lt.f32.partialorder %v1415, 0.0
        %vm1424 = vcmp.lt.f32.partialorder %v1416, 0.0
        %vm1425 = vcmp.lt.f32.partialorder %v1417, 0.0
        %vm1426 = vcmp.lt.f32.partialorder %v1418, 0.0
        %v1427 = vsel %vm1419, -1.0, 1.0
        %v1428 = vsel %vm1420, -1.0, 1.0
        %v1429 = vsel %vm1421, -1.0, 1.0
        %v1430 = vsel %vm1422, -1.0, 1.0
        %v1431 = vsel %vm1423, -1.0, 1.0
        %v1432 = vsel %vm1424, -1.0, 1.0
        %v1433 = vsel %vm1425, -1.0, 1.0
        %v1434 = vsel %vm1426, -1.0, 1.0
        %v1435 = vand.u32 2147483647, %v1411
        %v1436 = vand.u32 2147483647, %v1412
        %v1437 = vand.u32 2147483647, %v1413
        %v1438 = vand.u32 2147483647, %v1414
        %v1439 = vand.u32 2147483647, %v1415
        %v1440 = vand.u32 2147483647, %v1416
        %v1441 = vand.u32 2147483647, %v1417
        %v1442 = vand.u32 2147483647, %v1418
        %v1443 = vmul.f32 %v1435, 0.3275911
        %v1444 = vmul.f32 %v1436, 0.3275911
        %v1445 = vmul.f32 %v1437, 0.3275911
        %v1446 = vmul.f32 %v1438, 0.3275911
        %v1447 = vmul.f32 %v1439, 0.3275911
        %v1448 = vmul.f32 %v1440, 0.3275911
        %v1449 = vmul.f32 %v1441, 0.3275911
        %v1450 = vmul.f32 %v1442, 0.3275911
        %v1451 = vadd.f32 %v1443, 1.0
        %v1452 = vadd.f32 %v1444, 1.0
        %v1453 = vadd.f32 %v1445, 1.0
        %v1454 = vadd.f32 %v1446, 1.0
        %v1455 = vadd.f32 %v1447, 1.0
        %v1456 = vadd.f32 %v1448, 1.0
        %v1457 = vadd.f32 %v1449, 1.0
        %v1458 = vadd.f32 %v1450, 1.0
        %v1459 = vrcp.pop %v1451
        %v1460 = vmul.f32 1.0, %v1459
        %v1461 = vrcp.pop %v1452
        %v1462 = vmul.f32 1.0, %v1461
        %v1463 = vrcp.pop %v1453
        %v1464 = vmul.f32 1.0, %v1463
        %v1465 = vrcp.pop %v1454
        %v1466 = vmul.f32 1.0, %v1465
        %v1467 = vrcp.pop %v1455
        %v1468 = vmul.f32 1.0, %v1467
        %v1469 = vrcp.pop %v1456
        %v1470 = vmul.f32 1.0, %v1469
        %v1471 = vrcp.pop %v1457
        %v1472 = vmul.f32 1.0, %v1471
        %v1473 = vrcp.pop %v1458
        %v1474 = vmul.f32 1.0, %v1473
        %v1475 = vmul.f32 %v1460, 1.0614054
        %v1476 = vmul.f32 %v1462, 1.0614054
        %v1477 = vmul.f32 %v1464, 1.0614054
        %v1478 = vmul.f32 %v1466, 1.0614054
        %v1479 = vmul.f32 %v1468, 1.0614054
        %v1480 = vmul.f32 %v1470, 1.0614054
        %v1481 = vmul.f32 %v1472, 1.0614054
        %v1482 = vmul.f32 %v1474, 1.0614054
        %v1483 = vadd.f32 %v1475, -1.4531521
        %v1484 = vadd.f32 %v1476, -1.4531521
        %v1485 = vadd.f32 %v1477, -1.4531521
        %v1486 = vadd.f32 %v1478, -1.4531521
        %v1487 = vadd.f32 %v1479, -1.4531521
        %v1488 = vadd.f32 %v1480, -1.4531521
        %v1489 = vadd.f32 %v1481, -1.4531521
        %v1490 = vadd.f32 %v1482, -1.4531521
        %v1491 = vmul.f32 %v1483, %v1460
        %v1492 = vmul.f32 %v1484, %v1462
        %v1493 = vmul.f32 %v1485, %v1464
        %v1494 = vmul.f32 %v1486, %v1466
        %v1495 = vmul.f32 %v1487, %v1468
        %v1496 = vmul.f32 %v1488, %v1470
        %v1497 = vmul.f32 %v1489, %v1472
        %v1498 = vmul.f32 %v1490, %v1474
        %v1499 = vadd.f32 %v1491, 1.4214138
        %v1500 = vadd.f32 %v1492, 1.4214138
        %v1501 = vadd.f32 %v1493, 1.4214138
        %v1502 = vadd.f32 %v1494, 1.4214138
        %v1503 = vadd.f32 %v1495, 1.4214138
        %v1504 = vadd.f32 %v1496, 1.4214138
        %v1505 = vadd.f32 %v1497, 1.4214138
        %v1506 = vadd.f32 %v1498, 1.4214138
        %v1507 = vmul.f32 %v1499, %v1460
        %v1508 = vmul.f32 %v1500, %v1462
        %v1509 = vmul.f32 %v1501, %v1464
        %v1510 = vmul.f32 %v1502, %v1466
        %v1511 = vmul.f32 %v1503, %v1468
        %v1512 = vmul.f32 %v1504, %v1470
        %v1513 = vmul.f32 %v1505, %v1472
        %v1514 = vmul.f32 %v1506, %v1474
        %v1515 = vadd.f32 %v1507, -0.28449672
        %v1516 = vadd.f32 %v1508, -0.28449672
        %v1517 = vadd.f32 %v1509, -0.28449672
        %v1518 = vadd.f32 %v1510, -0.28449672
        %v1519 = vadd.f32 %v1511, -0.28449672
        %v1520 = vadd.f32 %v1512, -0.28449672
        %v1521 = vadd.f32 %v1513, -0.28449672
        %v1522 = vadd.f32 %v1514, -0.28449672
        %v1523 = vmul.f32 %v1515, %v1460
        %v1524 = vmul.f32 %v1516, %v1462
        %v1525 = vmul.f32 %v1517, %v1464
        %v1526 = vmul.f32 %v1518, %v1466
        %v1527 = vmul.f32 %v1519, %v1468
        %v1528 = vmul.f32 %v1520, %v1470
        %v1529 = vmul.f32 %v1521, %v1472
        %v1530 = vmul.f32 %v1522, %v1474
        %v1531 = vadd.f32 %v1523, 0.2548296
        %v1532 = vadd.f32 %v1524, 0.2548296
        %v1533 = vadd.f32 %v1525, 0.2548296
        %v1534 = vadd.f32 %v1526, 0.2548296
        %v1535 = vadd.f32 %v1527, 0.2548296
        %v1536 = vadd.f32 %v1528, 0.2548296
        %v1537 = vadd.f32 %v1529, 0.2548296
        %v1538 = vadd.f32 %v1530, 0.2548296
        %v1539 = vmul.f32 %v1531, %v1460
        %v1540 = vmul.f32 %v1532, %v1462
        %v1541 = vmul.f32 %v1533, %v1464
        %v1542 = vmul.f32 %v1534, %v1466
        %v1543 = vmul.f32 %v1535, %v1468
        %v1544 = vmul.f32 %v1536, %v1470
        %v1545 = vmul.f32 %v1537, %v1472
        %v1546 = vmul.f32 %v1538, %v1474
        %v1547 = vsub.f32 0.0, %v1435
        %v1548 = vsub.f32 0.0, %v1436
        %v1549 = vsub.f32 0.0, %v1437
        %v1550 = vsub.f32 0.0, %v1438
        %v1551 = vsub.f32 0.0, %v1439
        %v1552 = vsub.f32 0.0, %v1440
        %v1553 = vsub.f32 0.0, %v1441
        %v1554 = vsub.f32 0.0, %v1442
        %v1555 = vmul.f32 %v1547, %v1435
        %v1556 = vmul.f32 %v1548, %v1436
        %v1557 = vmul.f32 %v1549, %v1437
        %v1558 = vmul.f32 %v1550, %v1438
        %v1559 = vmul.f32 %v1551, %v1439
        %v1560 = vmul.f32 %v1552, %v1440
        %v1561 = vmul.f32 %v1553, %v1441
        %v1562 = vmul.f32 %v1554, %v1442
        %v1563 = vmul.f32 %v1555, 1.442695
        %v1564 = vpow.pop %v1563
        %v1565 = vmul.f32 %v1556, 1.442695
        %v1566 = vpow.pop %v1565
        %v1567 = vmul.f32 %v1557, 1.442695
        %v1568 = vpow.pop %v1567
        %v1569 = vmul.f32 %v1558, 1.442695
        %v1570 = vpow.pop %v1569
        %v1571 = vmul.f32 %v1559, 1.442695
        %v1572 = vpow.pop %v1571
        %v1573 = vmul.f32 %v1560, 1.442695
        %v1574 = vpow.pop %v1573
        %v1575 = vmul.f32 %v1561, 1.442695
        %v1576 = vpow.pop %v1575
        %v1577 = vmul.f32 %v1562, 1.442695
        %v1578 = vpow.pop %v1577
        %v1579 = vmul.f32 %v1539, %v1564
        %v1580 = vmul.f32 %v1540, %v1566
        %v1581 = vmul.f32 %v1541, %v1568
        %v1582 = vmul.f32 %v1542, %v1570
        %v1583 = vmul.f32 %v1543, %v1572
        %v1584 = vmul.f32 %v1544, %v1574
        %v1585 = vmul.f32 %v1545, %v1576
        %v1586 = vmul.f32 %v1546, %v1578
        %v1587 = vsub.f32 1.0, %v1579
        %v1588 = vsub.f32 1.0, %v1580
        %v1589 = vsub.f32 1.0, %v1581
        %v1590 = vsub.f32 1.0, %v1582
        %v1591 = vsub.f32 1.0, %v1583
        %v1592 = vsub.f32 1.0, %v1584
        %v1593 = vsub.f32 1.0, %v1585
        %v1594 = vsub.f32 1.0, %v1586
        %v1595 = vmul.f32 %v1427, %v1587
        %v1596 = vmul.f32 %v1428, %v1588
        %v1597 = vmul.f32 %v1429, %v1589
        %v1598 = vmul.f32 %v1430, %v1590
        %v1599 = vmul.f32 %v1431, %v1591
        %v1600 = vmul.f32 %v1432, %v1592
        %v1601 = vmul.f32 %v1433, %v1593
        %v1602 = vmul.f32 %v1434, %v1594
        %v1603 = vadd.f32 %v1595, 1.0
        %v1604 = vadd.f32 %v1596, 1.0
        %v1605 = vadd.f32 %v1597, 1.0
        %v1606 = vadd.f32 %v1598, 1.0
        %v1607 = vadd.f32 %v1599, 1.0
        %v1608 = vadd.f32 %v1600, 1.0
        %v1609 = vadd.f32 %v1601, 1.0
        %v1610 = vadd.f32 %v1602, 1.0
        %v1611 = vmul.f32 %v1403, %v1603
        %v1612 = vmul.f32 %v1404, %v1604
        %v1613 = vmul.f32 %v1405, %v1605
        %v1614 = vmul.f32 %v1406, %v1606
        %v1615 = vmul.f32 %v1407, %v1607
        %v1616 = vmul.f32 %v1408, %v1608
        %v1617 = vmul.f32 %v1409, %v1609
        %v1618 = vmul.f32 %v1410, %v1610
        %v1619 = vld [vmem:[#allocation11] sm:$0xff]
        %v1620 = vld [vmem:[#allocation11 + $0x8] sm:$0xff]
        %v1621 = vld [vmem:[#allocation11 + $0x10] sm:$0xff]
        %v1622 = vld [vmem:[#allocation11 + $0x18] sm:$0xff]
        %v1623 = vld [vmem:[#allocation12] sm:$0x1]
        %v1625 = vlaneseq
        %v1626 = vshrl.u32 %v1625, 7
        %v1627 = vsub.s32 0, %v1626
        %v1628 = vrot.slane %v1623, %v1627
        %v1631 = vsel %vm720, %v1611, 0
        %v1634 = vsel %vm720, %v1612, 0
        %v1637 = vsel %vm720, %v1613, 0
        %v1640 = vsel %vm720, %v1614, 0
        %v1643 = vsel %vm720, %v1615, 0
        %v1646 = vsel %vm720, %v1616, 0
        %v1649 = vsel %vm720, %v1617, 0
        %v1652 = vsel %vm720, %v1618, 0
        %v1655 = vsel %vm720, %v1619, 0
        %v1658 = vsel %vm720, %v1620, 0
        %v1661 = vsel %vm720, %v1621, 0
        %v1664 = vsel %vm720, %v1622, 0
        %1666 = vmatprep.subr.mxu0 0.0
        %1667 = vmatpush1.xpose.msra.mxu0 %v1655
        %1668 = vmatprep.subr.mxu0 0.0
        %1669 = vmatpush1.xpose.msra.mxu0 %v1658
        %1670 = vmatprep.subr.mxu0 0.0
        %1671 = vmatpush1.xpose.msra.mxu0 %v1661
        %1672 = vmatprep.subr.mxu0 0.0
        %1673 = vmatpush1.xpose.msra.mxu0 %v1664
        %1674 = vmatprep.subr.mxu0 0.0
        %1675 = vmatpush1.xpose.msra.mxu0 0.0
        %1676 = vmatprep.subr.mxu0 0.0
        %1677 = vmatpush1.xpose.msra.mxu0 0.0
        %1678 = vmatprep.subr.mxu0 0.0
        %1679 = vmatpush1.xpose.msra.mxu0 0.0
        %1680 = vmatprep.subr.mxu0 0.0
        %1681 = vmatpush1.xpose.msra.mxu0 0.0
        %1682 = vmatprep.subr.mxu0 0.0
        %1683 = vmatpush1.xpose.msra.mxu0 0.0
        %1684 = vmatprep.subr.mxu0 0.0
        %1685 = vmatpush1.xpose.msra.mxu0 0.0
        %1686 = vmatprep.subr.mxu0 0.0
        %1687 = vmatpush1.xpose.msra.mxu0 0.0
        %1688 = vmatprep.subr.mxu0 0.0
        %1689 = vmatpush1.xpose.msra.mxu0 0.0
        %1690 = vmatprep.subr.mxu0 0.0
        %1691 = vmatpush1.xpose.msra.mxu0 0.0
        %1692 = vmatprep.subr.mxu0 0.0
        %1693 = vmatpush1.xpose.msra.mxu0 0.0
        %1694 = vmatprep.subr.mxu0 0.0
        %1695 = vmatpush1.xpose.msra.mxu0 0.0
        %1696 = vmatprep.subr.mxu0 0.0
        %1697 = vmatpush1.xpose.msra.mxu0 0.0
        %1698 = vmatprep.subr.mxu0 0.0
        %1699 = vmatpush1.xpose.msra.mxu0 0.0
        %1700 = vmatprep.subr.mxu0 0.0
        %1701 = vmatpush1.xpose.msra.mxu0 0.0
        %1702 = vmatprep.subr.mxu0 0.0
        %1703 = vmatpush1.xpose.msra.mxu0 0.0
        %1704 = vmatprep.subr.mxu0 0.0
        %1705 = vmatpush1.xpose.msra.mxu0 0.0
        %1706 = vmatprep.subr.mxu0 0.0
        %1707 = vmatpush1.xpose.msra.mxu0 0.0
        %1708 = vmatprep.subr.mxu0 0.0
        %1709 = vmatpush1.xpose.msra.mxu0 0.0
        %1710 = vmatprep.subr.mxu0 0.0
        %1711 = vmatpush1.xpose.msra.mxu0 0.0
        %1712 = vmatprep.subr.mxu0 0.0
        %1713 = vmatpush1.xpose.msra.mxu0 0.0
        %1714 = vmatprep.subr.mxu0 0.0
        %1715 = vmatpush1.xpose.msra.mxu0 0.0
        %1716 = vmatprep.subr.mxu0 0.0
        %1717 = vmatpush1.xpose.msra.mxu0 0.0
        %1718 = vmatprep.subr.mxu0 0.0
        %1719 = vmatpush1.xpose.msra.mxu0 0.0
        %1720 = vmatprep.subr.mxu0 0.0
        %1721 = vmatpush1.xpose.msra.mxu0 0.0
        %1722 = vmatprep.subr.mxu0 0.0
        %1723 = vmatpush1.xpose.msra.mxu0 0.0
        %1724 = vmatprep.subr.mxu0 0.0
        %1725 = vmatpush1.xpose.msra.mxu0 0.0
        %1726 = vmatprep.subr.mxu0 0.0
        %1727 = vmatpush1.xpose.msra.mxu0 0.0
        %1728 = vmatprep.subr.mxu0 0.0
        %1729 = vmatpush1.xpose.msra.mxu0 0.0
        %1730 = vmatprep.mubr.f32.mxu0 0.0
        %1731 = vmatmul.mubr.f32.gmra.mrb[0].mxu0 %v1631
        %v1732 = vpop.f32.mrb[0].mxu0
        %v1733 = vadd.f32 %v1628, %v1732
        %v1734 = vpop.f32.mrb[0].mxu0
        %1735 = vmatprep.mubr.f32.mxu0 0.0
        %1736 = vmatmul.mubr.f32.gmra.mrb[0].mxu0 %v1634
        %v1737 = vpop.f32.mrb[0].mxu0
        %v1738 = vadd.f32 %v1628, %v1737
        %v1739 = vpop.f32.mrb[0].mxu0
        %1740 = vmatprep.mubr.f32.mxu0 0.0
        %1741 = vmatmul.mubr.f32.gmra.mrb[0].mxu0 %v1637
        %v1742 = vpop.f32.mrb[0].mxu0
        %v1743 = vadd.f32 %v1628, %v1742
        %v1744 = vpop.f32.mrb[0].mxu0
        %1745 = vmatprep.mubr.f32.mxu0 0.0
        %1746 = vmatmul.mubr.f32.gmra.mrb[0].mxu0 %v1640
        %v1747 = vpop.f32.mrb[0].mxu0
        %v1748 = vadd.f32 %v1628, %v1747
        %v1749 = vpop.f32.mrb[0].mxu0
        %1750 = vmatprep.mubr.f32.mxu0 0.0
        %1751 = vmatmul.mubr.f32.gmra.mrb[0].mxu0 %v1643
        %v1752 = vpop.f32.mrb[0].mxu0
        %v1753 = vadd.f32 %v1628, %v1752
        %v1754 = vpop.f32.mrb[0].mxu0
        %1755 = vmatprep.mubr.f32.mxu0 0.0
        %1756 = vmatmul.mubr.f32.gmra.mrb[0].mxu0 %v1646
        %v1757 = vpop.f32.mrb[0].mxu0
        %v1758 = vadd.f32 %v1628, %v1757
        %v1759 = vpop.f32.mrb[0].mxu0
        %1760 = vmatprep.mubr.f32.mxu0 0.0
        %1761 = vmatmul.mubr.f32.gmra.mrb[0].mxu0 %v1649
        %v1762 = vpop.f32.mrb[0].mxu0
        %v1763 = vadd.f32 %v1628, %v1762
        %v1764 = vpop.f32.mrb[0].mxu0
        %1765 = vmatprep.mubr.f32.mxu0 0.0
        %1766 = vmatmul.mubr.f32.gmra.mrb[0].mxu0 %v1652
        %v1767 = vpop.f32.mrb[0].mxu0
        %v1768 = vadd.f32 %v1628, %v1767
        %v1769 = vpop.f32.mrb[0].mxu0
        %1770 = vdwg.mxu0
        %v1771 = vand.u32 2147483647, %v1733
        %v1772 = vand.u32 2147483647, %v1738
        %v1773 = vand.u32 2147483647, %v1743
        %v1774 = vand.u32 2147483647, %v1748
        %v1775 = vand.u32 2147483647, %v1753
        %v1776 = vand.u32 2147483647, %v1758
        %v1777 = vand.u32 2147483647, %v1763
        %v1778 = vand.u32 2147483647, %v1768
        %v1779 = vsub.f32 0.0, %v1771
        %v1780 = vsub.f32 0.0, %v1772
        %v1781 = vsub.f32 0.0, %v1773
        %v1782 = vsub.f32 0.0, %v1774
        %v1783 = vsub.f32 0.0, %v1775
        %v1784 = vsub.f32 0.0, %v1776
        %v1785 = vsub.f32 0.0, %v1777
        %v1786 = vsub.f32 0.0, %v1778
        %v1787 = vmul.f32 %v1779, 1.442695
        %v1788 = vpow.pop %v1787
        %v1789 = vmul.f32 %v1780, 1.442695
        %v1790 = vpow.pop %v1789
        %v1791 = vmul.f32 %v1781, 1.442695
        %v1792 = vpow.pop %v1791
        %v1793 = vmul.f32 %v1782, 1.442695
        %v1794 = vpow.pop %v1793
        %v1795 = vmul.f32 %v1783, 1.442695
        %v1796 = vpow.pop %v1795
        %v1797 = vmul.f32 %v1784, 1.442695
        %v1798 = vpow.pop %v1797
        %v1799 = vmul.f32 %v1785, 1.442695
        %v1800 = vpow.pop %v1799
        %v1801 = vmul.f32 %v1786, 1.442695
        %v1802 = vpow.pop %v1801
        %vm1803 = vcmp.ge.f32.partialorder %v1733, 0.0
        %vm1804 = vcmp.ge.f32.partialorder %v1738, 0.0
        %vm1805 = vcmp.ge.f32.partialorder %v1743, 0.0
        %vm1806 = vcmp.ge.f32.partialorder %v1748, 0.0
        %vm1807 = vcmp.ge.f32.partialorder %v1753, 0.0
        %vm1808 = vcmp.ge.f32.partialorder %v1758, 0.0
        %vm1809 = vcmp.ge.f32.partialorder %v1763, 0.0
        %vm1810 = vcmp.ge.f32.partialorder %v1768, 0.0
        %v1811 = vadd.f32 %v1788, 1.0
        %v1812 = vadd.f32 %v1790, 1.0
        %v1813 = vadd.f32 %v1792, 1.0
        %v1814 = vadd.f32 %v1794, 1.0
        %v1815 = vadd.f32 %v1796, 1.0
        %v1816 = vadd.f32 %v1798, 1.0
        %v1817 = vadd.f32 %v1800, 1.0
        %v1818 = vadd.f32 %v1802, 1.0
        %v1819 = vrcp.pop %v1811
        %v1820 = vmul.f32 1.0, %v1819
        %v1821 = vrcp.pop %v1812
        %v1822 = vmul.f32 1.0, %v1821
        %v1823 = vrcp.pop %v1813
        %v1824 = vmul.f32 1.0, %v1823
        %v1825 = vrcp.pop %v1814
        %v1826 = vmul.f32 1.0, %v1825
        %v1827 = vrcp.pop %v1815
        %v1828 = vmul.f32 1.0, %v1827
        %v1829 = vrcp.pop %v1816
        %v1830 = vmul.f32 1.0, %v1829
        %v1831 = vrcp.pop %v1817
        %v1832 = vmul.f32 1.0, %v1831
        %v1833 = vrcp.pop %v1818
        %v1834 = vmul.f32 1.0, %v1833
        %v1835 = vmul.f32 %v1788, %v1819
        %v1836 = vmul.f32 %v1790, %v1821
        %v1837 = vmul.f32 %v1792, %v1823
        %v1838 = vmul.f32 %v1794, %v1825
        %v1839 = vmul.f32 %v1796, %v1827
        %v1840 = vmul.f32 %v1798, %v1829
        %v1841 = vmul.f32 %v1800, %v1831
        %v1842 = vmul.f32 %v1802, %v1833
        %v1843 = vsel %vm1803, %v1820, %v1835
        %v1844 = vsel %vm1804, %v1822, %v1836
        %v1845 = vsel %vm1805, %v1824, %v1837
        %v1846 = vsel %vm1806, %v1826, %v1838
        %v1847 = vsel %vm1807, %v1828, %v1839
        %v1848 = vsel %vm1808, %v1830, %v1840
        %v1849 = vsel %vm1809, %v1832, %v1841
        %v1850 = vsel %vm1810, %v1834, %v1842
        %v1851 = vmul.f32 %v1611, %v1843
        %v1852 = vmul.f32 %v1612, %v1844
        %v1853 = vmul.f32 %v1613, %v1845
        %v1854 = vmul.f32 %v1614, %v1846
        %v1855 = vmul.f32 %v1615, %v1847
        %v1856 = vmul.f32 %v1616, %v1848
        %v1857 = vmul.f32 %v1617, %v1849
        %v1858 = vmul.f32 %v1618, %v1850
        %v1859 = vadd.f32 %v1851, %v704
        %v1860 = vadd.f32 %v1852, %v705
        %v1861 = vadd.f32 %v1853, %v706
        %v1862 = vadd.f32 %v1854, %v707
        %v1863 = vadd.f32 %v1855, %v708
        %v1864 = vadd.f32 %v1856, %v709
        %v1865 = vadd.f32 %v1857, %v710
        %v1866 = vadd.f32 %v1858, %v711
        %v1867 = vld [vmem:[%s8] sm:$0xff]
        %v1868 = vld [vmem:[%s8 + $0x8] sm:$0xff]
        %v1869 = vld [vmem:[%s8 + $0x10] sm:$0xff]
        %v1870 = vld [vmem:[%s8 + $0x18] sm:$0xff]
        %v1871 = vld [vmem:[%s8 + $0x20] sm:$0xff]
        %v1872 = vld [vmem:[%s8 + $0x28] sm:$0xff]
        %v1873 = vld [vmem:[%s8 + $0x30] sm:$0xff]
        %v1874 = vld [vmem:[%s8 + $0x38] sm:$0xff]
        %v1876 = vsel %vm720, %v1859, 0
        %v1879 = vsel %vm720, %v1860, 0
        %v1882 = vsel %vm720, %v1861, 0
        %v1885 = vsel %vm720, %v1862, 0
        %v1888 = vsel %vm720, %v1863, 0
        %v1891 = vsel %vm720, %v1864, 0
        %v1894 = vsel %vm720, %v1865, 0
        %v1897 = vsel %vm720, %v1866, 0
        %v1900 = vsel %vm720, %v1867, 0
        %v1903 = vsel %vm720, %v1868, 0
        %v1906 = vsel %vm720, %v1869, 0
        %v1909 = vsel %vm720, %v1870, 0
        %v1912 = vsel %vm720, %v1871, 0
        %v1915 = vsel %vm720, %v1872, 0
        %v1918 = vsel %vm720, %v1873, 0
        %v1921 = vsel %vm720, %v1874, 0
        %1923 = vmatprep.subr.mxu0 0.0
        %1924 = vmatpush1.xpose.msra.mxu0 %v1900
        %1925 = vmatprep.subr.mxu0 0.0
        %1926 = vmatpush1.xpose.msra.mxu0 %v1903
        %1927 = vmatprep.subr.mxu0 0.0
        %1928 = vmatpush1.xpose.msra.mxu0 %v1906
        %1929 = vmatprep.subr.mxu0 0.0
        %1930 = vmatpush1.xpose.msra.mxu0 %v1909
        %1931 = vmatprep.subr.mxu0 0.0
        %1932 = vmatpush1.xpose.msra.mxu0 %v1912
        %1933 = vmatprep.subr.mxu0 0.0
        %1934 = vmatpush1.xpose.msra.mxu0 %v1915
        %1935 = vmatprep.subr.mxu0 0.0
        %1936 = vmatpush1.xpose.msra.mxu0 %v1918
        %1937 = vmatprep.subr.mxu0 0.0
        %1938 = vmatpush1.xpose.msra.mxu0 %v1921
        %1939 = vmatprep.subr.mxu0 0.0
        %1940 = vmatpush1.xpose.msra.mxu0 0.0
        %1941 = vmatprep.subr.mxu0 0.0
        %1942 = vmatpush1.xpose.msra.mxu0 0.0
        %1943 = vmatprep.subr.mxu0 0.0
        %1944 = vmatpush1.xpose.msra.mxu0 0.0
        %1945 = vmatprep.subr.mxu0 0.0
        %1946 = vmatpush1.xpose.msra.mxu0 0.0
        %1947 = vmatprep.subr.mxu0 0.0
        %1948 = vmatpush1.xpose.msra.mxu0 0.0
        %1949 = vmatprep.subr.mxu0 0.0
        %1950 = vmatpush1.xpose.msra.mxu0 0.0
        %1951 = vmatprep.subr.mxu0 0.0
        %1952 = vmatpush1.xpose.msra.mxu0 0.0
        %1953 = vmatprep.subr.mxu0 0.0
        %1954 = vmatpush1.xpose.msra.mxu0 0.0
        %1955 = vmatprep.subr.mxu0 0.0
        %1956 = vmatpush1.xpose.msra.mxu0 0.0
        %1957 = vmatprep.subr.mxu0 0.0
        %1958 = vmatpush1.xpose.msra.mxu0 0.0
        %1959 = vmatprep.subr.mxu0 0.0
        %1960 = vmatpush1.xpose.msra.mxu0 0.0
        %1961 = vmatprep.subr.mxu0 0.0
        %1962 = vmatpush1.xpose.msra.mxu0 0.0
        %1963 = vmatprep.subr.mxu0 0.0
        %1964 = vmatpush1.xpose.msra.mxu0 0.0
        %1965 = vmatprep.subr.mxu0 0.0
        %1966 = vmatpush1.xpose.msra.mxu0 0.0
        %1967 = vmatprep.subr.mxu0 0.0
        %1968 = vmatpush1.xpose.msra.mxu0 0.0
        %1969 = vmatprep.subr.mxu0 0.0
        %1970 = vmatpush1.xpose.msra.mxu0 0.0
        %1971 = vmatprep.subr.mxu0 0.0
        %1972 = vmatpush1.xpose.msra.mxu0 0.0
        %1973 = vmatprep.subr.mxu0 0.0
        %1974 = vmatpush1.xpose.msra.mxu0 0.0
        %1975 = vmatprep.subr.mxu0 0.0
        %1976 = vmatpush1.xpose.msra.mxu0 0.0
        %1977 = vmatprep.subr.mxu0 0.0
        %1978 = vmatpush1.xpose.msra.mxu0 0.0
        %1979 = vmatprep.subr.mxu0 0.0
        %1980 = vmatpush1.xpose.msra.mxu0 0.0
        %1981 = vmatprep.subr.mxu0 0.0
        %1982 = vmatpush1.xpose.msra.mxu0 0.0
        %1983 = vmatprep.subr.mxu0 0.0
        %1984 = vmatpush1.xpose.msra.mxu0 0.0
        %1985 = vmatprep.subr.mxu0 0.0
        %1986 = vmatpush1.xpose.msra.mxu0 0.0
        %1987 = vmatprep.mubr.f32.mxu0 0.0
        %1988 = vmatmul.mubr.f32.gmra.mrb[0].mxu0 %v1876
        %v1989 = vpop.f32.mrb[0].mxu0
        %v1990 = vadd.f32 0.0, %v1989
        %v1991 = vpop.f32.mrb[0].mxu0
        %1992 = vmatprep.mubr.f32.mxu0 0.0
        %1993 = vmatmul.mubr.f32.gmra.mrb[0].mxu0 %v1879
        %v1994 = vpop.f32.mrb[0].mxu0
        %v1995 = vadd.f32 0.0, %v1994
        %v1996 = vpop.f32.mrb[0].mxu0
        %1997 = vmatprep.mubr.f32.mxu0 0.0
        %1998 = vmatmul.mubr.f32.gmra.mrb[0].mxu0 %v1882
        %v1999 = vpop.f32.mrb[0].mxu0
        %v2000 = vadd.f32 0.0, %v1999
        %v2001 = vpop.f32.mrb[0].mxu0
        %2002 = vmatprep.mubr.f32.mxu0 0.0
        %2003 = vmatmul.mubr.f32.gmra.mrb[0].mxu0 %v1885
        %v2004 = vpop.f32.mrb[0].mxu0
        %v2005 = vadd.f32 0.0, %v2004
        %v2006 = vpop.f32.mrb[0].mxu0
        %2007 = vmatprep.mubr.f32.mxu0 0.0
        %2008 = vmatmul.mubr.f32.gmra.mrb[0].mxu0 %v1888
        %v2009 = vpop.f32.mrb[0].mxu0
        %v2010 = vadd.f32 0.0, %v2009
        %v2011 = vpop.f32.mrb[0].mxu0
        %2012 = vmatprep.mubr.f32.mxu0 0.0
        %2013 = vmatmul.mubr.f32.gmra.mrb[0].mxu0 %v1891
        %v2014 = vpop.f32.mrb[0].mxu0
        %v2015 = vadd.f32 0.0, %v2014
        %v2016 = vpop.f32.mrb[0].mxu0
        %2017 = vmatprep.mubr.f32.mxu0 0.0
        %2018 = vmatmul.mubr.f32.gmra.mrb[0].mxu0 %v1894
        %v2019 = vpop.f32.mrb[0].mxu0
        %v2020 = vadd.f32 0.0, %v2019
        %v2021 = vpop.f32.mrb[0].mxu0
        %2022 = vmatprep.mubr.f32.mxu0 0.0
        %2023 = vmatmul.mubr.f32.gmra.mrb[0].mxu0 %v1897
        %v2024 = vpop.f32.mrb[0].mxu0
        %v2025 = vadd.f32 0.0, %v2024
        %v2026 = vpop.f32.mrb[0].mxu0
        %2027 = vdwg.mxu0
        %2028 = vst.msk [vmem:[#allocation4] sm:$0xff] %vm720, %v1990
        %2029 = vst.msk [vmem:[#allocation4 + $0x8] sm:$0xff] %vm720, %v1995
        %2030 = vst.msk [vmem:[#allocation4 + $0x10] sm:$0xff] %vm720, %v2000
        %2031 = vst.msk [vmem:[#allocation4 + $0x18] sm:$0xff] %vm720, %v2005
        %2032 = vst.msk [vmem:[#allocation4 + $0x20] sm:$0xff] %vm720, %v2010
        %2033 = vst.msk [vmem:[#allocation4 + $0x28] sm:$0xff] %vm720, %v2015
        %2034 = vst.msk [vmem:[#allocation4 + $0x30] sm:$0xff] %vm720, %v2020
        %2035 = vst.msk [vmem:[#allocation4 + $0x38] sm:$0xff] %vm720, %v2025
        %2044 = vrot.lane.b32.xlu0 %v1990, 96
        %v2045 = vpop.permute.xlu0 %2044
        %2046 = vrot.lane.b32.xlu0 %v1995, 96
        %v2047 = vpop.permute.xlu0 %2046
        %2048 = vrot.lane.b32.xlu0 %v2000, 96
        %v2049 = vpop.permute.xlu0 %2048
        %2050 = vrot.lane.b32.xlu0 %v2005, 96
        %v2051 = vpop.permute.xlu0 %2050
        %2052 = vrot.lane.b32.xlu0 %v2010, 96
        %v2053 = vpop.permute.xlu0 %2052
        %2054 = vrot.lane.b32.xlu0 %v2015, 96
        %v2055 = vpop.permute.xlu0 %2054
        %2056 = vrot.lane.b32.xlu0 %v2020, 96
        %v2057 = vpop.permute.xlu0 %2056
        %2058 = vrot.lane.b32.xlu0 %v2025, 96
        %v2059 = vpop.permute.xlu0 %2058
        %2068 = vst.msk [vmem:[#allocation5] sm:$0xff] %vm720, %v2045
        %2069 = vst.msk [vmem:[#allocation5 + $0x8] sm:$0xff] %vm720, %v2047
        %2070 = vst.msk [vmem:[#allocation5 + $0x10] sm:$0xff] %vm720, %v2049
        %2071 = vst.msk [vmem:[#allocation5 + $0x18] sm:$0xff] %vm720, %v2051
        %2072 = vst.msk [vmem:[#allocation5 + $0x20] sm:$0xff] %vm720, %v2053
        %2073 = vst.msk [vmem:[#allocation5 + $0x28] sm:$0xff] %vm720, %v2055
        %2074 = vst.msk [vmem:[#allocation5 + $0x30] sm:$0xff] %vm720, %v2057
        %2075 = vst.msk [vmem:[#allocation5 + $0x38] sm:$0xff] %vm720, %v2059
        %v2076 = vld [vmem:[#allocation4] sm:$0xff]
        %v2077 = vld [vmem:[%s923] sm:$0xff]
        %v2078 = vsel %vm703, %v2076, %v2077
        %2079 = vst.msk [vmem:[#allocation2] sm:$0xff] %vm720, %v2078
        %v2080 = vld [vmem:[#allocation5] sm:$0xff]
        %v2081 = vld [vmem:[%s928] sm:$0xff]
        %v2082 = vsel %vm703, %v2080, %v2081
        %2083 = vst.msk [vmem:[#allocation3] sm:$0xff] %vm720, %v2082
        %v2084 = vld [vmem:[%s932] sm:$0xff]
        %v2085 = vld [vmem:[%s934] sm:$0xff]
        %v2086 = vsel %vm703, %v2084, %v2085
        %2087 = vst.msk [vmem:[%s937] sm:$0xff] %vm720, %v2086
        %v2088 = vld [vmem:[%s939] sm:$0xff]
        %v2089 = vld [vmem:[%s941] sm:$0xff]
        %v2090 = vsel %vm703, %v2088, %v2089
        %2091 = vst.msk [vmem:[%s944] sm:$0xff] %vm720, %v2090
        %v2092 = vld [vmem:[%s946] sm:$0xff]
        %v2093 = vld [vmem:[%s948] sm:$0xff]
        %v2094 = vsel %vm703, %v2092, %v2093
        %2095 = vst.msk [vmem:[%s951] sm:$0xff] %vm720, %v2094
        %v2096 = vld [vmem:[%s953] sm:$0xff]
        %v2097 = vld [vmem:[%s955] sm:$0xff]
        %v2098 = vsel %vm703, %v2096, %v2097
        %2099 = vst.msk [vmem:[%s958] sm:$0xff] %vm720, %v2098
        %v2100 = vld [vmem:[%s960] sm:$0xff]
        %v2101 = vld [vmem:[%s962] sm:$0xff]
        %v2102 = vsel %vm703, %v2100, %v2101
        %2103 = vst.msk [vmem:[%s965] sm:$0xff] %vm720, %v2102
        %v2104 = vld [vmem:[%s967] sm:$0xff]
        %v2105 = vld [vmem:[%s969] sm:$0xff]
        %v2106 = vsel %vm703, %v2104, %v2105
        %2107 = vst.msk [vmem:[%s972] sm:$0xff] %vm720, %v2106
        %v2108 = vld [vmem:[%s962] sm:$0xff]
        %v2109 = vld [vmem:[%s960] sm:$0xff]
        %v2110 = vsel %vm703, %v2108, %v2109
        %2111 = vst.msk [vmem:[%s977] sm:$0xff] %vm720, %v2110
        %v2112 = vld [vmem:[%s969] sm:$0xff]
        %v2113 = vld [vmem:[%s967] sm:$0xff]
        %v2114 = vsel %vm703, %v2112, %v2113
        %2115 = vst.msk [vmem:[%s982] sm:$0xff] %vm720, %v2114
        %v2116 = vld [vmem:[%s948] sm:$0xff]
        %v2117 = vld [vmem:[%s946] sm:$0xff]
        %v2118 = vsel %vm703, %v2116, %v2117
        %2119 = vst.msk [vmem:[%s987] sm:$0xff] %vm720, %v2118
        %v2120 = vld [vmem:[%s955] sm:$0xff]
        %v2121 = vld [vmem:[%s953] sm:$0xff]
        %v2122 = vsel %vm703, %v2120, %v2121
        %2123 = vst.msk [vmem:[%s992] sm:$0xff] %vm720, %v2122
        %v2124 = vld [vmem:[%s934] sm:$0xff]
        %v2125 = vld [vmem:[%s932] sm:$0xff]
        %v2126 = vsel %vm703, %v2124, %v2125
        %2127 = vst.msk [vmem:[%s997] sm:$0xff] %vm720, %v2126
        %v2128 = vld [vmem:[%s941] sm:$0xff]
        %v2129 = vld [vmem:[%s939] sm:$0xff]
        %v2130 = vsel %vm703, %v2128, %v2129
        %2131 = vst.msk [vmem:[%s1002] sm:$0xff] %vm720, %v2130
        %v2132 = vld [vmem:[%s923] sm:$0xff]
        %v2133 = vld [vmem:[#allocation4] sm:$0xff]
        %v2134 = vsel %vm703, %v2132, %v2133
        %2135 = vst.msk [vmem:[%s1007] sm:$0xff] %vm720, %v2134
        %v2136 = vld [vmem:[%s928] sm:$0xff]
        %v2137 = vld [vmem:[#allocation5] sm:$0xff]
        %v2138 = vsel %vm703, %v2136, %v2137
        %2139 = vst.msk [vmem:[%s1012] sm:$0xff] %vm720, %v2138
        %v2140 = vld [vmem:[#allocation14] sm:$0x1]
        %v2142 = vlaneseq
        %v2143 = vshrl.u32 %v2142, 7
        %v2144 = vsub.s32 0, %v2143
        %v2145 = vrot.slane %v2140, %v2144
        %v2147 = vld [vmem:[#allocation15] sm:$0x1]
        %v2149 = vlaneseq
        %v2150 = vshrl.u32 %v2149, 7
        %v2151 = vsub.s32 0, %v2150
        %v2152 = vrot.slane %v2147, %v2151
        %v2154 = vld [vmem:[#allocation2] sm:$0xff]
        %v2155 = vld [vmem:[#allocation3] sm:$0xff]
        %v2156 = vmul.f32 %v2145, 0.0
        %v2157 = vmul.f32 %v2152, 0.0
        %v2158 = vsub.f32 %v2156, %v2157
        %v2159 = vadd.f32 %v2158, %v2154
        %v2160 = vadd.f32 %v2156, %v2157
        %v2161 = vadd.f32 %v2160, %v2155
        %2162 = vst.msk [vmem:[#allocation4] sm:$0xff] %vm720, %v2159
        %2163 = vst.msk [vmem:[#allocation5] sm:$0xff] %vm720, %v2161
        %v2164 = vld [vmem:[%s937] sm:$0xff]
        %v2165 = vld [vmem:[%s944] sm:$0xff]
        %v2166 = vmul.f32 %v2145, %v2159
        %v2167 = vmul.f32 %v2152, %v2161
        %v2168 = vsub.f32 %v2166, %v2167
        %v2169 = vadd.f32 %v2168, %v2164
        %v2170 = vmul.f32 %v2145, %v2161
        %v2171 = vmul.f32 %v2152, %v2159
        %v2172 = vadd.f32 %v2170, %v2171
        %v2173 = vadd.f32 %v2172, %v2165
        %2174 = vst.msk [vmem:[%s932] sm:$0xff] %vm720, %v2169
        %2175 = vst.msk [vmem:[%s939] sm:$0xff] %vm720, %v2173
        %v2176 = vld [vmem:[%s951] sm:$0xff]
        %v2177 = vld [vmem:[%s958] sm:$0xff]
        %v2178 = vmul.f32 %v2145, %v2169
        %v2179 = vmul.f32 %v2152, %v2173
        %v2180 = vsub.f32 %v2178, %v2179
        %v2181 = vadd.f32 %v2180, %v2176
        %v2182 = vmul.f32 %v2145, %v2173
        %v2183 = vmul.f32 %v2152, %v2169
        %v2184 = vadd.f32 %v2182, %v2183
        %v2185 = vadd.f32 %v2184, %v2177
        %2186 = vst.msk [vmem:[%s946] sm:$0xff] %vm720, %v2181
        %2187 = vst.msk [vmem:[%s953] sm:$0xff] %vm720, %v2185
        %v2188 = vld [vmem:[%s965] sm:$0xff]
        %v2189 = vld [vmem:[%s972] sm:$0xff]
        %v2190 = vmul.f32 %v2145, %v2181
        %v2191 = vmul.f32 %v2152, %v2185
        %v2192 = vsub.f32 %v2190, %v2191
        %v2193 = vadd.f32 %v2192, %v2188
        %v2194 = vmul.f32 %v2145, %v2185
        %v2195 = vmul.f32 %v2152, %v2181
        %v2196 = vadd.f32 %v2194, %v2195
        %v2197 = vadd.f32 %v2196, %v2189
        %2198 = vst.msk [vmem:[%s960] sm:$0xff] %vm720, %v2193
        %2199 = vst.msk [vmem:[%s967] sm:$0xff] %vm720, %v2197
        %v2200 = vld [vmem:[%s977] sm:$0xff]
        %v2201 = vld [vmem:[%s982] sm:$0xff]
        %v2202 = vmul.f32 %v2145, %v2193
        %v2203 = vmul.f32 %v2152, %v2197
        %v2204 = vsub.f32 %v2202, %v2203
        %v2205 = vadd.f32 %v2204, %v2200
        %v2206 = vmul.f32 %v2145, %v2197
        %v2207 = vmul.f32 %v2152, %v2193
        %v2208 = vadd.f32 %v2206, %v2207
        %v2209 = vadd.f32 %v2208, %v2201
        %2210 = vst.msk [vmem:[%s962] sm:$0xff] %vm720, %v2205
        %2211 = vst.msk [vmem:[%s969] sm:$0xff] %vm720, %v2209
        %v2212 = vld [vmem:[%s987] sm:$0xff]
        %v2213 = vld [vmem:[%s992] sm:$0xff]
        %v2214 = vmul.f32 %v2145, %v2205
        %v2215 = vmul.f32 %v2152, %v2209
        %v2216 = vsub.f32 %v2214, %v2215
        %v2217 = vadd.f32 %v2216, %v2212
        %v2218 = vmul.f32 %v2145, %v2209
        %v2219 = vmul.f32 %v2152, %v2205
        %v2220 = vadd.f32 %v2218, %v2219
        %v2221 = vadd.f32 %v2220, %v2213
        %2222 = vst.msk [vmem:[%s948] sm:$0xff] %vm720, %v2217
        %2223 = vst.msk [vmem:[%s955] sm:$0xff] %vm720, %v2221
        %v2224 = vld [vmem:[%s997] sm:$0xff]
        %v2225 = vld [vmem:[%s1002] sm:$0xff]
        %v2226 = vmul.f32 %v2145, %v2217
        %v2227 = vmul.f32 %v2152, %v2221
        %v2228 = vsub.f32 %v2226, %v2227
        %v2229 = vadd.f32 %v2228, %v2224
        %v2230 = vmul.f32 %v2145, %v2221
        %v2231 = vmul.f32 %v2152, %v2217
        %v2232 = vadd.f32 %v2230, %v2231
        %v2233 = vadd.f32 %v2232, %v2225
        %2234 = vst.msk [vmem:[%s934] sm:$0xff] %vm720, %v2229
        %2235 = vst.msk [vmem:[%s941] sm:$0xff] %vm720, %v2233
        %v2236 = vld [vmem:[%s1007] sm:$0xff]
        %v2237 = vld [vmem:[%s1012] sm:$0xff]
        %v2238 = vmul.f32 %v2145, %v2229
        %v2239 = vmul.f32 %v2152, %v2233
        %v2240 = vsub.f32 %v2238, %v2239
        %v2241 = vadd.f32 %v2240, %v2236
        %v2242 = vmul.f32 %v2145, %v2233
        %v2243 = vmul.f32 %v2152, %v2229
        %v2244 = vadd.f32 %v2242, %v2243
        %v2245 = vadd.f32 %v2244, %v2237
        %2246 = vst.msk [vmem:[%s923] sm:$0xff] %vm720, %v2241
        %2247 = vst.msk [vmem:[%s928] sm:$0xff] %vm720, %v2245
        %v2248 = vld [vmem:[#allocation4] sm:$0xff]
        %v2249 = vld [vmem:[%s923] sm:$0xff]
        %v2250 = vsel %vm703, %v2248, %v2249
        %2251 = vst.msk [vmem:[#allocation2] sm:$0xff] %vm720, %v2250
        %v2252 = vld [vmem:[#allocation5] sm:$0xff]
        %v2253 = vld [vmem:[%s928] sm:$0xff]
        %v2254 = vsel %vm703, %v2252, %v2253
        %2255 = vst.msk [vmem:[#allocation3] sm:$0xff] %vm720, %v2254
        %v2256 = vld [vmem:[%s932] sm:$0xff]
        %v2257 = vld [vmem:[%s934] sm:$0xff]
        %v2258 = vsel %vm703, %v2256, %v2257
        %2259 = vst.msk [vmem:[%s937] sm:$0xff] %vm720, %v2258
        %v2260 = vld [vmem:[%s939] sm:$0xff]
        %v2261 = vld [vmem:[%s941] sm:$0xff]
        %v2262 = vsel %vm703, %v2260, %v2261
        %2263 = vst.msk [vmem:[%s944] sm:$0xff] %vm720, %v2262
        %v2264 = vld [vmem:[%s946] sm:$0xff]
        %v2265 = vld [vmem:[%s948] sm:$0xff]
        %v2266 = vsel %vm703, %v2264, %v2265
        %2267 = vst.msk [vmem:[%s951] sm:$0xff] %vm720, %v2266
        %v2268 = vld [vmem:[%s953] sm:$0xff]
        %v2269 = vld [vmem:[%s955] sm:$0xff]
        %v2270 = vsel %vm703, %v2268, %v2269
        %2271 = vst.msk [vmem:[%s958] sm:$0xff] %vm720, %v2270
        %v2272 = vld [vmem:[%s960] sm:$0xff]
        %v2273 = vld [vmem:[%s962] sm:$0xff]
        %v2274 = vsel %vm703, %v2272, %v2273
        %2275 = vst.msk [vmem:[%s965] sm:$0xff] %vm720, %v2274
        %v2276 = vld [vmem:[%s967] sm:$0xff]
        %v2277 = vld [vmem:[%s969] sm:$0xff]
        %v2278 = vsel %vm703, %v2276, %v2277
        %2279 = vst.msk [vmem:[%s972] sm:$0xff] %vm720, %v2278
        %v2280 = vld [vmem:[%s962] sm:$0xff]
        %v2281 = vld [vmem:[%s960] sm:$0xff]
        %v2282 = vsel %vm703, %v2280, %v2281
        %2283 = vst.msk [vmem:[%s977] sm:$0xff] %vm720, %v2282
        %v2284 = vld [vmem:[%s969] sm:$0xff]
        %v2285 = vld [vmem:[%s967] sm:$0xff]
        %v2286 = vsel %vm703, %v2284, %v2285
        %2287 = vst.msk [vmem:[%s982] sm:$0xff] %vm720, %v2286
        %v2288 = vld [vmem:[%s948] sm:$0xff]
        %v2289 = vld [vmem:[%s946] sm:$0xff]
        %v2290 = vsel %vm703, %v2288, %v2289
        %2291 = vst.msk [vmem:[%s987] sm:$0xff] %vm720, %v2290
        %v2292 = vld [vmem:[%s955] sm:$0xff]
        %v2293 = vld [vmem:[%s953] sm:$0xff]
        %v2294 = vsel %vm703, %v2292, %v2293
        %2295 = vst.msk [vmem:[%s992] sm:$0xff] %vm720, %v2294
        %v2296 = vld [vmem:[%s934] sm:$0xff]
        %v2297 = vld [vmem:[%s932] sm:$0xff]
        %v2298 = vsel %vm703, %v2296, %v2297
        %2299 = vst.msk [vmem:[%s997] sm:$0xff] %vm720, %v2298
        %v2300 = vld [vmem:[%s941] sm:$0xff]
        %v2301 = vld [vmem:[%s939] sm:$0xff]
        %v2302 = vsel %vm703, %v2300, %v2301
        %2303 = vst.msk [vmem:[%s1002] sm:$0xff] %vm720, %v2302
        %v2304 = vld [vmem:[%s923] sm:$0xff]
        %v2305 = vld [vmem:[#allocation4] sm:$0xff]
        %v2306 = vsel %vm703, %v2304, %v2305
        %2307 = vst.msk [vmem:[%s1007] sm:$0xff] %vm720, %v2306
        %v2308 = vld [vmem:[%s928] sm:$0xff]
        %v2309 = vld [vmem:[#allocation5] sm:$0xff]
        %v2310 = vsel %vm703, %v2308, %v2309
        %2311 = vst.msk [vmem:[%s1012] sm:$0xff] %vm720, %v2310
        %v2312 = vld [vmem:[#allocation2] sm:$0xff]
        %v2313 = vld [vmem:[#allocation2 + $0x8] sm:$0xff]
        %v2314 = vld [vmem:[#allocation2 + $0x10] sm:$0xff]
        %v2315 = vld [vmem:[#allocation2 + $0x18] sm:$0xff]
        %v2316 = vld [vmem:[#allocation2 + $0x20] sm:$0xff]
        %v2317 = vld [vmem:[#allocation2 + $0x28] sm:$0xff]
        %v2318 = vld [vmem:[#allocation2 + $0x30] sm:$0xff]
        %v2319 = vld [vmem:[#allocation2 + $0x38] sm:$0xff]
        %v2320 = vld [vmem:[#allocation3] sm:$0xff]
        %v2321 = vld [vmem:[#allocation3 + $0x8] sm:$0xff]
        %v2322 = vld [vmem:[#allocation3 + $0x10] sm:$0xff]
        %v2323 = vld [vmem:[#allocation3 + $0x18] sm:$0xff]
        %v2324 = vld [vmem:[#allocation3 + $0x20] sm:$0xff]
        %v2325 = vld [vmem:[#allocation3 + $0x28] sm:$0xff]
        %v2326 = vld [vmem:[#allocation3 + $0x30] sm:$0xff]
        %v2327 = vld [vmem:[#allocation3 + $0x38] sm:$0xff]
        %2336 = vrot.lane.b32.xlu0 %v2320, 32
        %v2337 = vpop.permute.xlu0 %2336
        %2338 = vrot.lane.b32.xlu0 %v2321, 32
        %v2339 = vpop.permute.xlu0 %2338
        %2340 = vrot.lane.b32.xlu0 %v2322, 32
        %v2341 = vpop.permute.xlu0 %2340
        %2342 = vrot.lane.b32.xlu0 %v2323, 32
        %v2343 = vpop.permute.xlu0 %2342
        %2344 = vrot.lane.b32.xlu0 %v2324, 32
        %v2345 = vpop.permute.xlu0 %2344
        %2346 = vrot.lane.b32.xlu0 %v2325, 32
        %v2347 = vpop.permute.xlu0 %2346
        %2348 = vrot.lane.b32.xlu0 %v2326, 32
        %v2349 = vpop.permute.xlu0 %2348
        %2350 = vrot.lane.b32.xlu0 %v2327, 32
        %v2351 = vpop.permute.xlu0 %2350
        %v2360 = vsel %vm720, %v2312, %v2337
        %v2361 = vsel %vm720, %v2313, %v2339
        %v2362 = vsel %vm720, %v2314, %v2341
        %v2363 = vsel %vm720, %v2315, %v2343
        %v2364 = vsel %vm720, %v2316, %v2345
        %v2365 = vsel %vm720, %v2317, %v2347
        %v2366 = vsel %vm720, %v2318, %v2349
        %v2367 = vsel %vm720, %v2319, %v2351
        %v2368 = vld [vmem:[%s11] sm:$0xff]
        %v2369 = vld [vmem:[%s11 + $0x8] sm:$0xff]
        %v2370 = vld [vmem:[%s11 + $0x10] sm:$0xff]
        %v2371 = vld [vmem:[%s11 + $0x18] sm:$0xff]
        %v2372 = vld [vmem:[%s12] sm:$0x1]
        %v2374 = vlaneseq
        %v2375 = vshrl.u32 %v2374, 7
        %v2376 = vsub.s32 0, %v2375
        %v2377 = vrot.slane %v2372, %v2376
        %v2379 = vmul.f32 %v1859, %v2377
        %v2380 = vmul.f32 %v1860, %v2377
        %v2381 = vmul.f32 %v1861, %v2377
        %v2382 = vmul.f32 %v1862, %v2377
        %v2383 = vmul.f32 %v1863, %v2377
        %v2384 = vmul.f32 %v1864, %v2377
        %v2385 = vmul.f32 %v1865, %v2377
        %v2386 = vmul.f32 %v1866, %v2377
        %v2388 = vsel %vm1261, %v2360, 0
        %v2391 = vsel %vm1261, %v2361, 0
        %v2394 = vsel %vm1261, %v2362, 0
        %v2397 = vsel %vm1261, %v2363, 0
        %v2400 = vsel %vm1261, %v2364, 0
        %v2403 = vsel %vm1261, %v2365, 0
        %v2406 = vsel %vm1261, %v2366, 0
        %v2409 = vsel %vm1261, %v2367, 0
        %v2412 = vsel %vm1261, %v2368, 0
        %v2415 = vsel %vm1261, %v2369, 0
        %v2418 = vsel %vm1261, %v2370, 0
        %v2421 = vsel %vm1261, %v2371, 0
        %2423 = vmatprep.subr.mxu0 0.0
        %2424 = vmatpush1.xpose.msra.mxu0 %v2412
        %2425 = vmatprep.subr.mxu0 0.0
        %2426 = vmatpush1.xpose.msra.mxu0 %v2415
        %2427 = vmatprep.subr.mxu0 0.0
        %2428 = vmatpush1.xpose.msra.mxu0 %v2418
        %2429 = vmatprep.subr.mxu0 0.0
        %2430 = vmatpush1.xpose.msra.mxu0 %v2421
        %2431 = vmatprep.subr.mxu0 0.0
        %2432 = vmatpush1.xpose.msra.mxu0 0.0
        %2433 = vmatprep.subr.mxu0 0.0
        %2434 = vmatpush1.xpose.msra.mxu0 0.0
        %2435 = vmatprep.subr.mxu0 0.0
        %2436 = vmatpush1.xpose.msra.mxu0 0.0
        %2437 = vmatprep.subr.mxu0 0.0
        %2438 = vmatpush1.xpose.msra.mxu0 0.0
        %2439 = vmatprep.subr.mxu0 0.0
        %2440 = vmatpush1.xpose.msra.mxu0 0.0
        %2441 = vmatprep.subr.mxu0 0.0
        %2442 = vmatpush1.xpose.msra.mxu0 0.0
        %2443 = vmatprep.subr.mxu0 0.0
        %2444 = vmatpush1.xpose.msra.mxu0 0.0
        %2445 = vmatprep.subr.mxu0 0.0
        %2446 = vmatpush1.xpose.msra.mxu0 0.0
        %2447 = vmatprep.subr.mxu0 0.0
        %2448 = vmatpush1.xpose.msra.mxu0 0.0
        %2449 = vmatprep.subr.mxu0 0.0
        %2450 = vmatpush1.xpose.msra.mxu0 0.0
        %2451 = vmatprep.subr.mxu0 0.0
        %2452 = vmatpush1.xpose.msra.mxu0 0.0
        %2453 = vmatprep.subr.mxu0 0.0
        %2454 = vmatpush1.xpose.msra.mxu0 0.0
        %2455 = vmatprep.subr.mxu0 0.0
        %2456 = vmatpush1.xpose.msra.mxu0 0.0
        %2457 = vmatprep.subr.mxu0 0.0
        %2458 = vmatpush1.xpose.msra.mxu0 0.0
        %2459 = vmatprep.subr.mxu0 0.0
        %2460 = vmatpush1.xpose.msra.mxu0 0.0
        %2461 = vmatprep.subr.mxu0 0.0
        %2462 = vmatpush1.xpose.msra.mxu0 0.0
        %2463 = vmatprep.subr.mxu0 0.0
        %2464 = vmatpush1.xpose.msra.mxu0 0.0
        %2465 = vmatprep.subr.mxu0 0.0
        %2466 = vmatpush1.xpose.msra.mxu0 0.0
        %2467 = vmatprep.subr.mxu0 0.0
        %2468 = vmatpush1.xpose.msra.mxu0 0.0
        %2469 = vmatprep.subr.mxu0 0.0
        %2470 = vmatpush1.xpose.msra.mxu0 0.0
        %2471 = vmatprep.subr.mxu0 0.0
        %2472 = vmatpush1.xpose.msra.mxu0 0.0
        %2473 = vmatprep.subr.mxu0 0.0
        %2474 = vmatpush1.xpose.msra.mxu0 0.0
        %2475 = vmatprep.subr.mxu0 0.0
        %2476 = vmatpush1.xpose.msra.mxu0 0.0
        %2477 = vmatprep.subr.mxu0 0.0
        %2478 = vmatpush1.xpose.msra.mxu0 0.0
        %2479 = vmatprep.subr.mxu0 0.0
        %2480 = vmatpush1.xpose.msra.mxu0 0.0
        %2481 = vmatprep.subr.mxu0 0.0
        %2482 = vmatpush1.xpose.msra.mxu0 0.0
        %2483 = vmatprep.subr.mxu0 0.0
        %2484 = vmatpush1.xpose.msra.mxu0 0.0
        %2485 = vmatprep.subr.mxu0 0.0
        %2486 = vmatpush1.xpose.msra.mxu0 0.0
        %2487 = vmatprep.mubr.f32.mxu0 0.0
        %2488 = vmatmul.mubr.f32.gmra.mrb[0].mxu0 %v2388
        %v2489 = vpop.f32.mrb[0].mxu0
        %v2490 = vadd.f32 %v2379, %v2489
        %v2491 = vpop.f32.mrb[0].mxu0
        %2492 = vmatprep.mubr.f32.mxu0 0.0
        %2493 = vmatmul.mubr.f32.gmra.mrb[0].mxu0 %v2391
        %v2494 = vpop.f32.mrb[0].mxu0
        %v2495 = vadd.f32 %v2380, %v2494
        %v2496 = vpop.f32.mrb[0].mxu0
        %2497 = vmatprep.mubr.f32.mxu0 0.0
        %2498 = vmatmul.mubr.f32.gmra.mrb[0].mxu0 %v2394
        %v2499 = vpop.f32.mrb[0].mxu0
        %v2500 = vadd.f32 %v2381, %v2499
        %v2501 = vpop.f32.mrb[0].mxu0
        %2502 = vmatprep.mubr.f32.mxu0 0.0
        %2503 = vmatmul.mubr.f32.gmra.mrb[0].mxu0 %v2397
        %v2504 = vpop.f32.mrb[0].mxu0
        %v2505 = vadd.f32 %v2382, %v2504
        %v2506 = vpop.f32.mrb[0].mxu0
        %2507 = vmatprep.mubr.f32.mxu0 0.0
        %2508 = vmatmul.mubr.f32.gmra.mrb[0].mxu0 %v2400
        %v2509 = vpop.f32.mrb[0].mxu0
        %v2510 = vadd.f32 %v2383, %v2509
        %v2511 = vpop.f32.mrb[0].mxu0
        %2512 = vmatprep.mubr.f32.mxu0 0.0
        %2513 = vmatmul.mubr.f32.gmra.mrb[0].mxu0 %v2403
        %v2514 = vpop.f32.mrb[0].mxu0
        %v2515 = vadd.f32 %v2384, %v2514
        %v2516 = vpop.f32.mrb[0].mxu0
        %2517 = vmatprep.mubr.f32.mxu0 0.0
        %2518 = vmatmul.mubr.f32.gmra.mrb[0].mxu0 %v2406
        %v2519 = vpop.f32.mrb[0].mxu0
        %v2520 = vadd.f32 %v2385, %v2519
        %v2521 = vpop.f32.mrb[0].mxu0
        %2522 = vmatprep.mubr.f32.mxu0 0.0
        %2523 = vmatmul.mubr.f32.gmra.mrb[0].mxu0 %v2409
        %v2524 = vpop.f32.mrb[0].mxu0
        %v2525 = vadd.f32 %v2386, %v2524
        %v2526 = vpop.f32.mrb[0].mxu0
        %2527 = vdwg.mxu0
        %v2528 = vmul.f32 %v2490, 0.5
        %v2529 = vmul.f32 %v2495, 0.5
        %v2530 = vmul.f32 %v2500, 0.5
        %v2531 = vmul.f32 %v2505, 0.5
        %v2532 = vmul.f32 %v2510, 0.5
        %v2533 = vmul.f32 %v2515, 0.5
        %v2534 = vmul.f32 %v2520, 0.5
        %v2535 = vmul.f32 %v2525, 0.5
        %v2536 = vmul.f32 %v2490, 0.70710677
        %v2537 = vmul.f32 %v2495, 0.70710677
        %v2538 = vmul.f32 %v2500, 0.70710677
        %v2539 = vmul.f32 %v2505, 0.70710677
        %v2540 = vmul.f32 %v2510, 0.70710677
        %v2541 = vmul.f32 %v2515, 0.70710677
        %v2542 = vmul.f32 %v2520, 0.70710677
        %v2543 = vmul.f32 %v2525, 0.70710677
        %vm2544 = vcmp.lt.f32.partialorder %v2536, 0.0
        %vm2545 = vcmp.lt.f32.partialorder %v2537, 0.0
        %vm2546 = vcmp.lt.f32.partialorder %v2538, 0.0
        %vm2547 = vcmp.lt.f32.partialorder %v2539, 0.0
        %vm2548 = vcmp.lt.f32.partialorder %v2540, 0.0
        %vm2549 = vcmp.lt.f32.partialorder %v2541, 0.0
        %vm2550 = vcmp.lt.f32.partialorder %v2542, 0.0
        %vm2551 = vcmp.lt.f32.partialorder %v2543, 0.0
        %v2552 = vsel %vm2544, -1.0, 1.0
        %v2553 = vsel %vm2545, -1.0, 1.0
        %v2554 = vsel %vm2546, -1.0, 1.0
        %v2555 = vsel %vm2547, -1.0, 1.0
        %v2556 = vsel %vm2548, -1.0, 1.0
        %v2557 = vsel %vm2549, -1.0, 1.0
        %v2558 = vsel %vm2550, -1.0, 1.0
        %v2559 = vsel %vm2551, -1.0, 1.0
        %v2560 = vand.u32 2147483647, %v2536
        %v2561 = vand.u32 2147483647, %v2537
        %v2562 = vand.u32 2147483647, %v2538
        %v2563 = vand.u32 2147483647, %v2539
        %v2564 = vand.u32 2147483647, %v2540
        %v2565 = vand.u32 2147483647, %v2541
        %v2566 = vand.u32 2147483647, %v2542
        %v2567 = vand.u32 2147483647, %v2543
        %v2568 = vmul.f32 %v2560, 0.3275911
        %v2569 = vmul.f32 %v2561, 0.3275911
        %v2570 = vmul.f32 %v2562, 0.3275911
        %v2571 = vmul.f32 %v2563, 0.3275911
        %v2572 = vmul.f32 %v2564, 0.3275911
        %v2573 = vmul.f32 %v2565, 0.3275911
        %v2574 = vmul.f32 %v2566, 0.3275911
        %v2575 = vmul.f32 %v2567, 0.3275911
        %v2576 = vadd.f32 %v2568, 1.0
        %v2577 = vadd.f32 %v2569, 1.0
        %v2578 = vadd.f32 %v2570, 1.0
        %v2579 = vadd.f32 %v2571, 1.0
        %v2580 = vadd.f32 %v2572, 1.0
        %v2581 = vadd.f32 %v2573, 1.0
        %v2582 = vadd.f32 %v2574, 1.0
        %v2583 = vadd.f32 %v2575, 1.0
        %v2584 = vrcp.pop %v2576
        %v2585 = vmul.f32 1.0, %v2584
        %v2586 = vrcp.pop %v2577
        %v2587 = vmul.f32 1.0, %v2586
        %v2588 = vrcp.pop %v2578
        %v2589 = vmul.f32 1.0, %v2588
        %v2590 = vrcp.pop %v2579
        %v2591 = vmul.f32 1.0, %v2590
        %v2592 = vrcp.pop %v2580
        %v2593 = vmul.f32 1.0, %v2592
        %v2594 = vrcp.pop %v2581
        %v2595 = vmul.f32 1.0, %v2594
        %v2596 = vrcp.pop %v2582
        %v2597 = vmul.f32 1.0, %v2596
        %v2598 = vrcp.pop %v2583
        %v2599 = vmul.f32 1.0, %v2598
        %v2600 = vmul.f32 %v2585, 1.0614054
        %v2601 = vmul.f32 %v2587, 1.0614054
        %v2602 = vmul.f32 %v2589, 1.0614054
        %v2603 = vmul.f32 %v2591, 1.0614054
        %v2604 = vmul.f32 %v2593, 1.0614054
        %v2605 = vmul.f32 %v2595, 1.0614054
        %v2606 = vmul.f32 %v2597, 1.0614054
        %v2607 = vmul.f32 %v2599, 1.0614054
        %v2608 = vadd.f32 %v2600, -1.4531521
        %v2609 = vadd.f32 %v2601, -1.4531521
        %v2610 = vadd.f32 %v2602, -1.4531521
        %v2611 = vadd.f32 %v2603, -1.4531521
        %v2612 = vadd.f32 %v2604, -1.4531521
        %v2613 = vadd.f32 %v2605, -1.4531521
        %v2614 = vadd.f32 %v2606, -1.4531521
        %v2615 = vadd.f32 %v2607, -1.4531521
        %v2616 = vmul.f32 %v2608, %v2585
        %v2617 = vmul.f32 %v2609, %v2587
        %v2618 = vmul.f32 %v2610, %v2589
        %v2619 = vmul.f32 %v2611, %v2591
        %v2620 = vmul.f32 %v2612, %v2593
        %v2621 = vmul.f32 %v2613, %v2595
        %v2622 = vmul.f32 %v2614, %v2597
        %v2623 = vmul.f32 %v2615, %v2599
        %v2624 = vadd.f32 %v2616, 1.4214138
        %v2625 = vadd.f32 %v2617, 1.4214138
        %v2626 = vadd.f32 %v2618, 1.4214138
        %v2627 = vadd.f32 %v2619, 1.4214138
        %v2628 = vadd.f32 %v2620, 1.4214138
        %v2629 = vadd.f32 %v2621, 1.4214138
        %v2630 = vadd.f32 %v2622, 1.4214138
        %v2631 = vadd.f32 %v2623, 1.4214138
        %v2632 = vmul.f32 %v2624, %v2585
        %v2633 = vmul.f32 %v2625, %v2587
        %v2634 = vmul.f32 %v2626, %v2589
        %v2635 = vmul.f32 %v2627, %v2591
        %v2636 = vmul.f32 %v2628, %v2593
        %v2637 = vmul.f32 %v2629, %v2595
        %v2638 = vmul.f32 %v2630, %v2597
        %v2639 = vmul.f32 %v2631, %v2599
        %v2640 = vadd.f32 %v2632, -0.28449672
        %v2641 = vadd.f32 %v2633, -0.28449672
        %v2642 = vadd.f32 %v2634, -0.28449672
        %v2643 = vadd.f32 %v2635, -0.28449672
        %v2644 = vadd.f32 %v2636, -0.28449672
        %v2645 = vadd.f32 %v2637, -0.28449672
        %v2646 = vadd.f32 %v2638, -0.28449672
        %v2647 = vadd.f32 %v2639, -0.28449672
        %v2648 = vmul.f32 %v2640, %v2585
        %v2649 = vmul.f32 %v2641, %v2587
        %v2650 = vmul.f32 %v2642, %v2589
        %v2651 = vmul.f32 %v2643, %v2591
        %v2652 = vmul.f32 %v2644, %v2593
        %v2653 = vmul.f32 %v2645, %v2595
        %v2654 = vmul.f32 %v2646, %v2597
        %v2655 = vmul.f32 %v2647, %v2599
        %v2656 = vadd.f32 %v2648, 0.2548296
        %v2657 = vadd.f32 %v2649, 0.2548296
        %v2658 = vadd.f32 %v2650, 0.2548296
        %v2659 = vadd.f32 %v2651, 0.2548296
        %v2660 = vadd.f32 %v2652, 0.2548296
        %v2661 = vadd.f32 %v2653, 0.2548296
        %v2662 = vadd.f32 %v2654, 0.2548296
        %v2663 = vadd.f32 %v2655, 0.2548296
        %v2664 = vmul.f32 %v2656, %v2585
        %v2665 = vmul.f32 %v2657, %v2587
        %v2666 = vmul.f32 %v2658, %v2589
        %v2667 = vmul.f32 %v2659, %v2591
        %v2668 = vmul.f32 %v2660, %v2593
        %v2669 = vmul.f32 %v2661, %v2595
        %v2670 = vmul.f32 %v2662, %v2597
        %v2671 = vmul.f32 %v2663, %v2599
        %v2672 = vsub.f32 0.0, %v2560
        %v2673 = vsub.f32 0.0, %v2561
        %v2674 = vsub.f32 0.0, %v2562
        %v2675 = vsub.f32 0.0, %v2563
        %v2676 = vsub.f32 0.0, %v2564
        %v2677 = vsub.f32 0.0, %v2565
        %v2678 = vsub.f32 0.0, %v2566
        %v2679 = vsub.f32 0.0, %v2567
        %v2680 = vmul.f32 %v2672, %v2560
        %v2681 = vmul.f32 %v2673, %v2561
        %v2682 = vmul.f32 %v2674, %v2562
        %v2683 = vmul.f32 %v2675, %v2563
        %v2684 = vmul.f32 %v2676, %v2564
        %v2685 = vmul.f32 %v2677, %v2565
        %v2686 = vmul.f32 %v2678, %v2566
        %v2687 = vmul.f32 %v2679, %v2567
        %v2688 = vmul.f32 %v2680, 1.442695
        %v2689 = vpow.pop %v2688
        %v2690 = vmul.f32 %v2681, 1.442695
        %v2691 = vpow.pop %v2690
        %v2692 = vmul.f32 %v2682, 1.442695
        %v2693 = vpow.pop %v2692
        %v2694 = vmul.f32 %v2683, 1.442695
        %v2695 = vpow.pop %v2694
        %v2696 = vmul.f32 %v2684, 1.442695
        %v2697 = vpow.pop %v2696
        %v2698 = vmul.f32 %v2685, 1.442695
        %v2699 = vpow.pop %v2698
        %v2700 = vmul.f32 %v2686, 1.442695
        %v2701 = vpow.pop %v2700
        %v2702 = vmul.f32 %v2687, 1.442695
        %v2703 = vpow.pop %v2702
        %v2704 = vmul.f32 %v2664, %v2689
        %v2705 = vmul.f32 %v2665, %v2691
        %v2706 = vmul.f32 %v2666, %v2693
        %v2707 = vmul.f32 %v2667, %v2695
        %v2708 = vmul.f32 %v2668, %v2697
        %v2709 = vmul.f32 %v2669, %v2699
        %v2710 = vmul.f32 %v2670, %v2701
        %v2711 = vmul.f32 %v2671, %v2703
        %v2712 = vsub.f32 1.0, %v2704
        %v2713 = vsub.f32 1.0, %v2705
        %v2714 = vsub.f32 1.0, %v2706
        %v2715 = vsub.f32 1.0, %v2707
        %v2716 = vsub.f32 1.0, %v2708
        %v2717 = vsub.f32 1.0, %v2709
        %v2718 = vsub.f32 1.0, %v2710
        %v2719 = vsub.f32 1.0, %v2711
        %v2720 = vmul.f32 %v2552, %v2712
        %v2721 = vmul.f32 %v2553, %v2713
        %v2722 = vmul.f32 %v2554, %v2714
        %v2723 = vmul.f32 %v2555, %v2715
        %v2724 = vmul.f32 %v2556, %v2716
        %v2725 = vmul.f32 %v2557, %v2717
        %v2726 = vmul.f32 %v2558, %v2718
        %v2727 = vmul.f32 %v2559, %v2719
        %v2728 = vadd.f32 %v2720, 1.0
        %v2729 = vadd.f32 %v2721, 1.0
        %v2730 = vadd.f32 %v2722, 1.0
        %v2731 = vadd.f32 %v2723, 1.0
        %v2732 = vadd.f32 %v2724, 1.0
        %v2733 = vadd.f32 %v2725, 1.0
        %v2734 = vadd.f32 %v2726, 1.0
        %v2735 = vadd.f32 %v2727, 1.0
        %v2736 = vmul.f32 %v2528, %v2728
        %v2737 = vmul.f32 %v2529, %v2729
        %v2738 = vmul.f32 %v2530, %v2730
        %v2739 = vmul.f32 %v2531, %v2731
        %v2740 = vmul.f32 %v2532, %v2732
        %v2741 = vmul.f32 %v2533, %v2733
        %v2742 = vmul.f32 %v2534, %v2734
        %v2743 = vmul.f32 %v2535, %v2735
        %v2744 = vld [vmem:[#allocation17] sm:$0xff]
        %v2745 = vld [vmem:[#allocation17 + $0x8] sm:$0xff]
        %v2746 = vld [vmem:[#allocation17 + $0x10] sm:$0xff]
        %v2747 = vld [vmem:[#allocation17 + $0x18] sm:$0xff]
        %v2748 = vld [vmem:[%s14] sm:$0x1]
        %v2750 = vlaneseq
        %v2751 = vshrl.u32 %v2750, 7
        %v2752 = vsub.s32 0, %v2751
        %v2753 = vrot.slane %v2748, %v2752
        %v2756 = vsel %vm720, %v2736, 0
        %v2759 = vsel %vm720, %v2737, 0
        %v2762 = vsel %vm720, %v2738, 0
        %v2765 = vsel %vm720, %v2739, 0
        %v2768 = vsel %vm720, %v2740, 0
        %v2771 = vsel %vm720, %v2741, 0
        %v2774 = vsel %vm720, %v2742, 0
        %v2777 = vsel %vm720, %v2743, 0
        %v2780 = vsel %vm720, %v2744, 0
        %v2783 = vsel %vm720, %v2745, 0
        %v2786 = vsel %vm720, %v2746, 0
        %v2789 = vsel %vm720, %v2747, 0
        %2791 = vmatprep.subr.mxu0 0.0
        %2792 = vmatpush1.xpose.msra.mxu0 %v2780
        %2793 = vmatprep.subr.mxu0 0.0
        %2794 = vmatpush1.xpose.msra.mxu0 %v2783
        %2795 = vmatprep.subr.mxu0 0.0
        %2796 = vmatpush1.xpose.msra.mxu0 %v2786
        %2797 = vmatprep.subr.mxu0 0.0
        %2798 = vmatpush1.xpose.msra.mxu0 %v2789
        %2799 = vmatprep.subr.mxu0 0.0
        %2800 = vmatpush1.xpose.msra.mxu0 0.0
        %2801 = vmatprep.subr.mxu0 0.0
        %2802 = vmatpush1.xpose.msra.mxu0 0.0
        %2803 = vmatprep.subr.mxu0 0.0
        %2804 = vmatpush1.xpose.msra.mxu0 0.0
        %2805 = vmatprep.subr.mxu0 0.0
        %2806 = vmatpush1.xpose.msra.mxu0 0.0
        %2807 = vmatprep.subr.mxu0 0.0
        %2808 = vmatpush1.xpose.msra.mxu0 0.0
        %2809 = vmatprep.subr.mxu0 0.0
        %2810 = vmatpush1.xpose.msra.mxu0 0.0
        %2811 = vmatprep.subr.mxu0 0.0
        %2812 = vmatpush1.xpose.msra.mxu0 0.0
        %2813 = vmatprep.subr.mxu0 0.0
        %2814 = vmatpush1.xpose.msra.mxu0 0.0
        %2815 = vmatprep.subr.mxu0 0.0
        %2816 = vmatpush1.xpose.msra.mxu0 0.0
        %2817 = vmatprep.subr.mxu0 0.0
        %2818 = vmatpush1.xpose.msra.mxu0 0.0
        %2819 = vmatprep.subr.mxu0 0.0
        %2820 = vmatpush1.xpose.msra.mxu0 0.0
        %2821 = vmatprep.subr.mxu0 0.0
        %2822 = vmatpush1.xpose.msra.mxu0 0.0
        %2823 = vmatprep.subr.mxu0 0.0
        %2824 = vmatpush1.xpose.msra.mxu0 0.0
        %2825 = vmatprep.subr.mxu0 0.0
        %2826 = vmatpush1.xpose.msra.mxu0 0.0
        %2827 = vmatprep.subr.mxu0 0.0
        %2828 = vmatpush1.xpose.msra.mxu0 0.0
        %2829 = vmatprep.subr.mxu0 0.0
        %2830 = vmatpush1.xpose.msra.mxu0 0.0
        %2831 = vmatprep.subr.mxu0 0.0
        %2832 = vmatpush1.xpose.msra.mxu0 0.0
        %2833 = vmatprep.subr.mxu0 0.0
        %2834 = vmatpush1.xpose.msra.mxu0 0.0
        %2835 = vmatprep.subr.mxu0 0.0
        %2836 = vmatpush1.xpose.msra.mxu0 0.0
        %2837 = vmatprep.subr.mxu0 0.0
        %2838 = vmatpush1.xpose.msra.mxu0 0.0
        %2839 = vmatprep.subr.mxu0 0.0
        %2840 = vmatpush1.xpose.msra.mxu0 0.0
        %2841 = vmatprep.subr.mxu0 0.0
        %2842 = vmatpush1.xpose.msra.mxu0 0.0
        %2843 = vmatprep.subr.mxu0 0.0
        %2844 = vmatpush1.xpose.msra.mxu0 0.0
        %2845 = vmatprep.subr.mxu0 0.0
        %2846 = vmatpush1.xpose.msra.mxu0 0.0
        %2847 = vmatprep.subr.mxu0 0.0
        %2848 = vmatpush1.xpose.msra.mxu0 0.0
        %2849 = vmatprep.subr.mxu0 0.0
        %2850 = vmatpush1.xpose.msra.mxu0 0.0
        %2851 = vmatprep.subr.mxu0 0.0
        %2852 = vmatpush1.xpose.msra.mxu0 0.0
        %2853 = vmatprep.subr.mxu0 0.0
        %2854 = vmatpush1.xpose.msra.mxu0 0.0
        %2855 = vmatprep.mubr.f32.mxu0 0.0
        %2856 = vmatmul.mubr.f32.gmra.mrb[0].mxu0 %v2756
        %v2857 = vpop.f32.mrb[0].mxu0
        %v2858 = vadd.f32 %v2753, %v2857
        %v2859 = vpop.f32.mrb[0].mxu0
        %2860 = vmatprep.mubr.f32.mxu0 0.0
        %2861 = vmatmul.mubr.f32.gmra.mrb[0].mxu0 %v2759
        %v2862 = vpop.f32.mrb[0].mxu0
        %v2863 = vadd.f32 %v2753, %v2862
        %v2864 = vpop.f32.mrb[0].mxu0
        %2865 = vmatprep.mubr.f32.mxu0 0.0
        %2866 = vmatmul.mubr.f32.gmra.mrb[0].mxu0 %v2762
        %v2867 = vpop.f32.mrb[0].mxu0
        %v2868 = vadd.f32 %v2753, %v2867
        %v2869 = vpop.f32.mrb[0].mxu0
        %2870 = vmatprep.mubr.f32.mxu0 0.0
        %2871 = vmatmul.mubr.f32.gmra.mrb[0].mxu0 %v2765
        %v2872 = vpop.f32.mrb[0].mxu0
        %v2873 = vadd.f32 %v2753, %v2872
        %v2874 = vpop.f32.mrb[0].mxu0
        %2875 = vmatprep.mubr.f32.mxu0 0.0
        %2876 = vmatmul.mubr.f32.gmra.mrb[0].mxu0 %v2768
        %v2877 = vpop.f32.mrb[0].mxu0
        %v2878 = vadd.f32 %v2753, %v2877
        %v2879 = vpop.f32.mrb[0].mxu0
        %2880 = vmatprep.mubr.f32.mxu0 0.0
        %2881 = vmatmul.mubr.f32.gmra.mrb[0].mxu0 %v2771
        %v2882 = vpop.f32.mrb[0].mxu0
        %v2883 = vadd.f32 %v2753, %v2882
        %v2884 = vpop.f32.mrb[0].mxu0
        %2885 = vmatprep.mubr.f32.mxu0 0.0
        %2886 = vmatmul.mubr.f32.gmra.mrb[0].mxu0 %v2774
        %v2887 = vpop.f32.mrb[0].mxu0
        %v2888 = vadd.f32 %v2753, %v2887
        %v2889 = vpop.f32.mrb[0].mxu0
        %2890 = vmatprep.mubr.f32.mxu0 0.0
        %2891 = vmatmul.mubr.f32.gmra.mrb[0].mxu0 %v2777
        %v2892 = vpop.f32.mrb[0].mxu0
        %v2893 = vadd.f32 %v2753, %v2892
        %v2894 = vpop.f32.mrb[0].mxu0
        %2895 = vdwg.mxu0
        %v2896 = vand.u32 2147483647, %v2858
        %v2897 = vand.u32 2147483647, %v2863
        %v2898 = vand.u32 2147483647, %v2868
        %v2899 = vand.u32 2147483647, %v2873
        %v2900 = vand.u32 2147483647, %v2878
        %v2901 = vand.u32 2147483647, %v2883
        %v2902 = vand.u32 2147483647, %v2888
        %v2903 = vand.u32 2147483647, %v2893
        %v2904 = vsub.f32 0.0, %v2896
        %v2905 = vsub.f32 0.0, %v2897
        %v2906 = vsub.f32 0.0, %v2898
        %v2907 = vsub.f32 0.0, %v2899
        %v2908 = vsub.f32 0.0, %v2900
        %v2909 = vsub.f32 0.0, %v2901
        %v2910 = vsub.f32 0.0, %v2902
        %v2911 = vsub.f32 0.0, %v2903
        %v2912 = vmul.f32 %v2904, 1.442695
        %v2913 = vpow.pop %v2912
        %v2914 = vmul.f32 %v2905, 1.442695
        %v2915 = vpow.pop %v2914
        %v2916 = vmul.f32 %v2906, 1.442695
        %v2917 = vpow.pop %v2916
        %v2918 = vmul.f32 %v2907, 1.442695
        %v2919 = vpow.pop %v2918
        %v2920 = vmul.f32 %v2908, 1.442695
        %v2921 = vpow.pop %v2920
        %v2922 = vmul.f32 %v2909, 1.442695
        %v2923 = vpow.pop %v2922
        %v2924 = vmul.f32 %v2910, 1.442695
        %v2925 = vpow.pop %v2924
        %v2926 = vmul.f32 %v2911, 1.442695
        %v2927 = vpow.pop %v2926
        %vm2928 = vcmp.ge.f32.partialorder %v2858, 0.0
        %vm2929 = vcmp.ge.f32.partialorder %v2863, 0.0
        %vm2930 = vcmp.ge.f32.partialorder %v2868, 0.0
        %vm2931 = vcmp.ge.f32.partialorder %v2873, 0.0
        %vm2932 = vcmp.ge.f32.partialorder %v2878, 0.0
        %vm2933 = vcmp.ge.f32.partialorder %v2883, 0.0
        %vm2934 = vcmp.ge.f32.partialorder %v2888, 0.0
        %vm2935 = vcmp.ge.f32.partialorder %v2893, 0.0
        %v2936 = vadd.f32 %v2913, 1.0
        %v2937 = vadd.f32 %v2915, 1.0
        %v2938 = vadd.f32 %v2917, 1.0
        %v2939 = vadd.f32 %v2919, 1.0
        %v2940 = vadd.f32 %v2921, 1.0
        %v2941 = vadd.f32 %v2923, 1.0
        %v2942 = vadd.f32 %v2925, 1.0
        %v2943 = vadd.f32 %v2927, 1.0
        %v2944 = vrcp.pop %v2936
        %v2945 = vmul.f32 1.0, %v2944
        %v2946 = vrcp.pop %v2937
        %v2947 = vmul.f32 1.0, %v2946
        %v2948 = vrcp.pop %v2938
        %v2949 = vmul.f32 1.0, %v2948
        %v2950 = vrcp.pop %v2939
        %v2951 = vmul.f32 1.0, %v2950
        %v2952 = vrcp.pop %v2940
        %v2953 = vmul.f32 1.0, %v2952
        %v2954 = vrcp.pop %v2941
        %v2955 = vmul.f32 1.0, %v2954
        %v2956 = vrcp.pop %v2942
        %v2957 = vmul.f32 1.0, %v2956
        %v2958 = vrcp.pop %v2943
        %v2959 = vmul.f32 1.0, %v2958
        %v2960 = vmul.f32 %v2913, %v2944
        %v2961 = vmul.f32 %v2915, %v2946
        %v2962 = vmul.f32 %v2917, %v2948
        %v2963 = vmul.f32 %v2919, %v2950
        %v2964 = vmul.f32 %v2921, %v2952
        %v2965 = vmul.f32 %v2923, %v2954
        %v2966 = vmul.f32 %v2925, %v2956
        %v2967 = vmul.f32 %v2927, %v2958
        %v2968 = vsel %vm2928, %v2945, %v2960
        %v2969 = vsel %vm2929, %v2947, %v2961
        %v2970 = vsel %vm2930, %v2949, %v2962
        %v2971 = vsel %vm2931, %v2951, %v2963
        %v2972 = vsel %vm2932, %v2953, %v2964
        %v2973 = vsel %vm2933, %v2955, %v2965
        %v2974 = vsel %vm2934, %v2957, %v2966
        %v2975 = vsel %vm2935, %v2959, %v2967
        %v2976 = vmul.f32 %v2736, %v2968
        %v2977 = vmul.f32 %v2737, %v2969
        %v2978 = vmul.f32 %v2738, %v2970
        %v2979 = vmul.f32 %v2739, %v2971
        %v2980 = vmul.f32 %v2740, %v2972
        %v2981 = vmul.f32 %v2741, %v2973
        %v2982 = vmul.f32 %v2742, %v2974
        %v2983 = vmul.f32 %v2743, %v2975
        %v2984 = vadd.f32 %v2976, %v1859
        %v2985 = vadd.f32 %v2977, %v1860
        %v2986 = vadd.f32 %v2978, %v1861
        %v2987 = vadd.f32 %v2979, %v1862
        %v2988 = vadd.f32 %v2980, %v1863
        %v2989 = vadd.f32 %v2981, %v1864
        %v2990 = vadd.f32 %v2982, %v1865
        %v2991 = vadd.f32 %v2983, %v1866
        %v2992 = vsel %vm720, %v2984, 0.0
        %v2993 = vsel %vm720, %v2985, 0.0
        %v2994 = vadd.f32 %v2992, %v2993
        %v2995 = vsel %vm720, %v2986, 0.0
        %v2996 = vadd.f32 %v2994, %v2995
        %v2997 = vsel %vm720, %v2987, 0.0
        %v2998 = vadd.f32 %v2996, %v2997
        %v2999 = vsel %vm720, %v2988, 0.0
        %v3000 = vadd.f32 %v2998, %v2999
        %v3001 = vsel %vm720, %v2989, 0.0
        %v3002 = vadd.f32 %v3000, %v3001
        %v3003 = vsel %vm720, %v2990, 0.0
        %v3004 = vadd.f32 %v3002, %v3003
        %v3005 = vsel %vm720, %v2991, 0.0
        %v3006 = vadd.f32 %v3004, %v3005
        %v3007 = vld [vmem:[%s15] sm:$0xff]
        %v3008 = vld [vmem:[%s16] sm:$0x1]
        %v3010 = vlaneseq
        %v3011 = vshrl.u32 %v3010, 7
        %v3012 = vsub.s32 0, %v3011
        %v3013 = vrot.slane %v3008, %v3012
        %v3016 = vsel %vm720, %v3006, 0
        %v3019 = vsel %vm720, %v3007, 0
        %3021 = vmatprep.subr.mxu0 0.0
        %3022 = vmatpush1.xpose.msra.mxu0 %v3019
        %3023 = vmatprep.subr.mxu0 0.0
        %3024 = vmatpush1.xpose.msra.mxu0 0.0
        %3025 = vmatprep.subr.mxu0 0.0
        %3026 = vmatpush1.xpose.msra.mxu0 0.0
        %3027 = vmatprep.subr.mxu0 0.0
        %3028 = vmatpush1.xpose.msra.mxu0 0.0
        %3029 = vmatprep.subr.mxu0 0.0
        %3030 = vmatpush1.xpose.msra.mxu0 0.0
        %3031 = vmatprep.subr.mxu0 0.0
        %3032 = vmatpush1.xpose.msra.mxu0 0.0
        %3033 = vmatprep.subr.mxu0 0.0
        %3034 = vmatpush1.xpose.msra.mxu0 0.0
        %3035 = vmatprep.subr.mxu0 0.0
        %3036 = vmatpush1.xpose.msra.mxu0 0.0
        %3037 = vmatprep.subr.mxu0 0.0
        %3038 = vmatpush1.xpose.msra.mxu0 0.0
        %3039 = vmatprep.subr.mxu0 0.0
        %3040 = vmatpush1.xpose.msra.mxu0 0.0
        %3041 = vmatprep.subr.mxu0 0.0
        %3042 = vmatpush1.xpose.msra.mxu0 0.0
        %3043 = vmatprep.subr.mxu0 0.0
        %3044 = vmatpush1.xpose.msra.mxu0 0.0
        %3045 = vmatprep.subr.mxu0 0.0
        %3046 = vmatpush1.xpose.msra.mxu0 0.0
        %3047 = vmatprep.subr.mxu0 0.0
        %3048 = vmatpush1.xpose.msra.mxu0 0.0
        %3049 = vmatprep.subr.mxu0 0.0
        %3050 = vmatpush1.xpose.msra.mxu0 0.0
        %3051 = vmatprep.subr.mxu0 0.0
        %3052 = vmatpush1.xpose.msra.mxu0 0.0
        %3053 = vmatprep.subr.mxu0 0.0
        %3054 = vmatpush1.xpose.msra.mxu0 0.0
        %3055 = vmatprep.subr.mxu0 0.0
        %3056 = vmatpush1.xpose.msra.mxu0 0.0
        %3057 = vmatprep.subr.mxu0 0.0
        %3058 = vmatpush1.xpose.msra.mxu0 0.0
        %3059 = vmatprep.subr.mxu0 0.0
        %3060 = vmatpush1.xpose.msra.mxu0 0.0
        %3061 = vmatprep.subr.mxu0 0.0
        %3062 = vmatpush1.xpose.msra.mxu0 0.0
        %3063 = vmatprep.subr.mxu0 0.0
        %3064 = vmatpush1.xpose.msra.mxu0 0.0
        %3065 = vmatprep.subr.mxu0 0.0
        %3066 = vmatpush1.xpose.msra.mxu0 0.0
        %3067 = vmatprep.subr.mxu0 0.0
        %3068 = vmatpush1.xpose.msra.mxu0 0.0
        %3069 = vmatprep.subr.mxu0 0.0
        %3070 = vmatpush1.xpose.msra.mxu0 0.0
        %3071 = vmatprep.subr.mxu0 0.0
        %3072 = vmatpush1.xpose.msra.mxu0 0.0
        %3073 = vmatprep.subr.mxu0 0.0
        %3074 = vmatpush1.xpose.msra.mxu0 0.0
        %3075 = vmatprep.subr.mxu0 0.0
        %3076 = vmatpush1.xpose.msra.mxu0 0.0
        %3077 = vmatprep.subr.mxu0 0.0
        %3078 = vmatpush1.xpose.msra.mxu0 0.0
        %3079 = vmatprep.subr.mxu0 0.0
        %3080 = vmatpush1.xpose.msra.mxu0 0.0
        %3081 = vmatprep.subr.mxu0 0.0
        %3082 = vmatpush1.xpose.msra.mxu0 0.0
        %3083 = vmatprep.subr.mxu0 0.0
        %3084 = vmatpush1.xpose.msra.mxu0 0.0
        %3085 = vmatprep.mubr.f32.mxu0 0.0
        %3086 = vmatmul.mubr.f32.gmra.mrb[0].mxu0 %v3016
        %v3087 = vpop.f32.mrb[0].mxu0
        %v3088 = vadd.f32 %v3013, %v3087
        %v3089 = vpop.f32.mrb[0].mxu0
        %3090 = vdwg.mxu0
        %vm3091 = vcmask 64512
        %3092 = vst.msk [vmem:[%s700] sm:$0xff] %vm3091, %v3088
        %p3093 = scmp.lt.s32.totalorder %s32, 1
        %s3094 = scalar_select %p3093, %s32, 1
        %s3095 = smul.addr %s3094, 8
        %s3096 = scalar_lea.vmem %s17, %s3095
        // Predicated region
        $region155: #{tpu_custom_call.1} parent=121 // pred_check
          %p3097 = pneg %p412
        $region156: #{tpu_custom_call.1} parent=121 // pred_check_branch
          %3099 = sbr.rel (%p3097) target = $region158
        $region157: #{tpu_custom_call.1} parent=121 // pred_region
          _
        $region158: #{tpu_custom_call.1} parent=121 // pred_fallthru
          _
      $region122: #{tpu_custom_call.1} parent=5 // pred_fallthru
        _
      %p3100 = scmp.le.s32.totalorder 2, %s27
      // Predicated region
      $region159: #{tpu_custom_call.1} parent=5 // pred_check
        %p3101 = pneg %p3100
      $region160: #{tpu_custom_call.1} parent=5 // pred_check_branch
        %3103 = sbr.rel (%p3101) target = $region162
      $region161: #{tpu_custom_call.1} parent=5 // pred_region
        %s3104 = ssub.s32 %s27, 2
        // Predicated region
        $region163: #{tpu_custom_call.1} parent=161 // pred_check
          %p3105 = pneg %p418
        $region164: #{tpu_custom_call.1} parent=161 // pred_check_branch
          %3107 = sbr.rel (%p3105) target = $region166
        $region165: #{tpu_custom_call.1} parent=161 // pred_region
          %p3108 = scmp.lt.s32.totalorder %s33, 1
          %s3109 = scalar_select %p3108, %s33, 1
          %s3110 = smul.addr %s3109, 8
          %s3111 = scalar_lea.vmem %s17, %s3110
        $region166: #{tpu_custom_call.1} parent=161 // pred_fallthru
          _
      $region162: #{tpu_custom_call.1} parent=5 // pred_fallthru
        _
    $region6: #{tpu_custom_call.1} parent=1 // loop_footer
      %s31 = sadd.s32 1, %s27
    $region7: #{tpu_custom_call.1} parent=1 // loop_footer_branch
      %26 = sbr.rel target = $region3
    $region8: #{tpu_custom_call.1} parent=1 // loop_exit
      _
    %3112 = vsyncpa [#allocation8], 1
    %s3113 = scalar_lea.sflag [#allocation8], 1
    %3114 = vsyncpa %s3113, 1
    %3115 = vsyncpa [#allocation10], 1
    %3116 = vsyncpa [#allocation13], 1
    %3117 = vsyncpa [#allocation16], 1

</llo_original>
